<compile_context>
chip_gen: v5e
topology: v5e:2x2
jax: 0.10.0
libtpu: 0.0.40
codegen_flags: <defaults>
</compile_context>

<pallas_src>
import functools
import math

import jax
import jax.numpy as jnp
from jax import lax
from jax.experimental import pallas as pl
from jax.experimental.pallas import tpu as pltpu


# ----------------------------------------------------------------------------
# Tiled linear kernels: y = x @ W + b
# ----------------------------------------------------------------------------
def _linear_fullk_kernel(x_ref, w_ref, b_ref, o_ref):
    # Whole K in one shot: no accumulator read-modify-write, each output tile
    # is written exactly once.
    acc = jnp.dot(x_ref[...], w_ref[...], preferred_element_type=jnp.float32)
    o_ref[...] = (acc + b_ref[...].astype(jnp.float32)).astype(o_ref.dtype)


def _linear_ksplit_kernel(x_ref, w_ref, b_ref, o_ref, acc_ref):
    k = pl.program_id(2)

    @pl.when(k == 0)
    def _init():
        acc_ref[...] = jnp.zeros_like(acc_ref)

    acc_ref[...] += jnp.dot(
        x_ref[...], w_ref[...], preferred_element_type=jnp.float32
    )

    @pl.when(k == pl.num_programs(2) - 1)
    def _finalize():
        o_ref[...] = (acc_ref[...] + b_ref[...].astype(jnp.float32)).astype(
            o_ref.dtype
        )


def _pick_tile(dim, candidates):
    for t in candidates:
        if t <= dim and dim % t == 0:
            return t
    # TODO(synk): dims that are not multiples of 128 fall back to one full-dim
    # block; pad + mask instead if that block would overflow VMEM.
    return dim


def pallas_linear(x2d, w, b, *, max_single_pass_k=2048):
    """x2d: (M, K), w: (K, N), b: (N,) f32 -> (M, N) in x2d.dtype."""
    M, K = x2d.shape
    K2, N = w.shape
    assert K == K2 and b.shape == (N,)
    tm = _pick_tile(M, (512, 256, 128))
    tn = _pick_tile(N, (768, 512, 384, 256, 128))
    b2d = b.reshape(1, N)

    if K <= max_single_pass_k:
        # GPT-2 path (K = 768): single pass over K, 2-D grid, no scratch.
        return pl.pallas_call(
            _linear_fullk_kernel,
            out_shape=jax.ShapeDtypeStruct((M, N), x2d.dtype),
            grid=(M // tm, N // tn),
            in_specs=[
                pl.BlockSpec((tm, K), lambda i, j: (i, 0)),
                pl.BlockSpec((K, tn), lambda i, j: (0, j)),
                pl.BlockSpec((1, tn), lambda i, j: (0, j)),
            ],
            out_specs=pl.BlockSpec((tm, tn), lambda i, j: (i, j)),
            compiler_params=pltpu.CompilerParams(
                dimension_semantics=("parallel", "parallel"),
                vmem_limit_bytes=32 * 1024 * 1024,
            ),
        )(x2d, w, b2d)

    # Fallback for very large K: K-split reduction with an f32 accumulator.
    tk = _pick_tile(K, (512, 256, 128))
    return pl.pallas_call(
        _linear_ksplit_kernel,
        out_shape=jax.ShapeDtypeStruct((M, N), x2d.dtype),
        grid=(M // tm, N // tn, K // tk),
        in_specs=[
            pl.BlockSpec((tm, tk), lambda i, j, k: (i, k)),
            pl.BlockSpec((tk, tn), lambda i, j, k: (k, j)),
            pl.BlockSpec((1, tn), lambda i, j, k: (0, j)),
        ],
        out_specs=pl.BlockSpec((tm, tn), lambda i, j, k: (i, j)),
        scratch_shapes=[pltpu.VMEM((tm, tn), jnp.float32)],
        compiler_params=pltpu.CompilerParams(
            dimension_semantics=("parallel", "parallel", "arbitrary"),
            vmem_limit_bytes=32 * 1024 * 1024,
        ),
    )(x2d, w, b2d)


# ----------------------------------------------------------------------------
# Flash-style causal attention reading directly from the fused qkv activation
# ----------------------------------------------------------------------------
def _make_flash_attn_kernel(n_head, head_dim, tq, tk):
    H, D = n_head, head_dim

    def kernel(qi_tab, ki_tab, q_ref, k_ref, v_ref, o_ref,
               m_sc, l_sc, acc_sc, q_hm, k_hm, v_hm):
        t = pl.program_id(1)
        qi = qi_tab[t]
        ki = ki_tab[t]

        @pl.when(ki == 0)
        def _init():
            # Finite (not -inf) init so exp(m_old - m_new) never sees inf - inf.
            m_sc[...] = jnp.full_like(m_sc, -1e30)
            l_sc[...] = jnp.zeros_like(l_sc)
            acc_sc[...] = jnp.zeros_like(acc_sc)
            # q is invariant across kv steps: pay its head split once per
            # q-tile.  (The 1/sqrt(D) scale is already folded into c_attn.)
            for h in range(H):
                q_hm[h] = q_ref[0, :, h * D:(h + 1) * D]

        # Head-major copies of this kv step's K / V (static 64-lane ref slices,
        # done once per step so the hot per-head loop only uses leading-dim
        # dynamic indexing).
        for h in range(H):
            k_hm[h] = k_ref[0, :, h * D:(h + 1) * D]
            v_hm[h] = v_ref[0, :, h * D:(h + 1) * D]

        def process(masked):
            if masked:
                # Only diagonal tiles need a mask; tq == tk and qi == ki so
                # local tile indices are sufficient.
                row = lax.broadcasted_iota(jnp.int32, (tq, tk), 0)
                col = lax.broadcasted_iota(jnp.int32, (tq, tk), 1)
                causal = col <= row

            def head_body(h, carry):
                qh = q_hm[h]                      # (tq, D) bf16
                kh = k_hm[h]                      # (tk, D) bf16
                vh = v_hm[h]                      # (tk, D) bf16
                # q @ k^T without materializing a transpose of k.
                s = lax.dot_general(
                    qh, kh,
                    dimension_numbers=(((1,), (1,)), ((), ())),
                    preferred_element_type=jnp.float32,
                )                                 # (tq, tk) f32
                if masked:
                    s = jnp.where(causal, s, -1e30)
                m_prev = m_sc[h]                  # (tq, 1)
                m_new = jnp.maximum(m_prev, jnp.max(s, axis=-1, keepdims=True))
                alpha = jnp.exp(m_prev - m_new)
                p = jnp.exp(s - m_new)            # (tq, tk) f32
                l_sc[h] = alpha * l_sc[h] + jnp.sum(p, axis=-1, keepdims=True)
                acc_sc[h] = alpha * acc_sc[h] + jnp.dot(
                    p.astype(vh.dtype), vh, preferred_element_type=jnp.float32
                )
                m_sc[h] = m_new
                return carry

            lax.fori_loop(0, H, head_body, 0)

        # Flattened lower-triangular grid: ki <= qi always.  Off-diagonal
        # tiles are unmasked; the diagonal tile is masked and (being the last
        # kv step for this q-tile) also finalizes.
        @pl.when(ki < qi)
        def _off_diag():
            process(masked=False)

        @pl.when(ki == qi)
        def _diag():
            process(masked=True)
            # Single lane-dense (tq, C) store instead of H 64-lane stores.
            outs = []
            for h in range(H):
                inv_l = pl.reciprocal(l_sc[h], approx=True)  # EUP slot, ~free
                outs.append((acc_sc[h] * inv_l).astype(o_ref.dtype))
            o_ref[0] = jnp.concatenate(outs, axis=-1)

    return kernel


def pallas_flash_causal_attention(qkv, n_head, *, tq=128, tk=128):
    """qkv: (B, T, 3C) fused c_attn output -> (B, T, C) merged-head output."""
    B, T, C3 = qkv.shape
    C = C3 // 3
    assert 3 * C == C3
    assert C % n_head == 0
    D = C // n_head
    assert C % 128 == 0, "lane-dense blocks need n_embd % 128 == 0 (GPT-2: 768)"
    tq = min(tq, T)
    tk = min(tk, T)
    assert tq == tk, "causal block skipping assumes square (tq == tk) tiles"
    # TODO(synk): T not a multiple of the tile needs padding + extra masking.
    assert T % tq == 0

    nq = T // tq
    # Flattened lower-triangular grid: enumerate only live (qi, ki) tiles so no
    # sequential grid steps are wasted on fully-masked upper-triangle tiles.
    qi_list, ki_list = [], []
    for qi in range(nq):
        for ki in range(qi + 1):
            qi_list.append(qi)
            ki_list.append(ki)
    qi_tab = jnp.asarray(qi_list, dtype=jnp.int32)
    ki_tab = jnp.asarray(ki_list, dtype=jnp.int32)
    n_live = len(qi_list)

    kernel = _make_flash_attn_kernel(n_head, D, tq, tk)

    grid_spec = pltpu.PrefetchScalarGridSpec(
        num_scalar_prefetch=2,
        grid=(B, n_live),
        in_specs=[
            # q / k / v tiles live in column blocks 0 / 1 / 2 of the fused qkv
            # array; block indices are read from the prefetched tables.
            pl.BlockSpec((1, tq, C), lambda b, t, qt, kt: (b, qt[t], 0)),
            pl.BlockSpec((1, tk, C), lambda b, t, qt, kt: (b, kt[t], 1)),
            pl.BlockSpec((1, tk, C), lambda b, t, qt, kt: (b, kt[t], 2)),
        ],
        out_specs=pl.BlockSpec((1, tq, C), lambda b, t, qt, kt: (b, qt[t], 0)),
        scratch_shapes=[
            pltpu.VMEM((n_head, tq, 1), jnp.float32),   # running max  m
            pltpu.VMEM((n_head, tq, 1), jnp.float32),   # running sum  l
            pltpu.VMEM((n_head, tq, D), jnp.float32),   # running numerator
            pltpu.VMEM((n_head, tq, D), qkv.dtype),     # head-major q
            pltpu.VMEM((n_head, tk, D), qkv.dtype),     # head-major k
            pltpu.VMEM((n_head, tk, D), qkv.dtype),     # head-major v
        ],
    )

    return pl.pallas_call(
        kernel,
        out_shape=jax.ShapeDtypeStruct((B, T, C), qkv.dtype),
        grid_spec=grid_spec,
        compiler_params=pltpu.CompilerParams(
            dimension_semantics=("parallel", "arbitrary"),
            vmem_limit_bytes=32 * 1024 * 1024,
        ),
    )(qi_tab, ki_tab, qkv, qkv, qkv)


# ----------------------------------------------------------------------------
# Full forward pass (matches the PyTorch CausalSelfAttention module)
# ----------------------------------------------------------------------------
def causal_self_attention(x, params, n_head, *, tq=128, tk=128,
                          compute_dtype=jnp.bfloat16):
    B, T, C = x.shape
    assert C % n_head == 0
    D = C // n_head
    scale = 1.0 / math.sqrt(D)

    # Fold the 1/sqrt(D) attention scale into the q slice of c_attn (free,
    # exact for power-of-two D) so the flash kernel never scales scores.
    w_attn = params["w_attn"].at[:, :C].multiply(scale)
    b_attn = params["b_attn"].at[:C].multiply(scale)

    # bf16 MXU operands; f32 accumulation / softmax stats live in the kernels.
    xc = x.astype(compute_dtype).reshape(B * T, C)
    qkv = pallas_linear(xc, w_attn.astype(compute_dtype),
                        b_attn.astype(jnp.float32))
    qkv = qkv.reshape(B, T, 3 * C)

    # Fused flash attention: head split/merge handled inside the kernel via
    # BlockSpec index maps + head-major VMEM scratch; no HBM transposes.
    y = pallas_flash_causal_attention(qkv, n_head, tq=tq, tk=tk)   # (B, T, C)

    y = pallas_linear(y.reshape(B * T, C),
                      params["w_proj"].astype(compute_dtype),
                      params["b_proj"].astype(jnp.float32))
    return y.reshape(B, T, C).astype(x.dtype)


# ----------------------------------------------------------------------------
# Pure-JAX reference (for correctness checking only)
# ----------------------------------------------------------------------------
def reference(x, params, n_head):
    B, T, C = x.shape
    D = C // n_head
    qkv = x @ params["w_attn"] + params["b_attn"]
    q, k, v = jnp.split(qkv, 3, axis=2)
    q = q.reshape(B, T, n_head, D).transpose(0, 2, 1, 3)
    k = k.reshape(B, T, n_head, D).transpose(0, 2, 1, 3)
    v = v.reshape(B, T, n_head, D).transpose(0, 2, 1, 3)
    s = jnp.einsum("bhqd,bhkd->bhqk", q, k) / math.sqrt(D)
    mask = jnp.tril(jnp.ones((T, T), dtype=bool))
    s = jnp.where(mask[None, None], s, -jnp.inf)
    p = jax.nn.softmax(s, axis=-1)
    y = jnp.einsum("bhqk,bhkd->bhqd", p, v)
    y = y.transpose(0, 2, 1, 3).reshape(B, T, C)
    return y @ params["w_proj"] + params["b_proj"]


# ----------------------------------------------------------------------------
# Main
# ----------------------------------------------------------------------------
if __name__ == "__main__":
    # Small but TPU-shaped config: n_embd % 128 == 0 keeps every block
    # lane-dense, and T = 2 * tile exercises the flattened triangular grid,
    # diagonal masking and the online-softmax accumulator paths.
    B, T, C, H = 2, 256, 128, 2

    key = jax.random.PRNGKey(0)
    k_x, k_wa, k_ba, k_wp, k_bp = jax.random.split(key, 5)

    x = jax.random.normal(k_x, (B, T, C), dtype=jnp.float32)

    # nn.Linear weights stored pre-transposed as (in_features, out_features)
    # so the kernel computes y = x @ W + b (== x @ weight.T + bias in torch).
    params = {
        "w_attn": 0.02 * jax.random.normal(k_wa, (C, 3 * C), dtype=jnp.float32),
        "b_attn": 0.02 * jax.random.normal(k_ba, (3 * C,), dtype=jnp.float32),
        "w_proj": 0.02 * jax.random.normal(k_wp, (C, C), dtype=jnp.float32),
        "b_proj": 0.02 * jax.random.normal(k_bp, (C,), dtype=jnp.float32),
    }

    fwd = jax.jit(functools.partial(causal_self_attention, n_head=H))
    y = jax.block_until_ready(fwd(x, params))

    y_ref = reference(x, params, H)
    assert y.shape == (B, T, C)
    max_err = float(jnp.max(jnp.abs(y - y_ref)))
    # bf16 MXU operands -> compare against the f32 reference with a
    # bf16-appropriate tolerance.
    assert max_err < 2e-2, f"mismatch vs reference, max abs err {max_err}"

    print("KERNEL_OK")
</pallas_src>

<mosaic_0001>
module attributes {stable_mosaic.version = 11 : i64} {
  func.func @_linear_fullk_kernel(%arg0: i32, %arg1: i32, %arg2: memref<512x128xbf16, #tpu.memory_space<vmem>>, %arg3: memref<128x384xbf16, #tpu.memory_space<vmem>>, %arg4: memref<1x384xf32, #tpu.memory_space<vmem>>, %arg5: memref<512x384xbf16, #tpu.memory_space<vmem>>) attributes {dimension_semantics = [#tpu.dimension_semantics<parallel>, #tpu.dimension_semantics<parallel>], iteration_bounds = array<i64: 1, 1>, scalar_prefetch = 0 : i64, scratch_operands = 0 : i64, tpu.core_type = #tpu.core_type<tc>, window_params = [{transform_indices = @transform_0, window_bounds = array<i64: 512, 128>}, {transform_indices = @transform_1, window_bounds = array<i64: 128, 384>}, {transform_indices = @transform_2, window_bounds = array<i64: 1, 384>}, {transform_indices = @transform_3, window_bounds = array<i64: 512, 384>}]} {
    %c0 = arith.constant 0 : index
    %c0_0 = arith.constant 0 : index
    %0 = vector.load %arg2[%c0, %c0_0] : memref<512x128xbf16, #tpu.memory_space<vmem>>, vector<512x128xbf16>
    %c0_1 = arith.constant 0 : index
    %c0_2 = arith.constant 0 : index
    %1 = vector.load %arg3[%c0_1, %c0_2] : memref<128x384xbf16, #tpu.memory_space<vmem>>, vector<128x384xbf16>
    %cst = arith.constant dense<0.000000e+00> : vector<512x384xf32>
    %2 = tpu.matmul %0, %1, %cst {dimension_numbers = #tpu.dot_dimension_numbers<[1], [0], [0], [1], [0, 0, 1, 1], [], []>} : vector<512x128xbf16>, vector<128x384xbf16>, vector<512x384xf32> -> vector<512x384xf32>
    %c0_3 = arith.constant 0 : index
    %c0_4 = arith.constant 0 : index
    %3 = vector.load %arg4[%c0_3, %c0_4] : memref<1x384xf32, #tpu.memory_space<vmem>>, vector<1x384xf32>
    %4 = vector.broadcast %3 : vector<1x384xf32> to vector<512x384xf32>
    %5 = arith.addf %2, %4 : vector<512x384xf32>
    %6 = arith.truncf %5 : vector<512x384xf32> to vector<512x384xbf16>
    %c0_5 = arith.constant 0 : index
    %c0_6 = arith.constant 0 : index
    %7 = vector.load %arg5[%c0_5, %c0_6] : memref<512x384xbf16, #tpu.memory_space<vmem>>, vector<512x384xbf16>
    tpu.vector_store %arg5[%c0_5, %c0_6], %6 {strides = array<i32>} : memref<512x384xbf16, #tpu.memory_space<vmem>>, vector<512x384xbf16>,
    return
  }
  func.func @transform_0(%arg0: i32, %arg1: i32) -> (i32, i32) {
    %c0_i32 = arith.constant 0 : i32
    %c0_i32_0 = arith.constant 0 : i32
    return %arg0, %c0_i32 : i32, i32
  }
  func.func @transform_1(%arg0: i32, %arg1: i32) -> (i32, i32) {
    %c0_i32 = arith.constant 0 : i32
    %c0_i32_0 = arith.constant 0 : i32
    return %c0_i32, %arg1 : i32, i32
  }
  func.func @transform_2(%arg0: i32, %arg1: i32) -> (i32, i32) {
    %c0_i32 = arith.constant 0 : i32
    %c0_i32_0 = arith.constant 0 : i32
    return %c0_i32, %arg1 : i32, i32
  }
  func.func @transform_3(%arg0: i32, %arg1: i32) -> (i32, i32) {
    %c0_i32 = arith.constant 0 : i32
    return %arg0, %arg1 : i32, i32
  }
}

module attributes {stable_mosaic.version = 11 : i64} {
  func.func @_linear_fullk_kernel(%arg0: i32, %arg1: i32, %arg2: memref<512x128xbf16, #tpu.memory_space<vmem>>, %arg3: memref<128x128xbf16, #tpu.memory_space<vmem>>, %arg4: memref<1x128xf32, #tpu.memory_space<vmem>>, %arg5: memref<512x128xbf16, #tpu.memory_space<vmem>>) attributes {dimension_semantics = [#tpu.dimension_semantics<parallel>, #tpu.dimension_semantics<parallel>], iteration_bounds = array<i64: 1, 1>, scalar_prefetch = 0 : i64, scratch_operands = 0 : i64, tpu.core_type = #tpu.core_type<tc>, window_params = [{transform_indices = @transform_0, window_bounds = array<i64: 512, 128>}, {transform_indices = @transform_1, window_bounds = array<i64: 128, 128>}, {transform_indices = @transform_2, window_bounds = array<i64: 1, 128>}, {transform_indices = @transform_3, window_bounds = array<i64: 512, 128>}]} {
    %c0 = arith.constant 0 : index
    %c0_0 = arith.constant 0 : index
    %0 = vector.load %arg2[%c0, %c0_0] : memref<512x128xbf16, #tpu.memory_space<vmem>>, vector<512x128xbf16>
    %c0_1 = arith.constant 0 : index
    %c0_2 = arith.constant 0 : index
    %1 = vector.load %arg3[%c0_1, %c0_2] : memref<128x128xbf16, #tpu.memory_space<vmem>>, vector<128x128xbf16>
    %cst = arith.constant dense<0.000000e+00> : vector<512x128xf32>
    %2 = tpu.matmul %0, %1, %cst {dimension_numbers = #tpu.dot_dimension_numbers<[1], [0], [0], [1], [0, 0, 1, 1], [], []>} : vector<512x128xbf16>, vector<128x128xbf16>, vector<512x128xf32> -> vector<512x128xf32>
    %c0_3 = arith.constant 0 : index
    %c0_4 = arith.constant 0 : index
    %3 = vector.load %arg4[%c0_3, %c0_4] : memref<1x128xf32, #tpu.memory_space<vmem>>, vector<1x128xf32>
    %4 = vector.broadcast %3 : vector<1x128xf32> to vector<512x128xf32>
    %5 = arith.addf %2, %4 : vector<512x128xf32>
    %6 = arith.truncf %5 : vector<512x128xf32> to vector<512x128xbf16>
    %c0_5 = arith.constant 0 : index
    %c0_6 = arith.constant 0 : index
    %7 = vector.load %arg5[%c0_5, %c0_6] : memref<512x128xbf16, #tpu.memory_space<vmem>>, vector<512x128xbf16>
    tpu.vector_store %arg5[%c0_5, %c0_6], %6 {strides = array<i32>} : memref<512x128xbf16, #tpu.memory_space<vmem>>, vector<512x128xbf16>,
    return
  }
  func.func @transform_0(%arg0: i32, %arg1: i32) -> (i32, i32) {
    %c0_i32 = arith.constant 0 : i32
    %c0_i32_0 = arith.constant 0 : i32
    return %arg0, %c0_i32 : i32, i32
  }
  func.func @transform_1(%arg0: i32, %arg1: i32) -> (i32, i32) {
    %c0_i32 = arith.constant 0 : i32
    %c0_i32_0 = arith.constant 0 : i32
    return %c0_i32, %arg1 : i32, i32
  }
  func.func @transform_2(%arg0: i32, %arg1: i32) -> (i32, i32) {
    %c0_i32 = arith.constant 0 : i32
    %c0_i32_0 = arith.constant 0 : i32
    return %c0_i32, %arg1 : i32, i32
  }
  func.func @transform_3(%arg0: i32, %arg1: i32) -> (i32, i32) {
    %c0_i32 = arith.constant 0 : i32
    return %arg0, %arg1 : i32, i32
  }
}

module attributes {stable_mosaic.version = 11 : i64} {
  func.func @kernel(%arg0: i32, %arg1: i32, %arg2: memref<3xi32, #tpu.memory_space<smem>>, %arg3: memref<3xi32, #tpu.memory_space<smem>>, %arg4: memref<1x128x128xbf16, #tpu.memory_space<vmem>>, %arg5: memref<1x128x128xbf16, #tpu.memory_space<vmem>>, %arg6: memref<1x128x128xbf16, #tpu.memory_space<vmem>>, %arg7: memref<1x128x128xbf16, #tpu.memory_space<vmem>>, %arg8: memref<2x128x1xf32, #tpu.memory_space<vmem>>, %arg9: memref<2x128x1xf32, #tpu.memory_space<vmem>>, %arg10: memref<2x128x64xf32, #tpu.memory_space<vmem>>, %arg11: memref<2x128x64xbf16, #tpu.memory_space<vmem>>, %arg12: memref<2x128x64xbf16, #tpu.memory_space<vmem>>, %arg13: memref<2x128x64xbf16, #tpu.memory_space<vmem>>) attributes {dimension_semantics = [#tpu.dimension_semantics<parallel>, #tpu.dimension_semantics<arbitrary>], iteration_bounds = array<i64: 2, 3>, scalar_prefetch = 2 : i64, scratch_operands = 6 : i64, tpu.core_type = #tpu.core_type<tc>, window_params = [{transform_indices = @transform_0, window_bounds = array<i64: 1, 128, 128>}, {transform_indices = @transform_1, window_bounds = array<i64: 1, 128, 128>}, {transform_indices = @transform_2, window_bounds = array<i64: 1, 128, 128>}, {transform_indices = @transform_3, window_bounds = array<i64: 1, 128, 128>}]} {
    %0 = arith.index_cast %arg1 : i32 to index
    %1 = memref.load %arg2[%0] : memref<3xi32, #tpu.memory_space<smem>>
    %2 = arith.index_cast %arg1 : i32 to index
    %3 = memref.load %arg3[%2] : memref<3xi32, #tpu.memory_space<smem>>
    %c0_i32 = arith.constant 0 : i32
    %4 = arith.cmpi eq, %3, %c0_i32 : i32
    %5 = arith.extui %4 : i1 to i32
    %c0_i32_0 = arith.constant 0 : i32
    %6 = arith.cmpi ne, %5, %c0_i32_0 : i32
    scf.if %6 {
      %cst = arith.constant -1.000000e+30 : f32
      %33 = vector.broadcast %cst : f32 to vector<2x128x1xf32>
      %c0_24 = arith.constant 0 : index
      %c0_25 = arith.constant 0 : index
      %c0_26 = arith.constant 0 : index
      %34 = vector.load %arg8[%c0_24, %c0_25, %c0_26] : memref<2x128x1xf32, #tpu.memory_space<vmem>>, vector<2x128x1xf32>
      tpu.vector_store %arg8[%c0_24, %c0_25, %c0_26], %33 {strides = array<i32>} : memref<2x128x1xf32, #tpu.memory_space<vmem>>, vector<2x128x1xf32>,
      %cst_27 = arith.constant 0.000000e+00 : f32
      %35 = vector.broadcast %cst_27 : f32 to vector<2x128x1xf32>
      %c0_28 = arith.constant 0 : index
      %c0_29 = arith.constant 0 : index
      %c0_30 = arith.constant 0 : index
      %36 = vector.load %arg9[%c0_28, %c0_29, %c0_30] : memref<2x128x1xf32, #tpu.memory_space<vmem>>, vector<2x128x1xf32>
      tpu.vector_store %arg9[%c0_28, %c0_29, %c0_30], %35 {strides = array<i32>} : memref<2x128x1xf32, #tpu.memory_space<vmem>>, vector<2x128x1xf32>,
      %cst_31 = arith.constant 0.000000e+00 : f32
      %37 = vector.broadcast %cst_31 : f32 to vector<2x128x64xf32>
      %c0_32 = arith.constant 0 : index
      %c0_33 = arith.constant 0 : index
      %c0_34 = arith.constant 0 : index
      %38 = vector.load %arg10[%c0_32, %c0_33, %c0_34] : memref<2x128x64xf32, #tpu.memory_space<vmem>>, vector<2x128x64xf32>
      tpu.vector_store %arg10[%c0_32, %c0_33, %c0_34], %37 {strides = array<i32>} : memref<2x128x64xf32, #tpu.memory_space<vmem>>, vector<2x128x64xf32>,
      %c0_35 = arith.constant 0 : index
      %c0_36 = arith.constant 0 : index
      %c0_37 = arith.constant 0 : index
      %39 = vector.load %arg4[%c0_35, %c0_36, %c0_37] : memref<1x128x128xbf16, #tpu.memory_space<vmem>>, vector<1x128x64xbf16>
      %40 = vector.shape_cast %39 : vector<1x128x64xbf16> to vector<128x64xbf16>
      %c0_38 = arith.constant 0 : index
      %c0_39 = arith.constant 0 : index
      %c0_40 = arith.constant 0 : index
      %41 = vector.load %arg11[%c0_38, %c0_39, %c0_40] : memref<2x128x64xbf16, #tpu.memory_space<vmem>>, vector<1x128x64xbf16>
      %42 = vector.shape_cast %41 : vector<1x128x64xbf16> to vector<128x64xbf16>
      %43 = vector.shape_cast %40 : vector<128x64xbf16> to vector<1x128x64xbf16>
      tpu.vector_store %arg11[%c0_38, %c0_39, %c0_40], %43 {strides = array<i32>} : memref<2x128x64xbf16, #tpu.memory_space<vmem>>, vector<1x128x64xbf16>,
      %c0_41 = arith.constant 0 : index
      %c0_42 = arith.constant 0 : index
      %c64_43 = arith.constant 64 : index
      %44 = vector.load %arg4[%c0_41, %c0_42, %c64_43] : memref<1x128x128xbf16, #tpu.memory_space<vmem>>, vector<1x128x64xbf16>
      %45 = vector.shape_cast %44 : vector<1x128x64xbf16> to vector<128x64xbf16>
      %c1_44 = arith.constant 1 : index
      %c0_45 = arith.constant 0 : index
      %c0_46 = arith.constant 0 : index
      %46 = vector.load %arg11[%c1_44, %c0_45, %c0_46] : memref<2x128x64xbf16, #tpu.memory_space<vmem>>, vector<1x128x64xbf16>
      %47 = vector.shape_cast %46 : vector<1x128x64xbf16> to vector<128x64xbf16>
      %48 = vector.shape_cast %45 : vector<128x64xbf16> to vector<1x128x64xbf16>
      tpu.vector_store %arg11[%c1_44, %c0_45, %c0_46], %48 {strides = array<i32>} : memref<2x128x64xbf16, #tpu.memory_space<vmem>>, vector<1x128x64xbf16>,
    } else {
    }
    %c0 = arith.constant 0 : index
    %c0_1 = arith.constant 0 : index
    %c0_2 = arith.constant 0 : index
    %7 = vector.load %arg5[%c0, %c0_1, %c0_2] : memref<1x128x128xbf16, #tpu.memory_space<vmem>>, vector<1x128x64xbf16>
    %8 = vector.shape_cast %7 : vector<1x128x64xbf16> to vector<128x64xbf16>
    %c0_3 = arith.constant 0 : index
    %c0_4 = arith.constant 0 : index
    %c0_5 = arith.constant 0 : index
    %9 = vector.load %arg12[%c0_3, %c0_4, %c0_5] : memref<2x128x64xbf16, #tpu.memory_space<vmem>>, vector<1x128x64xbf16>
    %10 = vector.shape_cast %9 : vector<1x128x64xbf16> to vector<128x64xbf16>
    %11 = vector.shape_cast %8 : vector<128x64xbf16> to vector<1x128x64xbf16>
    tpu.vector_store %arg12[%c0_3, %c0_4, %c0_5], %11 {strides = array<i32>} : memref<2x128x64xbf16, #tpu.memory_space<vmem>>, vector<1x128x64xbf16>,
    %c0_6 = arith.constant 0 : index
    %c0_7 = arith.constant 0 : index
    %c0_8 = arith.constant 0 : index
    %12 = vector.load %arg6[%c0_6, %c0_7, %c0_8] : memref<1x128x128xbf16, #tpu.memory_space<vmem>>, vector<1x128x64xbf16>
    %13 = vector.shape_cast %12 : vector<1x128x64xbf16> to vector<128x64xbf16>
    %c0_9 = arith.constant 0 : index
    %c0_10 = arith.constant 0 : index
    %c0_11 = arith.constant 0 : index
    %14 = vector.load %arg13[%c0_9, %c0_10, %c0_11] : memref<2x128x64xbf16, #tpu.memory_space<vmem>>, vector<1x128x64xbf16>
    %15 = vector.shape_cast %14 : vector<1x128x64xbf16> to vector<128x64xbf16>
    %16 = vector.shape_cast %13 : vector<128x64xbf16> to vector<1x128x64xbf16>
    tpu.vector_store %arg13[%c0_9, %c0_10, %c0_11], %16 {strides = array<i32>} : memref<2x128x64xbf16, #tpu.memory_space<vmem>>, vector<1x128x64xbf16>,
    %c0_12 = arith.constant 0 : index
    %c0_13 = arith.constant 0 : index
    %c64 = arith.constant 64 : index
    %17 = vector.load %arg5[%c0_12, %c0_13, %c64] : memref<1x128x128xbf16, #tpu.memory_space<vmem>>, vector<1x128x64xbf16>
    %18 = vector.shape_cast %17 : vector<1x128x64xbf16> to vector<128x64xbf16>
    %c1 = arith.constant 1 : index
    %c0_14 = arith.constant 0 : index
    %c0_15 = arith.constant 0 : index
    %19 = vector.load %arg12[%c1, %c0_14, %c0_15] : memref<2x128x64xbf16, #tpu.memory_space<vmem>>, vector<1x128x64xbf16>
    %20 = vector.shape_cast %19 : vector<1x128x64xbf16> to vector<128x64xbf16>
    %21 = vector.shape_cast %18 : vector<128x64xbf16> to vector<1x128x64xbf16>
    tpu.vector_store %arg12[%c1, %c0_14, %c0_15], %21 {strides = array<i32>} : memref<2x128x64xbf16, #tpu.memory_space<vmem>>, vector<1x128x64xbf16>,
    %c0_16 = arith.constant 0 : index
    %c0_17 = arith.constant 0 : index
    %c64_18 = arith.constant 64 : index
    %22 = vector.load %arg6[%c0_16, %c0_17, %c64_18] : memref<1x128x128xbf16, #tpu.memory_space<vmem>>, vector<1x128x64xbf16>
    %23 = vector.shape_cast %22 : vector<1x128x64xbf16> to vector<128x64xbf16>
    %c1_19 = arith.constant 1 : index
    %c0_20 = arith.constant 0 : index
    %c0_21 = arith.constant 0 : index
    %24 = vector.load %arg13[%c1_19, %c0_20, %c0_21] : memref<2x128x64xbf16, #tpu.memory_space<vmem>>, vector<1x128x64xbf16>
    %25 = vector.shape_cast %24 : vector<1x128x64xbf16> to vector<128x64xbf16>
    %26 = vector.shape_cast %23 : vector<128x64xbf16> to vector<1x128x64xbf16>
    tpu.vector_store %arg13[%c1_19, %c0_20, %c0_21], %26 {strides = array<i32>} : memref<2x128x64xbf16, #tpu.memory_space<vmem>>, vector<1x128x64xbf16>,
    %27 = arith.cmpi slt, %3, %1 : i32
    %28 = arith.extui %27 : i1 to i32
    %c0_i32_22 = arith.constant 0 : i32
    %29 = arith.cmpi ne, %28, %c0_i32_22 : i32
    scf.if %29 {
      %c0_i32_24 = arith.constant 0 : i32
      %c2_i32 = arith.constant 2 : i32
      %33 = arith.addi %c0_i32_24, %c2_i32 : i32
      %c1_i32 = arith.constant 1 : i32
      scf.for %arg14 = %c0_i32_24 to %33 step %c1_i32  : i32 {
        %34 = arith.index_cast %arg14 : i32 to index
        %c0_26 = arith.constant 0 : index
        %c0_27 = arith.constant 0 : index
        %35 = vector.load %arg11[%34, %c0_26, %c0_27] : memref<2x128x64xbf16, #tpu.memory_space<vmem>>, vector<1x128x64xbf16>
        %36 = vector.shape_cast %35 : vector<1x128x64xbf16> to vector<128x64xbf16>
        %37 = arith.index_cast %arg14 : i32 to index
        %c0_28 = arith.constant 0 : index
        %c0_29 = arith.constant 0 : index
        %38 = vector.load %arg12[%37, %c0_28, %c0_29] : memref<2x128x64xbf16, #tpu.memory_space<vmem>>, vector<1x128x64xbf16>
        %39 = vector.shape_cast %38 : vector<1x128x64xbf16> to vector<128x64xbf16>
        %40 = arith.index_cast %arg14 : i32 to index
        %c0_30 = arith.constant 0 : index
        %c0_31 = arith.constant 0 : index
        %41 = vector.load %arg13[%40, %c0_30, %c0_31] : memref<2x128x64xbf16, #tpu.memory_space<vmem>>, vector<1x128x64xbf16>
        %42 = vector.shape_cast %41 : vector<1x128x64xbf16> to vector<128x64xbf16>
        %cst = arith.constant dense<0.000000e+00> : vector<128x128xf32>
        %43 = tpu.matmul %36, %39, %cst {dimension_numbers = #tpu.dot_dimension_numbers<[1], [1], [0], [0], [0, 0, 1, 0], [], []>} : vector<128x64xbf16>, vector<128x64xbf16>, vector<128x128xf32> -> vector<128x128xf32>
        %44 = arith.index_cast %arg14 : i32 to index
        %c0_32 = arith.constant 0 : index
        %c0_33 = arith.constant 0 : index
        %45 = vector.load %arg8[%44, %c0_32, %c0_33] : memref<2x128x1xf32, #tpu.memory_space<vmem>>, vector<1x128x1xf32>
        %46 = vector.shape_cast %45 : vector<1x128x1xf32> to vector<128x1xf32>
        %cst_34 = arith.constant dense<0xFF800000> : vector<128xf32>
        %47 = vector.multi_reduction <maximumf>, %43, %cst_34 [1] : vector<128x128xf32> to vector<128xf32>
        %48 = vector.shape_cast %47 : vector<128xf32> to vector<128x1xf32>
        %49 = arith.maximumf %46, %48 : vector<128x1xf32>
        %50 = arith.subf %46, %49 : vector<128x1xf32>
        %51 = math.exp %50 : vector<128x1xf32>
        %52 = vector.broadcast %49 : vector<128x1xf32> to vector<128x128xf32>
        %53 = arith.subf %43, %52 : vector<128x128xf32>
        %54 = math.exp %53 : vector<128x128xf32>
        %55 = arith.index_cast %arg14 : i32 to index
        %c0_35 = arith.constant 0 : index
        %c0_36 = arith.constant 0 : index
        %56 = vector.load %arg9[%55, %c0_35, %c0_36] : memref<2x128x1xf32, #tpu.memory_space<vmem>>, vector<1x128x1xf32>
        %57 = vector.shape_cast %56 : vector<1x128x1xf32> to vector<128x1xf32>
        %58 = arith.mulf %51, %57 : vector<128x1xf32>
        %cst_37 = arith.constant dense<0.000000e+00> : vector<128xf32>
        %59 = vector.multi_reduction <add>, %54, %cst_37 [1] : vector<128x128xf32> to vector<128xf32>
        %60 = vector.shape_cast %59 : vector<128xf32> to vector<128x1xf32>
        %61 = arith.addf %58, %60 : vector<128x1xf32>
        %62 = arith.index_cast %arg14 : i32 to index
        %c0_38 = arith.constant 0 : index
        %c0_39 = arith.constant 0 : index
        %63 = vector.load %arg9[%62, %c0_38, %c0_39] : memref<2x128x1xf32, #tpu.memory_space<vmem>>, vector<1x128x1xf32>
        %64 = vector.shape_cast %63 : vector<1x128x1xf32> to vector<128x1xf32>
        %65 = vector.shape_cast %61 : vector<128x1xf32> to vector<1x128x1xf32>
        tpu.vector_store %arg9[%62, %c0_38, %c0_39], %65 {strides = array<i32>} : memref<2x128x1xf32, #tpu.memory_space<vmem>>, vector<1x128x1xf32>,
        %66 = arith.index_cast %arg14 : i32 to index
        %c0_40 = arith.constant 0 : index
        %c0_41 = arith.constant 0 : index
        %67 = vector.load %arg10[%66, %c0_40, %c0_41] : memref<2x128x64xf32, #tpu.memory_space<vmem>>, vector<1x128x64xf32>
        %68 = vector.shape_cast %67 : vector<1x128x64xf32> to vector<128x64xf32>
        %69 = vector.broadcast %51 : vector<128x1xf32> to vector<128x64xf32>
        %70 = arith.mulf %69, %68 : vector<128x64xf32>
        %71 = arith.truncf %54 : vector<128x128xf32> to vector<128x128xbf16>
        %cst_42 = arith.constant dense<0.000000e+00> : vector<128x64xf32>
        %72 = tpu.matmul %71, %42, %cst_42 {dimension_numbers = #tpu.dot_dimension_numbers<[1], [0], [0], [1], [0, 0, 1, 1], [], []>} : vector<128x128xbf16>, vector<128x64xbf16>, vector<128x64xf32> -> vector<128x64xf32>
        %73 = arith.addf %70, %72 : vector<128x64xf32>
        %74 = arith.index_cast %arg14 : i32 to index
        %c0_43 = arith.constant 0 : index
        %c0_44 = arith.constant 0 : index
        %75 = vector.load %arg10[%74, %c0_43, %c0_44] : memref<2x128x64xf32, #tpu.memory_space<vmem>>, vector<1x128x64xf32>
        %76 = vector.shape_cast %75 : vector<1x128x64xf32> to vector<128x64xf32>
        %77 = vector.shape_cast %73 : vector<128x64xf32> to vector<1x128x64xf32>
        tpu.vector_store %arg10[%74, %c0_43, %c0_44], %77 {strides = array<i32>} : memref<2x128x64xf32, #tpu.memory_space<vmem>>, vector<1x128x64xf32>,
        %78 = arith.index_cast %arg14 : i32 to index
        %c0_45 = arith.constant 0 : index
        %c0_46 = arith.constant 0 : index
        %79 = vector.load %arg8[%78, %c0_45, %c0_46] : memref<2x128x1xf32, #tpu.memory_space<vmem>>, vector<1x128x1xf32>
        %80 = vector.shape_cast %79 : vector<1x128x1xf32> to vector<128x1xf32>
        %81 = vector.shape_cast %49 : vector<128x1xf32> to vector<1x128x1xf32>
        tpu.vector_store %arg8[%78, %c0_45, %c0_46], %81 {strides = array<i32>} : memref<2x128x1xf32, #tpu.memory_space<vmem>>, vector<1x128x1xf32>,
      }
      %c2_i32_25 = arith.constant 2 : i32
    } else {
    }
    %30 = arith.cmpi eq, %3, %1 : i32
    %31 = arith.extui %30 : i1 to i32
    %c0_i32_23 = arith.constant 0 : i32
    %32 = arith.cmpi ne, %31, %c0_i32_23 : i32
    scf.if %32 {
      %33 = tpu.iota {dimensions = array<i32: 0>} : vector<128x128xi32>
      %34 = tpu.iota {dimensions = array<i32: 1>} : vector<128x128xi32>
      %35 = arith.cmpi sle, %34, %33 : vector<128x128xi32>
      %c0_i32_24 = arith.constant 0 : i32
      %c2_i32 = arith.constant 2 : i32
      %36 = arith.addi %c0_i32_24, %c2_i32 : i32
      %c1_i32 = arith.constant 1 : i32
      scf.for %arg14 = %c0_i32_24 to %36 step %c1_i32  : i32 {
        %57 = arith.index_cast %arg14 : i32 to index
        %c0_41 = arith.constant 0 : index
        %c0_42 = arith.constant 0 : index
        %58 = vector.load %arg11[%57, %c0_41, %c0_42] : memref<2x128x64xbf16, #tpu.memory_space<vmem>>, vector<1x128x64xbf16>
        %59 = vector.shape_cast %58 : vector<1x128x64xbf16> to vector<128x64xbf16>
        %60 = arith.index_cast %arg14 : i32 to index
        %c0_43 = arith.constant 0 : index
        %c0_44 = arith.constant 0 : index
        %61 = vector.load %arg12[%60, %c0_43, %c0_44] : memref<2x128x64xbf16, #tpu.memory_space<vmem>>, vector<1x128x64xbf16>
        %62 = vector.shape_cast %61 : vector<1x128x64xbf16> to vector<128x64xbf16>
        %63 = arith.index_cast %arg14 : i32 to index
        %c0_45 = arith.constant 0 : index
        %c0_46 = arith.constant 0 : index
        %64 = vector.load %arg13[%63, %c0_45, %c0_46] : memref<2x128x64xbf16, #tpu.memory_space<vmem>>, vector<1x128x64xbf16>
        %65 = vector.shape_cast %64 : vector<1x128x64xbf16> to vector<128x64xbf16>
        %cst = arith.constant dense<0.000000e+00> : vector<128x128xf32>
        %66 = tpu.matmul %59, %62, %cst {dimension_numbers = #tpu.dot_dimension_numbers<[1], [1], [0], [0], [0, 0, 1, 0], [], []>} : vector<128x64xbf16>, vector<128x64xbf16>, vector<128x128xf32> -> vector<128x128xf32>
        %cst_47 = arith.constant -1.000000e+30 : f32
        %67 = vector.broadcast %cst_47 : f32 to vector<128x128xf32>
        %68 = arith.select %35, %66, %67 : vector<128x128xi1>, vector<128x128xf32>
        %69 = arith.index_cast %arg14 : i32 to index
        %c0_48 = arith.constant 0 : index
        %c0_49 = arith.constant 0 : index
        %70 = vector.load %arg8[%69, %c0_48, %c0_49] : memref<2x128x1xf32, #tpu.memory_space<vmem>>, vector<1x128x1xf32>
        %71 = vector.shape_cast %70 : vector<1x128x1xf32> to vector<128x1xf32>
        %cst_50 = arith.constant dense<0xFF800000> : vector<128xf32>
        %72 = vector.multi_reduction <maximumf>, %68, %cst_50 [1] : vector<128x128xf32> to vector<128xf32>
        %73 = vector.shape_cast %72 : vector<128xf32> to vector<128x1xf32>
        %74 = arith.maximumf %71, %73 : vector<128x1xf32>
        %75 = arith.subf %71, %74 : vector<128x1xf32>
        %76 = math.exp %75 : vector<128x1xf32>
        %77 = vector.broadcast %74 : vector<128x1xf32> to vector<128x128xf32>
        %78 = arith.subf %68, %77 : vector<128x128xf32>
        %79 = math.exp %78 : vector<128x128xf32>
        %80 = arith.index_cast %arg14 : i32 to index
        %c0_51 = arith.constant 0 : index
        %c0_52 = arith.constant 0 : index
        %81 = vector.load %arg9[%80, %c0_51, %c0_52] : memref<2x128x1xf32, #tpu.memory_space<vmem>>, vector<1x128x1xf32>
        %82 = vector.shape_cast %81 : vector<1x128x1xf32> to vector<128x1xf32>
        %83 = arith.mulf %76, %82 : vector<128x1xf32>
        %cst_53 = arith.constant dense<0.000000e+00> : vector<128xf32>
        %84 = vector.multi_reduction <add>, %79, %cst_53 [1] : vector<128x128xf32> to vector<128xf32>
        %85 = vector.shape_cast %84 : vector<128xf32> to vector<128x1xf32>
        %86 = arith.addf %83, %85 : vector<128x1xf32>
        %87 = arith.index_cast %arg14 : i32 to index
        %c0_54 = arith.constant 0 : index
        %c0_55 = arith.constant 0 : index
        %88 = vector.load %arg9[%87, %c0_54, %c0_55] : memref<2x128x1xf32, #tpu.memory_space<vmem>>, vector<1x128x1xf32>
        %89 = vector.shape_cast %88 : vector<1x128x1xf32> to vector<128x1xf32>
        %90 = vector.shape_cast %86 : vector<128x1xf32> to vector<1x128x1xf32>
        tpu.vector_store %arg9[%87, %c0_54, %c0_55], %90 {strides = array<i32>} : memref<2x128x1xf32, #tpu.memory_space<vmem>>, vector<1x128x1xf32>,
        %91 = arith.index_cast %arg14 : i32 to index
        %c0_56 = arith.constant 0 : index
        %c0_57 = arith.constant 0 : index
        %92 = vector.load %arg10[%91, %c0_56, %c0_57] : memref<2x128x64xf32, #tpu.memory_space<vmem>>, vector<1x128x64xf32>
        %93 = vector.shape_cast %92 : vector<1x128x64xf32> to vector<128x64xf32>
        %94 = vector.broadcast %76 : vector<128x1xf32> to vector<128x64xf32>
        %95 = arith.mulf %94, %93 : vector<128x64xf32>
        %96 = arith.truncf %79 : vector<128x128xf32> to vector<128x128xbf16>
        %cst_58 = arith.constant dense<0.000000e+00> : vector<128x64xf32>
        %97 = tpu.matmul %96, %65, %cst_58 {dimension_numbers = #tpu.dot_dimension_numbers<[1], [0], [0], [1], [0, 0, 1, 1], [], []>} : vector<128x128xbf16>, vector<128x64xbf16>, vector<128x64xf32> -> vector<128x64xf32>
        %98 = arith.addf %95, %97 : vector<128x64xf32>
        %99 = arith.index_cast %arg14 : i32 to index
        %c0_59 = arith.constant 0 : index
        %c0_60 = arith.constant 0 : index
        %100 = vector.load %arg10[%99, %c0_59, %c0_60] : memref<2x128x64xf32, #tpu.memory_space<vmem>>, vector<1x128x64xf32>
        %101 = vector.shape_cast %100 : vector<1x128x64xf32> to vector<128x64xf32>
        %102 = vector.shape_cast %98 : vector<128x64xf32> to vector<1x128x64xf32>
        tpu.vector_store %arg10[%99, %c0_59, %c0_60], %102 {strides = array<i32>} : memref<2x128x64xf32, #tpu.memory_space<vmem>>, vector<1x128x64xf32>,
        %103 = arith.index_cast %arg14 : i32 to index
        %c0_61 = arith.constant 0 : index
        %c0_62 = arith.constant 0 : index
        %104 = vector.load %arg8[%103, %c0_61, %c0_62] : memref<2x128x1xf32, #tpu.memory_space<vmem>>, vector<1x128x1xf32>
        %105 = vector.shape_cast %104 : vector<1x128x1xf32> to vector<128x1xf32>
        %106 = vector.shape_cast %74 : vector<128x1xf32> to vector<1x128x1xf32>
        tpu.vector_store %arg8[%103, %c0_61, %c0_62], %106 {strides = array<i32>} : memref<2x128x1xf32, #tpu.memory_space<vmem>>, vector<1x128x1xf32>,
      }
      %c2_i32_25 = arith.constant 2 : i32
      %c0_26 = arith.constant 0 : index
      %c0_27 = arith.constant 0 : index
      %c0_28 = arith.constant 0 : index
      %37 = vector.load %arg9[%c0_26, %c0_27, %c0_28] : memref<2x128x1xf32, #tpu.memory_space<vmem>>, vector<1x128x1xf32>
      %38 = vector.shape_cast %37 : vector<1x128x1xf32> to vector<128x1xf32>
      %39 = tpu.reciprocal %38 {approx = true} : vector<128x1xf32> -> vector<128x1xf32>
      %c0_29 = arith.constant 0 : index
      %c0_30 = arith.constant 0 : index
      %c0_31 = arith.constant 0 : index
      %40 = vector.load %arg10[%c0_29, %c0_30, %c0_31] : memref<2x128x64xf32, #tpu.memory_space<vmem>>, vector<1x128x64xf32>
      %41 = vector.shape_cast %40 : vector<1x128x64xf32> to vector<128x64xf32>
      %42 = vector.broadcast %39 : vector<128x1xf32> to vector<128x64xf32>
      %43 = arith.mulf %41, %42 : vector<128x64xf32>
      %44 = arith.truncf %43 : vector<128x64xf32> to vector<128x64xbf16>
      %c1_32 = arith.constant 1 : index
      %c0_33 = arith.constant 0 : index
      %c0_34 = arith.constant 0 : index
      %45 = vector.load %arg9[%c1_32, %c0_33, %c0_34] : memref<2x128x1xf32, #tpu.memory_space<vmem>>, vector<1x128x1xf32>
      %46 = vector.shape_cast %45 : vector<1x128x1xf32> to vector<128x1xf32>
      %47 = tpu.reciprocal %46 {approx = true} : vector<128x1xf32> -> vector<128x1xf32>
      %c1_35 = arith.constant 1 : index
      %c0_36 = arith.constant 0 : index
      %c0_37 = arith.constant 0 : index
      %48 = vector.load %arg10[%c1_35, %c0_36, %c0_37] : memref<2x128x64xf32, #tpu.memory_space<vmem>>, vector<1x128x64xf32>
      %49 = vector.shape_cast %48 : vector<1x128x64xf32> to vector<128x64xf32>
      %50 = vector.broadcast %47 : vector<128x1xf32> to vector<128x64xf32>
      %51 = arith.mulf %49, %50 : vector<128x64xf32>
      %52 = arith.truncf %51 : vector<128x64xf32> to vector<128x64xbf16>
      %53 = tpu.concatenate %44, %52 in 1 : vector<128x64xbf16>, vector<128x64xbf16> -> vector<128x128xbf16>
      %c0_38 = arith.constant 0 : index
      %c0_39 = arith.constant 0 : index
      %c0_40 = arith.constant 0 : index
      %54 = vector.load %arg7[%c0_38, %c0_39, %c0_40] : memref<1x128x128xbf16, #tpu.memory_space<vmem>>, vector<1x128x128xbf16>
      %55 = vector.shape_cast %54 : vector<1x128x128xbf16> to vector<128x128xbf16>
      %56 = vector.shape_cast %53 : vector<128x128xbf16> to vector<1x128x128xbf16>
      tpu.vector_store %arg7[%c0_38, %c0_39, %c0_40], %56 {strides = array<i32>} : memref<1x128x128xbf16, #tpu.memory_space<vmem>>, vector<1x128x128xbf16>,
    } else {
    }
    return
  }
  func.func @transform_0(%arg0: i32, %arg1: i32, %arg2: memref<3xi32, #tpu.memory_space<smem>>, %arg3: memref<3xi32, #tpu.memory_space<smem>>) -> (i32, i32, i32) {
    %0 = arith.index_cast %arg1 : i32 to index
    %1 = memref.load %arg2[%0] : memref<3xi32, #tpu.memory_space<smem>>
    %c0_i32 = arith.constant 0 : i32
    %c0_i32_0 = arith.constant 0 : i32
    return %arg0, %1, %c0_i32 : i32, i32, i32
  }
  func.func @transform_1(%arg0: i32, %arg1: i32, %arg2: memref<3xi32, #tpu.memory_space<smem>>, %arg3: memref<3xi32, #tpu.memory_space<smem>>) -> (i32, i32, i32) {
    %0 = arith.index_cast %arg1 : i32 to index
    %1 = memref.load %arg3[%0] : memref<3xi32, #tpu.memory_space<smem>>
    %c1_i32 = arith.constant 1 : i32
    %c0_i32 = arith.constant 0 : i32
    return %arg0, %1, %c1_i32 : i32, i32, i32
  }
  func.func @transform_2(%arg0: i32, %arg1: i32, %arg2: memref<3xi32, #tpu.memory_space<smem>>, %arg3: memref<3xi32, #tpu.memory_space<smem>>) -> (i32, i32, i32) {
    %0 = arith.index_cast %arg1 : i32 to index
    %1 = memref.load %arg3[%0] : memref<3xi32, #tpu.memory_space<smem>>
    %c2_i32 = arith.constant 2 : i32
    %c0_i32 = arith.constant 0 : i32
    return %arg0, %1, %c2_i32 : i32, i32, i32
  }
  func.func @transform_3(%arg0: i32, %arg1: i32, %arg2: memref<3xi32, #tpu.memory_space<smem>>, %arg3: memref<3xi32, #tpu.memory_space<smem>>) -> (i32, i32, i32) {
    %0 = arith.index_cast %arg1 : i32 to index
    %1 = memref.load %arg2[%0] : memref<3xi32, #tpu.memory_space<smem>>
    %c0_i32 = arith.constant 0 : i32
    %c0_i32_0 = arith.constant 0 : i32
    return %arg0, %1, %c0_i32 : i32, i32, i32
  }
}

</mosaic_0001>

<llo_original>
// kernel: causal_self_attention.5
$region0: #{causal_self_attention.5}
  #allocation0 [shape = 'u32[]', space=smem, size = 0x4, offset = 0x4, fixed_abs, tag = 'smem constant byte address 0x4 - core index']
  #allocation1 [shape = 'u32[72,128]{1,0:T(1,128)}', space=vmem, size = 0x9000, scoped, tag = 'internal scratch']
  %s0 = inlined_call_operand.vmem [shape: bf16[512,128], index: 0, kind: input, shape index: {}]
  %s1 = inlined_call_operand.vmem [shape: bf16[128,128], index: 1, kind: input, shape index: {}]
  %s2 = inlined_call_operand.vmem [shape: f32[1,128], index: 2, kind: input, shape index: {}]
  %s3 = inlined_call_operand.vmem [shape: bf16[512,128], index: 3, kind: output, shape index: {}]
  %s4 = sld [smem:[#allocation0]]
  $region22: #{causal_self_attention.5} parent=0
    _
  %s6 = ssub.s32 1, %s4
  %s7 = scalar_select 0, %s6, %s4
  // Predicated region
  $region2: #{causal_self_attention.5} parent=0 // pred_check
    _
  $region3: #{causal_self_attention.5} parent=0 // pred_check_branch
    %9 = sbr.rel (0) target = $region5
  $region4: #{causal_self_attention.5} parent=0 // pred_region
    _
  $region5: #{causal_self_attention.5} parent=0 // pred_fallthru
    _
  // Predicated region
  $region6: #{causal_self_attention.5} parent=0 // pred_check
    _
  $region7: #{causal_self_attention.5} parent=0 // pred_check_branch
    %11 = sbr.rel (0) target = $region9
  $region8: #{causal_self_attention.5} parent=0 // pred_region
    _
  $region9: #{causal_self_attention.5} parent=0 // pred_fallthru
    _
  // Predicated region
  $region10: #{causal_self_attention.5} parent=0 // pred_check
    _
  $region11: #{causal_self_attention.5} parent=0 // pred_check_branch
    %13 = sbr.rel (0) target = $region13
  $region12: #{causal_self_attention.5} parent=0 // pred_region
    _
  $region13: #{causal_self_attention.5} parent=0 // pred_fallthru
    _
  %v14 = vld [vmem:[%s0] sm:$0xf]
  %v15 = vld [vmem:[%s0 + $0x4] sm:$0xf]
  %v16 = vld [vmem:[%s0 + $0x8] sm:$0xf]
  %v17 = vld [vmem:[%s0 + $0xc] sm:$0xf]
  %v18 = vld [vmem:[%s0 + $0x10] sm:$0xf]
  %v19 = vld [vmem:[%s0 + $0x14] sm:$0xf]
  %v20 = vld [vmem:[%s0 + $0x18] sm:$0xf]
  %v21 = vld [vmem:[%s0 + $0x1c] sm:$0xf]
  %v22 = vld [vmem:[%s0 + $0x20] sm:$0xf]
  %v23 = vld [vmem:[%s0 + $0x24] sm:$0xf]
  %v24 = vld [vmem:[%s0 + $0x28] sm:$0xf]
  %v25 = vld [vmem:[%s0 + $0x2c] sm:$0xf]
  %v26 = vld [vmem:[%s0 + $0x30] sm:$0xf]
  %v27 = vld [vmem:[%s0 + $0x34] sm:$0xf]
  %v28 = vld [vmem:[%s0 + $0x38] sm:$0xf]
  %v29 = vld [vmem:[%s0 + $0x3c] sm:$0xf]
  %v30 = vld [vmem:[%s0 + $0x40] sm:$0xf]
  %v31 = vld [vmem:[%s0 + $0x44] sm:$0xf]
  %v32 = vld [vmem:[%s0 + $0x48] sm:$0xf]
  %v33 = vld [vmem:[%s0 + $0x4c] sm:$0xf]
  %v34 = vld [vmem:[%s0 + $0x50] sm:$0xf]
  %v35 = vld [vmem:[%s0 + $0x54] sm:$0xf]
  %v36 = vld [vmem:[%s0 + $0x58] sm:$0xf]
  %v37 = vld [vmem:[%s0 + $0x5c] sm:$0xf]
  %v38 = vld [vmem:[%s0 + $0x60] sm:$0xf]
  %v39 = vld [vmem:[%s0 + $0x64] sm:$0xf]
  %v40 = vld [vmem:[%s0 + $0x68] sm:$0xf]
  %v41 = vld [vmem:[%s0 + $0x6c] sm:$0xf]
  %v42 = vld [vmem:[%s0 + $0x70] sm:$0xf]
  %v43 = vld [vmem:[%s0 + $0x74] sm:$0xf]
  %v44 = vld [vmem:[%s0 + $0x78] sm:$0xf]
  %v45 = vld [vmem:[%s0 + $0x7c] sm:$0xf]
  %v46 = vld [vmem:[%s0 + $0x80] sm:$0xf]
  %v47 = vld [vmem:[%s0 + $0x84] sm:$0xf]
  %v48 = vld [vmem:[%s0 + $0x88] sm:$0xf]
  %v49 = vld [vmem:[%s0 + $0x8c] sm:$0xf]
  %v50 = vld [vmem:[%s0 + $0x90] sm:$0xf]
  %v51 = vld [vmem:[%s0 + $0x94] sm:$0xf]
  %v52 = vld [vmem:[%s0 + $0x98] sm:$0xf]
  %v53 = vld [vmem:[%s0 + $0x9c] sm:$0xf]
  %v54 = vld [vmem:[%s0 + $0xa0] sm:$0xf]
  %v55 = vld [vmem:[%s0 + $0xa4] sm:$0xf]
  %v56 = vld [vmem:[%s0 + $0xa8] sm:$0xf]
  %v57 = vld [vmem:[%s0 + $0xac] sm:$0xf]
  %v58 = vld [vmem:[%s0 + $0xb0] sm:$0xf]
  %v59 = vld [vmem:[%s0 + $0xb4] sm:$0xf]
  %v60 = vld [vmem:[%s0 + $0xb8] sm:$0xf]
  %v61 = vld [vmem:[%s0 + $0xbc] sm:$0xf]
  %v62 = vld [vmem:[%s0 + $0xc0] sm:$0xf]
  %v63 = vld [vmem:[%s0 + $0xc4] sm:$0xf]
  %v64 = vld [vmem:[%s0 + $0xc8] sm:$0xf]
  %v65 = vld [vmem:[%s0 + $0xcc] sm:$0xf]
  %v66 = vld [vmem:[%s0 + $0xd0] sm:$0xf]
  %v67 = vld [vmem:[%s0 + $0xd4] sm:$0xf]
  %v68 = vld [vmem:[%s0 + $0xd8] sm:$0xf]
  %v69 = vld [vmem:[%s0 + $0xdc] sm:$0xf]
  %v70 = vld [vmem:[%s0 + $0xe0] sm:$0xf]
  %v71 = vld [vmem:[%s0 + $0xe4] sm:$0xf]
  %v72 = vld [vmem:[%s0 + $0xe8] sm:$0xf]
  %v73 = vld [vmem:[%s0 + $0xec] sm:$0xf]
  %v74 = vld [vmem:[%s0 + $0xf0] sm:$0xf]
  %v75 = vld [vmem:[%s0 + $0xf4] sm:$0xf]
  %v76 = vld [vmem:[%s0 + $0xf8] sm:$0xf]
  %v77 = vld [vmem:[%s0 + $0xfc] sm:$0xf]
  %v78 = vld [vmem:[%s1] sm:$0xf]
  %v79 = vld [vmem:[%s1 + $0x4] sm:$0xf]
  %v80 = vld [vmem:[%s1 + $0x8] sm:$0xf]
  %v81 = vld [vmem:[%s1 + $0xc] sm:$0xf]
  %v82 = vld [vmem:[%s1 + $0x10] sm:$0xf]
  %v83 = vld [vmem:[%s1 + $0x14] sm:$0xf]
  %v84 = vld [vmem:[%s1 + $0x18] sm:$0xf]
  %v85 = vld [vmem:[%s1 + $0x1c] sm:$0xf]
  %v86 = vld [vmem:[%s1 + $0x20] sm:$0xf]
  %v87 = vld [vmem:[%s1 + $0x24] sm:$0xf]
  %v88 = vld [vmem:[%s1 + $0x28] sm:$0xf]
  %v89 = vld [vmem:[%s1 + $0x2c] sm:$0xf]
  %v90 = vld [vmem:[%s1 + $0x30] sm:$0xf]
  %v91 = vld [vmem:[%s1 + $0x34] sm:$0xf]
  %v92 = vld [vmem:[%s1 + $0x38] sm:$0xf]
  %v93 = vld [vmem:[%s1 + $0x3c] sm:$0xf]
  %v94 = vld [vmem:[%s2] sm:$0x1]
  %v96 = vperm.slane %v94, 0
  %v162 = vunpack.c.l.b16 %v14
  %v163 = vunpack.c.l.b16 %v15
  %v164 = vunpack.c.l.b16 %v16
  %v165 = vunpack.c.l.b16 %v17
  %v166 = vunpack.c.l.b16 %v18
  %v167 = vunpack.c.l.b16 %v19
  %v168 = vunpack.c.l.b16 %v20
  %v169 = vunpack.c.l.b16 %v21
  %v170 = vunpack.c.l.b16 %v22
  %v171 = vunpack.c.l.b16 %v23
  %v172 = vunpack.c.l.b16 %v24
  %v173 = vunpack.c.l.b16 %v25
  %v174 = vunpack.c.l.b16 %v26
  %v175 = vunpack.c.l.b16 %v27
  %v176 = vunpack.c.l.b16 %v28
  %v177 = vunpack.c.l.b16 %v29
  %v178 = vunpack.c.l.b16 %v30
  %v179 = vunpack.c.l.b16 %v31
  %v180 = vunpack.c.l.b16 %v32
  %v181 = vunpack.c.l.b16 %v33
  %v182 = vunpack.c.l.b16 %v34
  %v183 = vunpack.c.l.b16 %v35
  %v184 = vunpack.c.l.b16 %v36
  %v185 = vunpack.c.l.b16 %v37
  %v186 = vunpack.c.l.b16 %v38
  %v187 = vunpack.c.l.b16 %v39
  %v188 = vunpack.c.l.b16 %v40
  %v189 = vunpack.c.l.b16 %v41
  %v190 = vunpack.c.l.b16 %v42
  %v191 = vunpack.c.l.b16 %v43
  %v192 = vunpack.c.l.b16 %v44
  %v193 = vunpack.c.l.b16 %v45
  %v194 = vunpack.c.l.b16 %v46
  %v195 = vunpack.c.l.b16 %v47
  %v196 = vunpack.c.l.b16 %v48
  %v197 = vunpack.c.l.b16 %v49
  %v198 = vunpack.c.l.b16 %v50
  %v199 = vunpack.c.l.b16 %v51
  %v200 = vunpack.c.l.b16 %v52
  %v201 = vunpack.c.l.b16 %v53
  %v202 = vunpack.c.l.b16 %v54
  %v203 = vunpack.c.l.b16 %v55
  %v204 = vunpack.c.l.b16 %v56
  %v205 = vunpack.c.l.b16 %v57
  %v206 = vunpack.c.l.b16 %v58
  %v207 = vunpack.c.l.b16 %v59
  %v208 = vunpack.c.l.b16 %v60
  %v209 = vunpack.c.l.b16 %v61
  %v210 = vunpack.c.l.b16 %v62
  %v211 = vunpack.c.l.b16 %v63
  %v212 = vunpack.c.l.b16 %v64
  %v213 = vunpack.c.l.b16 %v65
  %v214 = vunpack.c.l.b16 %v66
  %v215 = vunpack.c.l.b16 %v67
  %v216 = vunpack.c.l.b16 %v68
  %v217 = vunpack.c.l.b16 %v69
  %v218 = vunpack.c.l.b16 %v70
  %v219 = vunpack.c.l.b16 %v71
  %v220 = vunpack.c.l.b16 %v72
  %v221 = vunpack.c.l.b16 %v73
  %v222 = vunpack.c.l.b16 %v74
  %v223 = vunpack.c.l.b16 %v75
  %v224 = vunpack.c.l.b16 %v76
  %v225 = vunpack.c.l.b16 %v77
  %v226 = vpack.c.b16 %v163, %v162
  %v227 = vpack.c.b16 %v165, %v164
  %v228 = vpack.c.b16 %v167, %v166
  %v229 = vpack.c.b16 %v169, %v168
  %v230 = vpack.c.b16 %v171, %v170
  %v231 = vpack.c.b16 %v173, %v172
  %v232 = vpack.c.b16 %v175, %v174
  %v233 = vpack.c.b16 %v177, %v176
  %v234 = vpack.c.b16 %v179, %v178
  %v235 = vpack.c.b16 %v181, %v180
  %v236 = vpack.c.b16 %v183, %v182
  %v237 = vpack.c.b16 %v185, %v184
  %v238 = vpack.c.b16 %v187, %v186
  %v239 = vpack.c.b16 %v189, %v188
  %v240 = vpack.c.b16 %v191, %v190
  %v241 = vpack.c.b16 %v193, %v192
  %v242 = vpack.c.b16 %v195, %v194
  %v243 = vpack.c.b16 %v197, %v196
  %v244 = vpack.c.b16 %v199, %v198
  %v245 = vpack.c.b16 %v201, %v200
  %v246 = vpack.c.b16 %v203, %v202
  %v247 = vpack.c.b16 %v205, %v204
  %v248 = vpack.c.b16 %v207, %v206
  %v249 = vpack.c.b16 %v209, %v208
  %v250 = vpack.c.b16 %v211, %v210
  %v251 = vpack.c.b16 %v213, %v212
  %v252 = vpack.c.b16 %v215, %v214
  %v253 = vpack.c.b16 %v217, %v216
  %v254 = vpack.c.b16 %v219, %v218
  %v255 = vpack.c.b16 %v221, %v220
  %v256 = vpack.c.b16 %v223, %v222
  %v257 = vpack.c.b16 %v225, %v224
  %v306 = vunpack.c.l.b16 %v78
  %v307 = vunpack.c.l.b16 %v79
  %v308 = vunpack.c.l.b16 %v80
  %v309 = vunpack.c.l.b16 %v81
  %v310 = vunpack.c.l.b16 %v82
  %v311 = vunpack.c.l.b16 %v83
  %v312 = vunpack.c.l.b16 %v84
  %v313 = vunpack.c.l.b16 %v85
  %v314 = vunpack.c.l.b16 %v86
  %v315 = vunpack.c.l.b16 %v87
  %v316 = vunpack.c.l.b16 %v88
  %v317 = vunpack.c.l.b16 %v89
  %v318 = vunpack.c.l.b16 %v90
  %v319 = vunpack.c.l.b16 %v91
  %v320 = vunpack.c.l.b16 %v92
  %v321 = vunpack.c.l.b16 %v93
  %v322 = vpack.c.b16 %v307, %v306
  %v323 = vpack.c.b16 %v309, %v308
  %v324 = vpack.c.b16 %v311, %v310
  %v325 = vpack.c.b16 %v313, %v312
  %v326 = vpack.c.b16 %v315, %v314
  %v327 = vpack.c.b16 %v317, %v316
  %v328 = vpack.c.b16 %v319, %v318
  %v329 = vpack.c.b16 %v321, %v320
  %338 = vmatpush.bf16.msra.mxu0 %v329
  %339 = vmatpush.bf16.msra.mxu0 %v328
  %340 = vmatpush.bf16.msra.mxu0 %v327
  %341 = vmatpush.bf16.msra.mxu0 %v326
  %342 = vmatpush.bf16.msra.mxu0 %v325
  %343 = vmatpush.bf16.msra.mxu0 %v324
  %344 = vmatpush.bf16.msra.mxu0 %v323
  %345 = vmatpush.bf16.msra.mxu0 %v322
  %346 = vmatmul.bf16.gmra.mxu0 %v226
  %v347 = vpop.f32.mrf.mxu0
  %v348 = vadd.f32 %v96, %v347
  %v349 = vpop.f32.mrf.mxu0
  %v350 = vadd.f32 %v96, %v349
  %351 = vmatmul.bf16.gmra.mxu0 %v227
  %v352 = vpop.f32.mrf.mxu0
  %v353 = vadd.f32 %v96, %v352
  %v354 = vpop.f32.mrf.mxu0
  %v355 = vadd.f32 %v96, %v354
  %356 = vmatmul.bf16.gmra.mxu0 %v228
  %v357 = vpop.f32.mrf.mxu0
  %v358 = vadd.f32 %v96, %v357
  %v359 = vpop.f32.mrf.mxu0
  %v360 = vadd.f32 %v96, %v359
  %361 = vmatmul.bf16.gmra.mxu0 %v229
  %v362 = vpop.f32.mrf.mxu0
  %v363 = vadd.f32 %v96, %v362
  %v364 = vpop.f32.mrf.mxu0
  %v365 = vadd.f32 %v96, %v364
  %366 = vmatmul.bf16.gmra.mxu0 %v230
  %v367 = vpop.f32.mrf.mxu0
  %v368 = vadd.f32 %v96, %v367
  %v369 = vpop.f32.mrf.mxu0
  %v370 = vadd.f32 %v96, %v369
  %371 = vmatmul.bf16.gmra.mxu0 %v231
  %v372 = vpop.f32.mrf.mxu0
  %v373 = vadd.f32 %v96, %v372
  %v374 = vpop.f32.mrf.mxu0
  %v375 = vadd.f32 %v96, %v374
  %376 = vmatmul.bf16.gmra.mxu0 %v232
  %v377 = vpop.f32.mrf.mxu0
  %v378 = vadd.f32 %v96, %v377
  %v379 = vpop.f32.mrf.mxu0
  %v380 = vadd.f32 %v96, %v379
  %381 = vmatmul.bf16.gmra.mxu0 %v233
  %v382 = vpop.f32.mrf.mxu0
  %v383 = vadd.f32 %v96, %v382
  %v384 = vpop.f32.mrf.mxu0
  %v385 = vadd.f32 %v96, %v384
  %386 = vmatmul.bf16.gmra.mxu0 %v234
  %v387 = vpop.f32.mrf.mxu0
  %v388 = vadd.f32 %v96, %v387
  %v389 = vpop.f32.mrf.mxu0
  %v390 = vadd.f32 %v96, %v389
  %391 = vmatmul.bf16.gmra.mxu0 %v235
  %v392 = vpop.f32.mrf.mxu0
  %v393 = vadd.f32 %v96, %v392
  %v394 = vpop.f32.mrf.mxu0
  %v395 = vadd.f32 %v96, %v394
  %396 = vmatmul.bf16.gmra.mxu0 %v236
  %v397 = vpop.f32.mrf.mxu0
  %v398 = vadd.f32 %v96, %v397
  %v399 = vpop.f32.mrf.mxu0
  %v400 = vadd.f32 %v96, %v399
  %401 = vmatmul.bf16.gmra.mxu0 %v237
  %v402 = vpop.f32.mrf.mxu0
  %v403 = vadd.f32 %v96, %v402
  %v404 = vpop.f32.mrf.mxu0
  %v405 = vadd.f32 %v96, %v404
  %406 = vmatmul.bf16.gmra.mxu0 %v238
  %v407 = vpop.f32.mrf.mxu0
  %v408 = vadd.f32 %v96, %v407
  %v409 = vpop.f32.mrf.mxu0
  %v410 = vadd.f32 %v96, %v409
  %411 = vmatmul.bf16.gmra.mxu0 %v239
  %v412 = vpop.f32.mrf.mxu0
  %v413 = vadd.f32 %v96, %v412
  %v414 = vpop.f32.mrf.mxu0
  %v415 = vadd.f32 %v96, %v414
  %416 = vmatmul.bf16.gmra.mxu0 %v240
  %v417 = vpop.f32.mrf.mxu0
  %v418 = vadd.f32 %v96, %v417
  %v419 = vpop.f32.mrf.mxu0
  %v420 = vadd.f32 %v96, %v419
  %421 = vmatmul.bf16.gmra.mxu0 %v241
  %v422 = vpop.f32.mrf.mxu0
  %v423 = vadd.f32 %v96, %v422
  %v424 = vpop.f32.mrf.mxu0
  %v425 = vadd.f32 %v96, %v424
  %426 = vmatmul.bf16.gmra.mxu0 %v242
  %v427 = vpop.f32.mrf.mxu0
  %v428 = vadd.f32 %v96, %v427
  %v429 = vpop.f32.mrf.mxu0
  %v430 = vadd.f32 %v96, %v429
  %431 = vmatmul.bf16.gmra.mxu0 %v243
  %v432 = vpop.f32.mrf.mxu0
  %v433 = vadd.f32 %v96, %v432
  %v434 = vpop.f32.mrf.mxu0
  %v435 = vadd.f32 %v96, %v434
  %436 = vmatmul.bf16.gmra.mxu0 %v244
  %v437 = vpop.f32.mrf.mxu0
  %v438 = vadd.f32 %v96, %v437
  %v439 = vpop.f32.mrf.mxu0
  %v440 = vadd.f32 %v96, %v439
  %441 = vmatmul.bf16.gmra.mxu0 %v245
  %v442 = vpop.f32.mrf.mxu0
  %v443 = vadd.f32 %v96, %v442
  %v444 = vpop.f32.mrf.mxu0
  %v445 = vadd.f32 %v96, %v444
  %446 = vmatmul.bf16.gmra.mxu0 %v246
  %v447 = vpop.f32.mrf.mxu0
  %v448 = vadd.f32 %v96, %v447
  %v449 = vpop.f32.mrf.mxu0
  %v450 = vadd.f32 %v96, %v449
  %451 = vmatmul.bf16.gmra.mxu0 %v247
  %v452 = vpop.f32.mrf.mxu0
  %v453 = vadd.f32 %v96, %v452
  %v454 = vpop.f32.mrf.mxu0
  %v455 = vadd.f32 %v96, %v454
  %456 = vmatmul.bf16.gmra.mxu0 %v248
  %v457 = vpop.f32.mrf.mxu0
  %v458 = vadd.f32 %v96, %v457
  %v459 = vpop.f32.mrf.mxu0
  %v460 = vadd.f32 %v96, %v459
  %461 = vmatmul.bf16.gmra.mxu0 %v249
  %v462 = vpop.f32.mrf.mxu0
  %v463 = vadd.f32 %v96, %v462
  %v464 = vpop.f32.mrf.mxu0
  %v465 = vadd.f32 %v96, %v464
  %466 = vmatmul.bf16.gmra.mxu0 %v250
  %v467 = vpop.f32.mrf.mxu0
  %v468 = vadd.f32 %v96, %v467
  %v469 = vpop.f32.mrf.mxu0
  %v470 = vadd.f32 %v96, %v469
  %471 = vmatmul.bf16.gmra.mxu0 %v251
  %v472 = vpop.f32.mrf.mxu0
  %v473 = vadd.f32 %v96, %v472
  %v474 = vpop.f32.mrf.mxu0
  %v475 = vadd.f32 %v96, %v474
  %476 = vmatmul.bf16.gmra.mxu0 %v252
  %v477 = vpop.f32.mrf.mxu0
  %v478 = vadd.f32 %v96, %v477
  %v479 = vpop.f32.mrf.mxu0
  %v480 = vadd.f32 %v96, %v479
  %481 = vmatmul.bf16.gmra.mxu0 %v253
  %v482 = vpop.f32.mrf.mxu0
  %v483 = vadd.f32 %v96, %v482
  %v484 = vpop.f32.mrf.mxu0
  %v485 = vadd.f32 %v96, %v484
  %486 = vmatmul.bf16.gmra.mxu0 %v254
  %v487 = vpop.f32.mrf.mxu0
  %v488 = vadd.f32 %v96, %v487
  %v489 = vpop.f32.mrf.mxu0
  %v490 = vadd.f32 %v96, %v489
  %491 = vmatmul.bf16.gmra.mxu0 %v255
  %v492 = vpop.f32.mrf.mxu0
  %v493 = vadd.f32 %v96, %v492
  %v494 = vpop.f32.mrf.mxu0
  %v495 = vadd.f32 %v96, %v494
  %496 = vmatmul.bf16.gmra.mxu0 %v256
  %v497 = vpop.f32.mrf.mxu0
  %v498 = vadd.f32 %v96, %v497
  %v499 = vpop.f32.mrf.mxu0
  %v500 = vadd.f32 %v96, %v499
  %501 = vmatmul.bf16.gmra.mxu0 %v257
  %v502 = vpop.f32.mrf.mxu0
  %v503 = vadd.f32 %v96, %v502
  %v504 = vpop.f32.mrf.mxu0
  %v505 = vadd.f32 %v96, %v504
  %506 = vdwg.mxu0
  %v507 = vpack.c.bf16 %v348, %v348
  %v508 = vpack.c.bf16 %v350, %v350
  %v509 = vpack.c.bf16 %v353, %v353
  %v510 = vpack.c.bf16 %v355, %v355
  %v511 = vpack.c.bf16 %v358, %v358
  %v512 = vpack.c.bf16 %v360, %v360
  %v513 = vpack.c.bf16 %v363, %v363
  %v514 = vpack.c.bf16 %v365, %v365
  %v515 = vpack.c.bf16 %v368, %v368
  %v516 = vpack.c.bf16 %v370, %v370
  %v517 = vpack.c.bf16 %v373, %v373
  %v518 = vpack.c.bf16 %v375, %v375
  %v519 = vpack.c.bf16 %v378, %v378
  %v520 = vpack.c.bf16 %v380, %v380
  %v521 = vpack.c.bf16 %v383, %v383
  %v522 = vpack.c.bf16 %v385, %v385
  %v523 = vpack.c.bf16 %v388, %v388
  %v524 = vpack.c.bf16 %v390, %v390
  %v525 = vpack.c.bf16 %v393, %v393
  %v526 = vpack.c.bf16 %v395, %v395
  %v527 = vpack.c.bf16 %v398, %v398
  %v528 = vpack.c.bf16 %v400, %v400
  %v529 = vpack.c.bf16 %v403, %v403
  %v530 = vpack.c.bf16 %v405, %v405
  %v531 = vpack.c.bf16 %v408, %v408
  %v532 = vpack.c.bf16 %v410, %v410
  %v533 = vpack.c.bf16 %v413, %v413
  %v534 = vpack.c.bf16 %v415, %v415
  %v535 = vpack.c.bf16 %v418, %v418
  %v536 = vpack.c.bf16 %v420, %v420
  %v537 = vpack.c.bf16 %v423, %v423
  %v538 = vpack.c.bf16 %v425, %v425
  %v539 = vpack.c.bf16 %v428, %v428
  %v540 = vpack.c.bf16 %v430, %v430
  %v541 = vpack.c.bf16 %v433, %v433
  %v542 = vpack.c.bf16 %v435, %v435
  %v543 = vpack.c.bf16 %v438, %v438
  %v544 = vpack.c.bf16 %v440, %v440
  %v545 = vpack.c.bf16 %v443, %v443
  %v546 = vpack.c.bf16 %v445, %v445
  %v547 = vpack.c.bf16 %v448, %v448
  %v548 = vpack.c.bf16 %v450, %v450
  %v549 = vpack.c.bf16 %v453, %v453
  %v550 = vpack.c.bf16 %v455, %v455
  %v551 = vpack.c.bf16 %v458, %v458
  %v552 = vpack.c.bf16 %v460, %v460
  %v553 = vpack.c.bf16 %v463, %v463
  %v554 = vpack.c.bf16 %v465, %v465
  %v555 = vpack.c.bf16 %v468, %v468
  %v556 = vpack.c.bf16 %v470, %v470
  %v557 = vpack.c.bf16 %v473, %v473
  %v558 = vpack.c.bf16 %v475, %v475
  %v559 = vpack.c.bf16 %v478, %v478
  %v560 = vpack.c.bf16 %v480, %v480
  %v561 = vpack.c.bf16 %v483, %v483
  %v562 = vpack.c.bf16 %v485, %v485
  %v563 = vpack.c.bf16 %v488, %v488
  %v564 = vpack.c.bf16 %v490, %v490
  %v565 = vpack.c.bf16 %v493, %v493
  %v566 = vpack.c.bf16 %v495, %v495
  %v567 = vpack.c.bf16 %v498, %v498
  %v568 = vpack.c.bf16 %v500, %v500
  %v569 = vpack.c.bf16 %v503, %v503
  %v570 = vpack.c.bf16 %v505, %v505
  %571 = vst [vmem:[%s3] sm:$0xf] %v507
  %572 = vst [vmem:[%s3 + $0x4] sm:$0xf] %v508
  %573 = vst [vmem:[%s3 + $0x8] sm:$0xf] %v509
  %574 = vst [vmem:[%s3 + $0xc] sm:$0xf] %v510
  %575 = vst [vmem:[%s3 + $0x10] sm:$0xf] %v511
  %576 = vst [vmem:[%s3 + $0x14] sm:$0xf] %v512
  %577 = vst [vmem:[%s3 + $0x18] sm:$0xf] %v513
  %578 = vst [vmem:[%s3 + $0x1c] sm:$0xf] %v514
  %579 = vst [vmem:[%s3 + $0x20] sm:$0xf] %v515
  %580 = vst [vmem:[%s3 + $0x24] sm:$0xf] %v516
  %581 = vst [vmem:[%s3 + $0x28] sm:$0xf] %v517
  %582 = vst [vmem:[%s3 + $0x2c] sm:$0xf] %v518
  %583 = vst [vmem:[%s3 + $0x30] sm:$0xf] %v519
  %584 = vst [vmem:[%s3 + $0x34] sm:$0xf] %v520
  %585 = vst [vmem:[%s3 + $0x38] sm:$0xf] %v521
  %586 = vst [vmem:[%s3 + $0x3c] sm:$0xf] %v522
  %587 = vst [vmem:[%s3 + $0x40] sm:$0xf] %v523
  %588 = vst [vmem:[%s3 + $0x44] sm:$0xf] %v524
  %589 = vst [vmem:[%s3 + $0x48] sm:$0xf] %v525
  %590 = vst [vmem:[%s3 + $0x4c] sm:$0xf] %v526
  %591 = vst [vmem:[%s3 + $0x50] sm:$0xf] %v527
  %592 = vst [vmem:[%s3 + $0x54] sm:$0xf] %v528
  %593 = vst [vmem:[%s3 + $0x58] sm:$0xf] %v529
  %594 = vst [vmem:[%s3 + $0x5c] sm:$0xf] %v530
  %595 = vst [vmem:[%s3 + $0x60] sm:$0xf] %v531
  %596 = vst [vmem:[%s3 + $0x64] sm:$0xf] %v532
  %597 = vst [vmem:[%s3 + $0x68] sm:$0xf] %v533
  %598 = vst [vmem:[%s3 + $0x6c] sm:$0xf] %v534
  %599 = vst [vmem:[%s3 + $0x70] sm:$0xf] %v535
  %600 = vst [vmem:[%s3 + $0x74] sm:$0xf] %v536
  %601 = vst [vmem:[%s3 + $0x78] sm:$0xf] %v537
  %602 = vst [vmem:[%s3 + $0x7c] sm:$0xf] %v538
  %603 = vst [vmem:[%s3 + $0x80] sm:$0xf] %v539
  %604 = vst [vmem:[%s3 + $0x84] sm:$0xf] %v540
  %605 = vst [vmem:[%s3 + $0x88] sm:$0xf] %v541
  %606 = vst [vmem:[%s3 + $0x8c] sm:$0xf] %v542
  %607 = vst [vmem:[%s3 + $0x90] sm:$0xf] %v543
  %608 = vst [vmem:[%s3 + $0x94] sm:$0xf] %v544
  %609 = vst [vmem:[%s3 + $0x98] sm:$0xf] %v545
  %610 = vst [vmem:[%s3 + $0x9c] sm:$0xf] %v546
  %611 = vst [vmem:[%s3 + $0xa0] sm:$0xf] %v547
  %612 = vst [vmem:[%s3 + $0xa4] sm:$0xf] %v548
  %613 = vst [vmem:[%s3 + $0xa8] sm:$0xf] %v549
  %614 = vst [vmem:[%s3 + $0xac] sm:$0xf] %v550
  %615 = vst [vmem:[%s3 + $0xb0] sm:$0xf] %v551
  %616 = vst [vmem:[%s3 + $0xb4] sm:$0xf] %v552
  %617 = vst [vmem:[%s3 + $0xb8] sm:$0xf] %v553
  %618 = vst [vmem:[%s3 + $0xbc] sm:$0xf] %v554
  %619 = vst [vmem:[%s3 + $0xc0] sm:$0xf] %v555
  %620 = vst [vmem:[%s3 + $0xc4] sm:$0xf] %v556
  %621 = vst [vmem:[%s3 + $0xc8] sm:$0xf] %v557
  %622 = vst [vmem:[%s3 + $0xcc] sm:$0xf] %v558
  %623 = vst [vmem:[%s3 + $0xd0] sm:$0xf] %v559
  %624 = vst [vmem:[%s3 + $0xd4] sm:$0xf] %v560
  %625 = vst [vmem:[%s3 + $0xd8] sm:$0xf] %v561
  %626 = vst [vmem:[%s3 + $0xdc] sm:$0xf] %v562
  %627 = vst [vmem:[%s3 + $0xe0] sm:$0xf] %v563
  %628 = vst [vmem:[%s3 + $0xe4] sm:$0xf] %v564
  %629 = vst [vmem:[%s3 + $0xe8] sm:$0xf] %v565
  %630 = vst [vmem:[%s3 + $0xec] sm:$0xf] %v566
  %631 = vst [vmem:[%s3 + $0xf0] sm:$0xf] %v567
  %632 = vst [vmem:[%s3 + $0xf4] sm:$0xf] %v568
  %633 = vst [vmem:[%s3 + $0xf8] sm:$0xf] %v569
  %634 = vst [vmem:[%s3 + $0xfc] sm:$0xf] %v570
  // Predicated region
  $region14: #{causal_self_attention.5} parent=0 // pred_check
    _
  $region15: #{causal_self_attention.5} parent=0 // pred_check_branch
    %636 = sbr.rel (0) target = $region17
  $region16: #{causal_self_attention.5} parent=0 // pred_region
    _
  $region17: #{causal_self_attention.5} parent=0 // pred_fallthru
    _
  // Predicated region
  $region18: #{causal_self_attention.5} parent=0 // pred_check
    _
  $region19: #{causal_self_attention.5} parent=0 // pred_check_branch
    %638 = sbr.rel (0) target = $region21
  $region20: #{causal_self_attention.5} parent=0 // pred_region
    _
  $region21: #{causal_self_attention.5} parent=0 // pred_fallthru
    _

// kernel: causal_self_attention.3
$region0: #{causal_self_attention.3}
  #allocation0 [shape = 'u32[]', space=smem, size = 0x4, offset = 0x4, fixed_abs, tag = 'smem constant byte address 0x4 - core index']
  #allocation1 [shape = 'u32[72,128]{1,0:T(1,128)}', space=vmem, size = 0x9000, scoped, tag = 'internal scratch']
  %s0 = inlined_call_operand.vmem [shape: bf16[512,128], index: 0, kind: input, shape index: {}]
  %s1 = inlined_call_operand.vmem [shape: bf16[128,384], index: 1, kind: input, shape index: {}]
  %s2 = inlined_call_operand.vmem [shape: f32[1,384], index: 2, kind: input, shape index: {}]
  %s3 = inlined_call_operand.vmem [shape: bf16[512,384], index: 3, kind: output, shape index: {}]
  %s4 = sld [smem:[#allocation0]]
  $region22: #{causal_self_attention.3} parent=0
    _
  %s6 = ssub.s32 1, %s4
  %s7 = scalar_select 0, %s6, %s4
  // Predicated region
  $region2: #{causal_self_attention.3} parent=0 // pred_check
    _
  $region3: #{causal_self_attention.3} parent=0 // pred_check_branch
    %9 = sbr.rel (0) target = $region5
  $region4: #{causal_self_attention.3} parent=0 // pred_region
    _
  $region5: #{causal_self_attention.3} parent=0 // pred_fallthru
    _
  // Predicated region
  $region6: #{causal_self_attention.3} parent=0 // pred_check
    _
  $region7: #{causal_self_attention.3} parent=0 // pred_check_branch
    %11 = sbr.rel (0) target = $region9
  $region8: #{causal_self_attention.3} parent=0 // pred_region
    _
  $region9: #{causal_self_attention.3} parent=0 // pred_fallthru
    _
  // Predicated region
  $region10: #{causal_self_attention.3} parent=0 // pred_check
    _
  $region11: #{causal_self_attention.3} parent=0 // pred_check_branch
    %13 = sbr.rel (0) target = $region13
  $region12: #{causal_self_attention.3} parent=0 // pred_region
    _
  $region13: #{causal_self_attention.3} parent=0 // pred_fallthru
    _
  %v14 = vld [vmem:[%s0] sm:$0xf]
  %v15 = vld [vmem:[%s0 + $0x4] sm:$0xf]
  %v16 = vld [vmem:[%s0 + $0x8] sm:$0xf]
  %v17 = vld [vmem:[%s0 + $0xc] sm:$0xf]
  %v18 = vld [vmem:[%s0 + $0x10] sm:$0xf]
  %v19 = vld [vmem:[%s0 + $0x14] sm:$0xf]
  %v20 = vld [vmem:[%s0 + $0x18] sm:$0xf]
  %v21 = vld [vmem:[%s0 + $0x1c] sm:$0xf]
  %v22 = vld [vmem:[%s0 + $0x20] sm:$0xf]
  %v23 = vld [vmem:[%s0 + $0x24] sm:$0xf]
  %v24 = vld [vmem:[%s0 + $0x28] sm:$0xf]
  %v25 = vld [vmem:[%s0 + $0x2c] sm:$0xf]
  %v26 = vld [vmem:[%s0 + $0x30] sm:$0xf]
  %v27 = vld [vmem:[%s0 + $0x34] sm:$0xf]
  %v28 = vld [vmem:[%s0 + $0x38] sm:$0xf]
  %v29 = vld [vmem:[%s0 + $0x3c] sm:$0xf]
  %v30 = vld [vmem:[%s0 + $0x40] sm:$0xf]
  %v31 = vld [vmem:[%s0 + $0x44] sm:$0xf]
  %v32 = vld [vmem:[%s0 + $0x48] sm:$0xf]
  %v33 = vld [vmem:[%s0 + $0x4c] sm:$0xf]
  %v34 = vld [vmem:[%s0 + $0x50] sm:$0xf]
  %v35 = vld [vmem:[%s0 + $0x54] sm:$0xf]
  %v36 = vld [vmem:[%s0 + $0x58] sm:$0xf]
  %v37 = vld [vmem:[%s0 + $0x5c] sm:$0xf]
  %v38 = vld [vmem:[%s0 + $0x60] sm:$0xf]
  %v39 = vld [vmem:[%s0 + $0x64] sm:$0xf]
  %v40 = vld [vmem:[%s0 + $0x68] sm:$0xf]
  %v41 = vld [vmem:[%s0 + $0x6c] sm:$0xf]
  %v42 = vld [vmem:[%s0 + $0x70] sm:$0xf]
  %v43 = vld [vmem:[%s0 + $0x74] sm:$0xf]
  %v44 = vld [vmem:[%s0 + $0x78] sm:$0xf]
  %v45 = vld [vmem:[%s0 + $0x7c] sm:$0xf]
  %v46 = vld [vmem:[%s0 + $0x80] sm:$0xf]
  %v47 = vld [vmem:[%s0 + $0x84] sm:$0xf]
  %v48 = vld [vmem:[%s0 + $0x88] sm:$0xf]
  %v49 = vld [vmem:[%s0 + $0x8c] sm:$0xf]
  %v50 = vld [vmem:[%s0 + $0x90] sm:$0xf]
  %v51 = vld [vmem:[%s0 + $0x94] sm:$0xf]
  %v52 = vld [vmem:[%s0 + $0x98] sm:$0xf]
  %v53 = vld [vmem:[%s0 + $0x9c] sm:$0xf]
  %v54 = vld [vmem:[%s0 + $0xa0] sm:$0xf]
  %v55 = vld [vmem:[%s0 + $0xa4] sm:$0xf]
  %v56 = vld [vmem:[%s0 + $0xa8] sm:$0xf]
  %v57 = vld [vmem:[%s0 + $0xac] sm:$0xf]
  %v58 = vld [vmem:[%s0 + $0xb0] sm:$0xf]
  %v59 = vld [vmem:[%s0 + $0xb4] sm:$0xf]
  %v60 = vld [vmem:[%s0 + $0xb8] sm:$0xf]
  %v61 = vld [vmem:[%s0 + $0xbc] sm:$0xf]
  %v62 = vld [vmem:[%s0 + $0xc0] sm:$0xf]
  %v63 = vld [vmem:[%s0 + $0xc4] sm:$0xf]
  %v64 = vld [vmem:[%s0 + $0xc8] sm:$0xf]
  %v65 = vld [vmem:[%s0 + $0xcc] sm:$0xf]
  %v66 = vld [vmem:[%s0 + $0xd0] sm:$0xf]
  %v67 = vld [vmem:[%s0 + $0xd4] sm:$0xf]
  %v68 = vld [vmem:[%s0 + $0xd8] sm:$0xf]
  %v69 = vld [vmem:[%s0 + $0xdc] sm:$0xf]
  %v70 = vld [vmem:[%s0 + $0xe0] sm:$0xf]
  %v71 = vld [vmem:[%s0 + $0xe4] sm:$0xf]
  %v72 = vld [vmem:[%s0 + $0xe8] sm:$0xf]
  %v73 = vld [vmem:[%s0 + $0xec] sm:$0xf]
  %v74 = vld [vmem:[%s0 + $0xf0] sm:$0xf]
  %v75 = vld [vmem:[%s0 + $0xf4] sm:$0xf]
  %v76 = vld [vmem:[%s0 + $0xf8] sm:$0xf]
  %v77 = vld [vmem:[%s0 + $0xfc] sm:$0xf]
  %v78 = vld [vmem:[%s1] sm:$0xff]
  %v79 = vld [vmem:[%s1 + $0x8] sm:$0xf]
  %v80 = vld [vmem:[%s1 + $0xc] sm:$0xff]
  %v81 = vld [vmem:[%s1 + $0x14] sm:$0xf]
  %v82 = vld [vmem:[%s1 + $0x18] sm:$0xff]
  %v83 = vld [vmem:[%s1 + $0x20] sm:$0xf]
  %v84 = vld [vmem:[%s1 + $0x24] sm:$0xff]
  %v85 = vld [vmem:[%s1 + $0x2c] sm:$0xf]
  %v86 = vld [vmem:[%s1 + $0x30] sm:$0xff]
  %v87 = vld [vmem:[%s1 + $0x38] sm:$0xf]
  %v88 = vld [vmem:[%s1 + $0x3c] sm:$0xff]
  %v89 = vld [vmem:[%s1 + $0x44] sm:$0xf]
  %v90 = vld [vmem:[%s1 + $0x48] sm:$0xff]
  %v91 = vld [vmem:[%s1 + $0x50] sm:$0xf]
  %v92 = vld [vmem:[%s1 + $0x54] sm:$0xff]
  %v93 = vld [vmem:[%s1 + $0x5c] sm:$0xf]
  %v94 = vld [vmem:[%s1 + $0x60] sm:$0xff]
  %v95 = vld [vmem:[%s1 + $0x68] sm:$0xf]
  %v96 = vld [vmem:[%s1 + $0x6c] sm:$0xff]
  %v97 = vld [vmem:[%s1 + $0x74] sm:$0xf]
  %v98 = vld [vmem:[%s1 + $0x78] sm:$0xff]
  %v99 = vld [vmem:[%s1 + $0x80] sm:$0xf]
  %v100 = vld [vmem:[%s1 + $0x84] sm:$0xff]
  %v101 = vld [vmem:[%s1 + $0x8c] sm:$0xf]
  %v102 = vld [vmem:[%s1 + $0x90] sm:$0xff]
  %v103 = vld [vmem:[%s1 + $0x98] sm:$0xf]
  %v104 = vld [vmem:[%s1 + $0x9c] sm:$0xff]
  %v105 = vld [vmem:[%s1 + $0xa4] sm:$0xf]
  %v106 = vld [vmem:[%s1 + $0xa8] sm:$0xff]
  %v107 = vld [vmem:[%s1 + $0xb0] sm:$0xf]
  %v108 = vld [vmem:[%s1 + $0xb4] sm:$0xff]
  %v109 = vld [vmem:[%s1 + $0xbc] sm:$0xf]
  %v110 = vld [vmem:[%s2] sm:$0x7]
  %v112 = vperm.slane %v110, 0
  %v113 = vperm.slane %v110, 1
  %v114 = vperm.slane %v110, 2
  %v182 = vunpack.c.l.b16 %v14
  %v183 = vunpack.c.l.b16 %v15
  %v184 = vunpack.c.l.b16 %v16
  %v185 = vunpack.c.l.b16 %v17
  %v186 = vunpack.c.l.b16 %v18
  %v187 = vunpack.c.l.b16 %v19
  %v188 = vunpack.c.l.b16 %v20
  %v189 = vunpack.c.l.b16 %v21
  %v190 = vunpack.c.l.b16 %v22
  %v191 = vunpack.c.l.b16 %v23
  %v192 = vunpack.c.l.b16 %v24
  %v193 = vunpack.c.l.b16 %v25
  %v194 = vunpack.c.l.b16 %v26
  %v195 = vunpack.c.l.b16 %v27
  %v196 = vunpack.c.l.b16 %v28
  %v197 = vunpack.c.l.b16 %v29
  %v198 = vunpack.c.l.b16 %v30
  %v199 = vunpack.c.l.b16 %v31
  %v200 = vunpack.c.l.b16 %v32
  %v201 = vunpack.c.l.b16 %v33
  %v202 = vunpack.c.l.b16 %v34
  %v203 = vunpack.c.l.b16 %v35
  %v204 = vunpack.c.l.b16 %v36
  %v205 = vunpack.c.l.b16 %v37
  %v206 = vunpack.c.l.b16 %v38
  %v207 = vunpack.c.l.b16 %v39
  %v208 = vunpack.c.l.b16 %v40
  %v209 = vunpack.c.l.b16 %v41
  %v210 = vunpack.c.l.b16 %v42
  %v211 = vunpack.c.l.b16 %v43
  %v212 = vunpack.c.l.b16 %v44
  %v213 = vunpack.c.l.b16 %v45
  %v214 = vunpack.c.l.b16 %v46
  %v215 = vunpack.c.l.b16 %v47
  %v216 = vunpack.c.l.b16 %v48
  %v217 = vunpack.c.l.b16 %v49
  %v218 = vunpack.c.l.b16 %v50
  %v219 = vunpack.c.l.b16 %v51
  %v220 = vunpack.c.l.b16 %v52
  %v221 = vunpack.c.l.b16 %v53
  %v222 = vunpack.c.l.b16 %v54
  %v223 = vunpack.c.l.b16 %v55
  %v224 = vunpack.c.l.b16 %v56
  %v225 = vunpack.c.l.b16 %v57
  %v226 = vunpack.c.l.b16 %v58
  %v227 = vunpack.c.l.b16 %v59
  %v228 = vunpack.c.l.b16 %v60
  %v229 = vunpack.c.l.b16 %v61
  %v230 = vunpack.c.l.b16 %v62
  %v231 = vunpack.c.l.b16 %v63
  %v232 = vunpack.c.l.b16 %v64
  %v233 = vunpack.c.l.b16 %v65
  %v234 = vunpack.c.l.b16 %v66
  %v235 = vunpack.c.l.b16 %v67
  %v236 = vunpack.c.l.b16 %v68
  %v237 = vunpack.c.l.b16 %v69
  %v238 = vunpack.c.l.b16 %v70
  %v239 = vunpack.c.l.b16 %v71
  %v240 = vunpack.c.l.b16 %v72
  %v241 = vunpack.c.l.b16 %v73
  %v242 = vunpack.c.l.b16 %v74
  %v243 = vunpack.c.l.b16 %v75
  %v244 = vunpack.c.l.b16 %v76
  %v245 = vunpack.c.l.b16 %v77
  %v246 = vpack.c.b16 %v183, %v182
  %v247 = vpack.c.b16 %v185, %v184
  %v248 = vpack.c.b16 %v187, %v186
  %v249 = vpack.c.b16 %v189, %v188
  %v250 = vpack.c.b16 %v191, %v190
  %v251 = vpack.c.b16 %v193, %v192
  %v252 = vpack.c.b16 %v195, %v194
  %v253 = vpack.c.b16 %v197, %v196
  %v254 = vpack.c.b16 %v199, %v198
  %v255 = vpack.c.b16 %v201, %v200
  %v256 = vpack.c.b16 %v203, %v202
  %v257 = vpack.c.b16 %v205, %v204
  %v258 = vpack.c.b16 %v207, %v206
  %v259 = vpack.c.b16 %v209, %v208
  %v260 = vpack.c.b16 %v211, %v210
  %v261 = vpack.c.b16 %v213, %v212
  %v262 = vpack.c.b16 %v215, %v214
  %v263 = vpack.c.b16 %v217, %v216
  %v264 = vpack.c.b16 %v219, %v218
  %v265 = vpack.c.b16 %v221, %v220
  %v266 = vpack.c.b16 %v223, %v222
  %v267 = vpack.c.b16 %v225, %v224
  %v268 = vpack.c.b16 %v227, %v226
  %v269 = vpack.c.b16 %v229, %v228
  %v270 = vpack.c.b16 %v231, %v230
  %v271 = vpack.c.b16 %v233, %v232
  %v272 = vpack.c.b16 %v235, %v234
  %v273 = vpack.c.b16 %v237, %v236
  %v274 = vpack.c.b16 %v239, %v238
  %v275 = vpack.c.b16 %v241, %v240
  %v276 = vpack.c.b16 %v243, %v242
  %v277 = vpack.c.b16 %v245, %v244
  %v342 = vunpack.c.l.b16 %v78
  %v343 = vunpack.c.h.b16 %v78
  %v344 = vunpack.c.l.b16 %v79
  %v345 = vunpack.c.l.b16 %v80
  %v346 = vunpack.c.h.b16 %v80
  %v347 = vunpack.c.l.b16 %v81
  %v348 = vunpack.c.l.b16 %v82
  %v349 = vunpack.c.h.b16 %v82
  %v350 = vunpack.c.l.b16 %v83
  %v351 = vunpack.c.l.b16 %v84
  %v352 = vunpack.c.h.b16 %v84
  %v353 = vunpack.c.l.b16 %v85
  %v354 = vunpack.c.l.b16 %v86
  %v355 = vunpack.c.h.b16 %v86
  %v356 = vunpack.c.l.b16 %v87
  %v357 = vunpack.c.l.b16 %v88
  %v358 = vunpack.c.h.b16 %v88
  %v359 = vunpack.c.l.b16 %v89
  %v360 = vunpack.c.l.b16 %v90
  %v361 = vunpack.c.h.b16 %v90
  %v362 = vunpack.c.l.b16 %v91
  %v363 = vunpack.c.l.b16 %v92
  %v364 = vunpack.c.h.b16 %v92
  %v365 = vunpack.c.l.b16 %v93
  %v366 = vunpack.c.l.b16 %v94
  %v367 = vunpack.c.h.b16 %v94
  %v368 = vunpack.c.l.b16 %v95
  %v369 = vunpack.c.l.b16 %v96
  %v370 = vunpack.c.h.b16 %v96
  %v371 = vunpack.c.l.b16 %v97
  %v372 = vunpack.c.l.b16 %v98
  %v373 = vunpack.c.h.b16 %v98
  %v374 = vunpack.c.l.b16 %v99
  %v375 = vunpack.c.l.b16 %v100
  %v376 = vunpack.c.h.b16 %v100
  %v377 = vunpack.c.l.b16 %v101
  %v378 = vunpack.c.l.b16 %v102
  %v379 = vunpack.c.h.b16 %v102
  %v380 = vunpack.c.l.b16 %v103
  %v381 = vunpack.c.l.b16 %v104
  %v382 = vunpack.c.h.b16 %v104
  %v383 = vunpack.c.l.b16 %v105
  %v384 = vunpack.c.l.b16 %v106
  %v385 = vunpack.c.h.b16 %v106
  %v386 = vunpack.c.l.b16 %v107
  %v387 = vunpack.c.l.b16 %v108
  %v388 = vunpack.c.h.b16 %v108
  %v389 = vunpack.c.l.b16 %v109
  %v390 = vpack.c.b16 %v345, %v342
  %v391 = vpack.c.b16 %v346, %v343
  %v392 = vpack.c.b16 %v347, %v344
  %v393 = vpack.c.b16 %v351, %v348
  %v394 = vpack.c.b16 %v352, %v349
  %v395 = vpack.c.b16 %v353, %v350
  %v396 = vpack.c.b16 %v357, %v354
  %v397 = vpack.c.b16 %v358, %v355
  %v398 = vpack.c.b16 %v359, %v356
  %v399 = vpack.c.b16 %v363, %v360
  %v400 = vpack.c.b16 %v364, %v361
  %v401 = vpack.c.b16 %v365, %v362
  %v402 = vpack.c.b16 %v369, %v366
  %v403 = vpack.c.b16 %v370, %v367
  %v404 = vpack.c.b16 %v371, %v368
  %v405 = vpack.c.b16 %v375, %v372
  %v406 = vpack.c.b16 %v376, %v373
  %v407 = vpack.c.b16 %v377, %v374
  %v408 = vpack.c.b16 %v381, %v378
  %v409 = vpack.c.b16 %v382, %v379
  %v410 = vpack.c.b16 %v383, %v380
  %v411 = vpack.c.b16 %v387, %v384
  %v412 = vpack.c.b16 %v388, %v385
  %v413 = vpack.c.b16 %v389, %v386
  %438 = vmatpush.bf16.msra.mxu0 %v411
  %439 = vmatpush.bf16.msra.mxu0 %v408
  %440 = vmatpush.bf16.msra.mxu0 %v405
  %441 = vmatpush.bf16.msra.mxu0 %v402
  %442 = vmatpush.bf16.msra.mxu0 %v399
  %443 = vmatpush.bf16.msra.mxu0 %v396
  %444 = vmatpush.bf16.msra.mxu0 %v393
  %445 = vmatpush.bf16.msra.mxu0 %v390
  %446 = vmatmul.bf16.gmra.mxu0 %v246
  %v447 = vpop.f32.mrf.mxu0
  %v448 = vadd.f32 %v112, %v447
  %v449 = vpop.f32.mrf.mxu0
  %v450 = vadd.f32 %v112, %v449
  %451 = vmatmul.bf16.gmra.mxu0 %v247
  %v452 = vpop.f32.mrf.mxu0
  %v453 = vadd.f32 %v112, %v452
  %v454 = vpop.f32.mrf.mxu0
  %v455 = vadd.f32 %v112, %v454
  %456 = vmatmul.bf16.gmra.mxu0 %v248
  %v457 = vpop.f32.mrf.mxu0
  %v458 = vadd.f32 %v112, %v457
  %v459 = vpop.f32.mrf.mxu0
  %v460 = vadd.f32 %v112, %v459
  %461 = vmatmul.bf16.gmra.mxu0 %v249
  %v462 = vpop.f32.mrf.mxu0
  %v463 = vadd.f32 %v112, %v462
  %v464 = vpop.f32.mrf.mxu0
  %v465 = vadd.f32 %v112, %v464
  %466 = vmatmul.bf16.gmra.mxu0 %v250
  %v467 = vpop.f32.mrf.mxu0
  %v468 = vadd.f32 %v112, %v467
  %v469 = vpop.f32.mrf.mxu0
  %v470 = vadd.f32 %v112, %v469
  %471 = vmatmul.bf16.gmra.mxu0 %v251
  %v472 = vpop.f32.mrf.mxu0
  %v473 = vadd.f32 %v112, %v472
  %v474 = vpop.f32.mrf.mxu0
  %v475 = vadd.f32 %v112, %v474
  %476 = vmatmul.bf16.gmra.mxu0 %v252
  %v477 = vpop.f32.mrf.mxu0
  %v478 = vadd.f32 %v112, %v477
  %v479 = vpop.f32.mrf.mxu0
  %v480 = vadd.f32 %v112, %v479
  %481 = vmatmul.bf16.gmra.mxu0 %v253
  %v482 = vpop.f32.mrf.mxu0
  %v483 = vadd.f32 %v112, %v482
  %v484 = vpop.f32.mrf.mxu0
  %v485 = vadd.f32 %v112, %v484
  %486 = vmatmul.bf16.gmra.mxu0 %v254
  %v487 = vpop.f32.mrf.mxu0
  %v488 = vadd.f32 %v112, %v487
  %v489 = vpop.f32.mrf.mxu0
  %v490 = vadd.f32 %v112, %v489
  %491 = vmatmul.bf16.gmra.mxu0 %v255
  %v492 = vpop.f32.mrf.mxu0
  %v493 = vadd.f32 %v112, %v492
  %v494 = vpop.f32.mrf.mxu0
  %v495 = vadd.f32 %v112, %v494
  %496 = vmatmul.bf16.gmra.mxu0 %v256
  %v497 = vpop.f32.mrf.mxu0
  %v498 = vadd.f32 %v112, %v497
  %v499 = vpop.f32.mrf.mxu0
  %v500 = vadd.f32 %v112, %v499
  %501 = vmatmul.bf16.gmra.mxu0 %v257
  %v502 = vpop.f32.mrf.mxu0
  %v503 = vadd.f32 %v112, %v502
  %v504 = vpop.f32.mrf.mxu0
  %v505 = vadd.f32 %v112, %v504
  %506 = vmatmul.bf16.gmra.mxu0 %v258
  %v507 = vpop.f32.mrf.mxu0
  %v508 = vadd.f32 %v112, %v507
  %v509 = vpop.f32.mrf.mxu0
  %v510 = vadd.f32 %v112, %v509
  %511 = vmatmul.bf16.gmra.mxu0 %v259
  %v512 = vpop.f32.mrf.mxu0
  %v513 = vadd.f32 %v112, %v512
  %v514 = vpop.f32.mrf.mxu0
  %v515 = vadd.f32 %v112, %v514
  %516 = vmatmul.bf16.gmra.mxu0 %v260
  %v517 = vpop.f32.mrf.mxu0
  %v518 = vadd.f32 %v112, %v517
  %v519 = vpop.f32.mrf.mxu0
  %v520 = vadd.f32 %v112, %v519
  %521 = vmatmul.bf16.gmra.mxu0 %v261
  %v522 = vpop.f32.mrf.mxu0
  %v523 = vadd.f32 %v112, %v522
  %v524 = vpop.f32.mrf.mxu0
  %v525 = vadd.f32 %v112, %v524
  %526 = vmatmul.bf16.gmra.mxu0 %v262
  %v527 = vpop.f32.mrf.mxu0
  %v528 = vadd.f32 %v112, %v527
  %v529 = vpop.f32.mrf.mxu0
  %v530 = vadd.f32 %v112, %v529
  %531 = vmatmul.bf16.gmra.mxu0 %v263
  %v532 = vpop.f32.mrf.mxu0
  %v533 = vadd.f32 %v112, %v532
  %v534 = vpop.f32.mrf.mxu0
  %v535 = vadd.f32 %v112, %v534
  %536 = vmatmul.bf16.gmra.mxu0 %v264
  %v537 = vpop.f32.mrf.mxu0
  %v538 = vadd.f32 %v112, %v537
  %v539 = vpop.f32.mrf.mxu0
  %v540 = vadd.f32 %v112, %v539
  %541 = vmatmul.bf16.gmra.mxu0 %v265
  %v542 = vpop.f32.mrf.mxu0
  %v543 = vadd.f32 %v112, %v542
  %v544 = vpop.f32.mrf.mxu0
  %v545 = vadd.f32 %v112, %v544
  %546 = vmatmul.bf16.gmra.mxu0 %v266
  %v547 = vpop.f32.mrf.mxu0
  %v548 = vadd.f32 %v112, %v547
  %v549 = vpop.f32.mrf.mxu0
  %v550 = vadd.f32 %v112, %v549
  %551 = vmatmul.bf16.gmra.mxu0 %v267
  %v552 = vpop.f32.mrf.mxu0
  %v553 = vadd.f32 %v112, %v552
  %v554 = vpop.f32.mrf.mxu0
  %v555 = vadd.f32 %v112, %v554
  %556 = vmatmul.bf16.gmra.mxu0 %v268
  %v557 = vpop.f32.mrf.mxu0
  %v558 = vadd.f32 %v112, %v557
  %v559 = vpop.f32.mrf.mxu0
  %v560 = vadd.f32 %v112, %v559
  %561 = vmatmul.bf16.gmra.mxu0 %v269
  %v562 = vpop.f32.mrf.mxu0
  %v563 = vadd.f32 %v112, %v562
  %v564 = vpop.f32.mrf.mxu0
  %v565 = vadd.f32 %v112, %v564
  %566 = vmatmul.bf16.gmra.mxu0 %v270
  %v567 = vpop.f32.mrf.mxu0
  %v568 = vadd.f32 %v112, %v567
  %v569 = vpop.f32.mrf.mxu0
  %v570 = vadd.f32 %v112, %v569
  %571 = vmatmul.bf16.gmra.mxu0 %v271
  %v572 = vpop.f32.mrf.mxu0
  %v573 = vadd.f32 %v112, %v572
  %v574 = vpop.f32.mrf.mxu0
  %v575 = vadd.f32 %v112, %v574
  %576 = vmatmul.bf16.gmra.mxu0 %v272
  %v577 = vpop.f32.mrf.mxu0
  %v578 = vadd.f32 %v112, %v577
  %v579 = vpop.f32.mrf.mxu0
  %v580 = vadd.f32 %v112, %v579
  %581 = vmatmul.bf16.gmra.mxu0 %v273
  %v582 = vpop.f32.mrf.mxu0
  %v583 = vadd.f32 %v112, %v582
  %v584 = vpop.f32.mrf.mxu0
  %v585 = vadd.f32 %v112, %v584
  %586 = vmatmul.bf16.gmra.mxu0 %v274
  %v587 = vpop.f32.mrf.mxu0
  %v588 = vadd.f32 %v112, %v587
  %v589 = vpop.f32.mrf.mxu0
  %v590 = vadd.f32 %v112, %v589
  %591 = vmatmul.bf16.gmra.mxu0 %v275
  %v592 = vpop.f32.mrf.mxu0
  %v593 = vadd.f32 %v112, %v592
  %v594 = vpop.f32.mrf.mxu0
  %v595 = vadd.f32 %v112, %v594
  %596 = vmatmul.bf16.gmra.mxu0 %v276
  %v597 = vpop.f32.mrf.mxu0
  %v598 = vadd.f32 %v112, %v597
  %v599 = vpop.f32.mrf.mxu0
  %v600 = vadd.f32 %v112, %v599
  %601 = vmatmul.bf16.gmra.mxu0 %v277
  %v602 = vpop.f32.mrf.mxu0
  %v603 = vadd.f32 %v112, %v602
  %v604 = vpop.f32.mrf.mxu0
  %v605 = vadd.f32 %v112, %v604
  %606 = vdwg.mxu0
  %607 = vmatpush.bf16.msra.mxu0 %v412
  %608 = vmatpush.bf16.msra.mxu0 %v409
  %609 = vmatpush.bf16.msra.mxu0 %v406
  %610 = vmatpush.bf16.msra.mxu0 %v403
  %611 = vmatpush.bf16.msra.mxu0 %v400
  %612 = vmatpush.bf16.msra.mxu0 %v397
  %613 = vmatpush.bf16.msra.mxu0 %v394
  %614 = vmatpush.bf16.msra.mxu0 %v391
  %615 = vmatmul.bf16.gmra.mxu0 %v246
  %v616 = vpop.f32.mrf.mxu0
  %v617 = vadd.f32 %v113, %v616
  %v618 = vpop.f32.mrf.mxu0
  %v619 = vadd.f32 %v113, %v618
  %620 = vmatmul.bf16.gmra.mxu0 %v247
  %v621 = vpop.f32.mrf.mxu0
  %v622 = vadd.f32 %v113, %v621
  %v623 = vpop.f32.mrf.mxu0
  %v624 = vadd.f32 %v113, %v623
  %625 = vmatmul.bf16.gmra.mxu0 %v248
  %v626 = vpop.f32.mrf.mxu0
  %v627 = vadd.f32 %v113, %v626
  %v628 = vpop.f32.mrf.mxu0
  %v629 = vadd.f32 %v113, %v628
  %630 = vmatmul.bf16.gmra.mxu0 %v249
  %v631 = vpop.f32.mrf.mxu0
  %v632 = vadd.f32 %v113, %v631
  %v633 = vpop.f32.mrf.mxu0
  %v634 = vadd.f32 %v113, %v633
  %635 = vmatmul.bf16.gmra.mxu0 %v250
  %v636 = vpop.f32.mrf.mxu0
  %v637 = vadd.f32 %v113, %v636
  %v638 = vpop.f32.mrf.mxu0
  %v639 = vadd.f32 %v113, %v638
  %640 = vmatmul.bf16.gmra.mxu0 %v251
  %v641 = vpop.f32.mrf.mxu0
  %v642 = vadd.f32 %v113, %v641
  %v643 = vpop.f32.mrf.mxu0
  %v644 = vadd.f32 %v113, %v643
  %645 = vmatmul.bf16.gmra.mxu0 %v252
  %v646 = vpop.f32.mrf.mxu0
  %v647 = vadd.f32 %v113, %v646
  %v648 = vpop.f32.mrf.mxu0
  %v649 = vadd.f32 %v113, %v648
  %650 = vmatmul.bf16.gmra.mxu0 %v253
  %v651 = vpop.f32.mrf.mxu0
  %v652 = vadd.f32 %v113, %v651
  %v653 = vpop.f32.mrf.mxu0
  %v654 = vadd.f32 %v113, %v653
  %655 = vmatmul.bf16.gmra.mxu0 %v254
  %v656 = vpop.f32.mrf.mxu0
  %v657 = vadd.f32 %v113, %v656
  %v658 = vpop.f32.mrf.mxu0
  %v659 = vadd.f32 %v113, %v658
  %660 = vmatmul.bf16.gmra.mxu0 %v255
  %v661 = vpop.f32.mrf.mxu0
  %v662 = vadd.f32 %v113, %v661
  %v663 = vpop.f32.mrf.mxu0
  %v664 = vadd.f32 %v113, %v663
  %665 = vmatmul.bf16.gmra.mxu0 %v256
  %v666 = vpop.f32.mrf.mxu0
  %v667 = vadd.f32 %v113, %v666
  %v668 = vpop.f32.mrf.mxu0
  %v669 = vadd.f32 %v113, %v668
  %670 = vmatmul.bf16.gmra.mxu0 %v257
  %v671 = vpop.f32.mrf.mxu0
  %v672 = vadd.f32 %v113, %v671
  %v673 = vpop.f32.mrf.mxu0
  %v674 = vadd.f32 %v113, %v673
  %675 = vmatmul.bf16.gmra.mxu0 %v258
  %v676 = vpop.f32.mrf.mxu0
  %v677 = vadd.f32 %v113, %v676
  %v678 = vpop.f32.mrf.mxu0
  %v679 = vadd.f32 %v113, %v678
  %680 = vmatmul.bf16.gmra.mxu0 %v259
  %v681 = vpop.f32.mrf.mxu0
  %v682 = vadd.f32 %v113, %v681
  %v683 = vpop.f32.mrf.mxu0
  %v684 = vadd.f32 %v113, %v683
  %685 = vmatmul.bf16.gmra.mxu0 %v260
  %v686 = vpop.f32.mrf.mxu0
  %v687 = vadd.f32 %v113, %v686
  %v688 = vpop.f32.mrf.mxu0
  %v689 = vadd.f32 %v113, %v688
  %690 = vmatmul.bf16.gmra.mxu0 %v261
  %v691 = vpop.f32.mrf.mxu0
  %v692 = vadd.f32 %v113, %v691
  %v693 = vpop.f32.mrf.mxu0
  %v694 = vadd.f32 %v113, %v693
  %695 = vmatmul.bf16.gmra.mxu0 %v262
  %v696 = vpop.f32.mrf.mxu0
  %v697 = vadd.f32 %v113, %v696
  %v698 = vpop.f32.mrf.mxu0
  %v699 = vadd.f32 %v113, %v698
  %700 = vmatmul.bf16.gmra.mxu0 %v263
  %v701 = vpop.f32.mrf.mxu0
  %v702 = vadd.f32 %v113, %v701
  %v703 = vpop.f32.mrf.mxu0
  %v704 = vadd.f32 %v113, %v703
  %705 = vmatmul.bf16.gmra.mxu0 %v264
  %v706 = vpop.f32.mrf.mxu0
  %v707 = vadd.f32 %v113, %v706
  %v708 = vpop.f32.mrf.mxu0
  %v709 = vadd.f32 %v113, %v708
  %710 = vmatmul.bf16.gmra.mxu0 %v265
  %v711 = vpop.f32.mrf.mxu0
  %v712 = vadd.f32 %v113, %v711
  %v713 = vpop.f32.mrf.mxu0
  %v714 = vadd.f32 %v113, %v713
  %715 = vmatmul.bf16.gmra.mxu0 %v266
  %v716 = vpop.f32.mrf.mxu0
  %v717 = vadd.f32 %v113, %v716
  %v718 = vpop.f32.mrf.mxu0
  %v719 = vadd.f32 %v113, %v718
  %720 = vmatmul.bf16.gmra.mxu0 %v267
  %v721 = vpop.f32.mrf.mxu0
  %v722 = vadd.f32 %v113, %v721
  %v723 = vpop.f32.mrf.mxu0
  %v724 = vadd.f32 %v113, %v723
  %725 = vmatmul.bf16.gmra.mxu0 %v268
  %v726 = vpop.f32.mrf.mxu0
  %v727 = vadd.f32 %v113, %v726
  %v728 = vpop.f32.mrf.mxu0
  %v729 = vadd.f32 %v113, %v728
  %730 = vmatmul.bf16.gmra.mxu0 %v269
  %v731 = vpop.f32.mrf.mxu0
  %v732 = vadd.f32 %v113, %v731
  %v733 = vpop.f32.mrf.mxu0
  %v734 = vadd.f32 %v113, %v733
  %735 = vmatmul.bf16.gmra.mxu0 %v270
  %v736 = vpop.f32.mrf.mxu0
  %v737 = vadd.f32 %v113, %v736
  %v738 = vpop.f32.mrf.mxu0
  %v739 = vadd.f32 %v113, %v738
  %740 = vmatmul.bf16.gmra.mxu0 %v271
  %v741 = vpop.f32.mrf.mxu0
  %v742 = vadd.f32 %v113, %v741
  %v743 = vpop.f32.mrf.mxu0
  %v744 = vadd.f32 %v113, %v743
  %745 = vmatmul.bf16.gmra.mxu0 %v272
  %v746 = vpop.f32.mrf.mxu0
  %v747 = vadd.f32 %v113, %v746
  %v748 = vpop.f32.mrf.mxu0
  %v749 = vadd.f32 %v113, %v748
  %750 = vmatmul.bf16.gmra.mxu0 %v273
  %v751 = vpop.f32.mrf.mxu0
  %v752 = vadd.f32 %v113, %v751
  %v753 = vpop.f32.mrf.mxu0
  %v754 = vadd.f32 %v113, %v753
  %755 = vmatmul.bf16.gmra.mxu0 %v274
  %v756 = vpop.f32.mrf.mxu0
  %v757 = vadd.f32 %v113, %v756
  %v758 = vpop.f32.mrf.mxu0
  %v759 = vadd.f32 %v113, %v758
  %760 = vmatmul.bf16.gmra.mxu0 %v275
  %v761 = vpop.f32.mrf.mxu0
  %v762 = vadd.f32 %v113, %v761
  %v763 = vpop.f32.mrf.mxu0
  %v764 = vadd.f32 %v113, %v763
  %765 = vmatmul.bf16.gmra.mxu0 %v276
  %v766 = vpop.f32.mrf.mxu0
  %v767 = vadd.f32 %v113, %v766
  %v768 = vpop.f32.mrf.mxu0
  %v769 = vadd.f32 %v113, %v768
  %770 = vmatmul.bf16.gmra.mxu0 %v277
  %v771 = vpop.f32.mrf.mxu0
  %v772 = vadd.f32 %v113, %v771
  %v773 = vpop.f32.mrf.mxu0
  %v774 = vadd.f32 %v113, %v773
  %775 = vdwg.mxu0
  %776 = vmatpush.bf16.msra.mxu0 %v413
  %777 = vmatpush.bf16.msra.mxu0 %v410
  %778 = vmatpush.bf16.msra.mxu0 %v407
  %779 = vmatpush.bf16.msra.mxu0 %v404
  %780 = vmatpush.bf16.msra.mxu0 %v401
  %781 = vmatpush.bf16.msra.mxu0 %v398
  %782 = vmatpush.bf16.msra.mxu0 %v395
  %783 = vmatpush.bf16.msra.mxu0 %v392
  %784 = vmatmul.bf16.gmra.mxu0 %v246
  %v785 = vpop.f32.mrf.mxu0
  %v786 = vadd.f32 %v114, %v785
  %v787 = vpop.f32.mrf.mxu0
  %v788 = vadd.f32 %v114, %v787
  %789 = vmatmul.bf16.gmra.mxu0 %v247
  %v790 = vpop.f32.mrf.mxu0
  %v791 = vadd.f32 %v114, %v790
  %v792 = vpop.f32.mrf.mxu0
  %v793 = vadd.f32 %v114, %v792
  %794 = vmatmul.bf16.gmra.mxu0 %v248
  %v795 = vpop.f32.mrf.mxu0
  %v796 = vadd.f32 %v114, %v795
  %v797 = vpop.f32.mrf.mxu0
  %v798 = vadd.f32 %v114, %v797
  %799 = vmatmul.bf16.gmra.mxu0 %v249
  %v800 = vpop.f32.mrf.mxu0
  %v801 = vadd.f32 %v114, %v800
  %v802 = vpop.f32.mrf.mxu0
  %v803 = vadd.f32 %v114, %v802
  %804 = vmatmul.bf16.gmra.mxu0 %v250
  %v805 = vpop.f32.mrf.mxu0
  %v806 = vadd.f32 %v114, %v805
  %v807 = vpop.f32.mrf.mxu0
  %v808 = vadd.f32 %v114, %v807
  %809 = vmatmul.bf16.gmra.mxu0 %v251
  %v810 = vpop.f32.mrf.mxu0
  %v811 = vadd.f32 %v114, %v810
  %v812 = vpop.f32.mrf.mxu0
  %v813 = vadd.f32 %v114, %v812
  %814 = vmatmul.bf16.gmra.mxu0 %v252
  %v815 = vpop.f32.mrf.mxu0
  %v816 = vadd.f32 %v114, %v815
  %v817 = vpop.f32.mrf.mxu0
  %v818 = vadd.f32 %v114, %v817
  %819 = vmatmul.bf16.gmra.mxu0 %v253
  %v820 = vpop.f32.mrf.mxu0
  %v821 = vadd.f32 %v114, %v820
  %v822 = vpop.f32.mrf.mxu0
  %v823 = vadd.f32 %v114, %v822
  %824 = vmatmul.bf16.gmra.mxu0 %v254
  %v825 = vpop.f32.mrf.mxu0
  %v826 = vadd.f32 %v114, %v825
  %v827 = vpop.f32.mrf.mxu0
  %v828 = vadd.f32 %v114, %v827
  %829 = vmatmul.bf16.gmra.mxu0 %v255
  %v830 = vpop.f32.mrf.mxu0
  %v831 = vadd.f32 %v114, %v830
  %v832 = vpop.f32.mrf.mxu0
  %v833 = vadd.f32 %v114, %v832
  %834 = vmatmul.bf16.gmra.mxu0 %v256
  %v835 = vpop.f32.mrf.mxu0
  %v836 = vadd.f32 %v114, %v835
  %v837 = vpop.f32.mrf.mxu0
  %v838 = vadd.f32 %v114, %v837
  %839 = vmatmul.bf16.gmra.mxu0 %v257
  %v840 = vpop.f32.mrf.mxu0
  %v841 = vadd.f32 %v114, %v840
  %v842 = vpop.f32.mrf.mxu0
  %v843 = vadd.f32 %v114, %v842
  %844 = vmatmul.bf16.gmra.mxu0 %v258
  %v845 = vpop.f32.mrf.mxu0
  %v846 = vadd.f32 %v114, %v845
  %v847 = vpop.f32.mrf.mxu0
  %v848 = vadd.f32 %v114, %v847
  %849 = vmatmul.bf16.gmra.mxu0 %v259
  %v850 = vpop.f32.mrf.mxu0
  %v851 = vadd.f32 %v114, %v850
  %v852 = vpop.f32.mrf.mxu0
  %v853 = vadd.f32 %v114, %v852
  %854 = vmatmul.bf16.gmra.mxu0 %v260
  %v855 = vpop.f32.mrf.mxu0
  %v856 = vadd.f32 %v114, %v855
  %v857 = vpop.f32.mrf.mxu0
  %v858 = vadd.f32 %v114, %v857
  %859 = vmatmul.bf16.gmra.mxu0 %v261
  %v860 = vpop.f32.mrf.mxu0
  %v861 = vadd.f32 %v114, %v860
  %v862 = vpop.f32.mrf.mxu0
  %v863 = vadd.f32 %v114, %v862
  %864 = vmatmul.bf16.gmra.mxu0 %v262
  %v865 = vpop.f32.mrf.mxu0
  %v866 = vadd.f32 %v114, %v865
  %v867 = vpop.f32.mrf.mxu0
  %v868 = vadd.f32 %v114, %v867
  %869 = vmatmul.bf16.gmra.mxu0 %v263
  %v870 = vpop.f32.mrf.mxu0
  %v871 = vadd.f32 %v114, %v870
  %v872 = vpop.f32.mrf.mxu0
  %v873 = vadd.f32 %v114, %v872
  %874 = vmatmul.bf16.gmra.mxu0 %v264
  %v875 = vpop.f32.mrf.mxu0
  %v876 = vadd.f32 %v114, %v875
  %v877 = vpop.f32.mrf.mxu0
  %v878 = vadd.f32 %v114, %v877
  %879 = vmatmul.bf16.gmra.mxu0 %v265
  %v880 = vpop.f32.mrf.mxu0
  %v881 = vadd.f32 %v114, %v880
  %v882 = vpop.f32.mrf.mxu0
  %v883 = vadd.f32 %v114, %v882
  %884 = vmatmul.bf16.gmra.mxu0 %v266
  %v885 = vpop.f32.mrf.mxu0
  %v886 = vadd.f32 %v114, %v885
  %v887 = vpop.f32.mrf.mxu0
  %v888 = vadd.f32 %v114, %v887
  %889 = vmatmul.bf16.gmra.mxu0 %v267
  %v890 = vpop.f32.mrf.mxu0
  %v891 = vadd.f32 %v114, %v890
  %v892 = vpop.f32.mrf.mxu0
  %v893 = vadd.f32 %v114, %v892
  %894 = vmatmul.bf16.gmra.mxu0 %v268
  %v895 = vpop.f32.mrf.mxu0
  %v896 = vadd.f32 %v114, %v895
  %v897 = vpop.f32.mrf.mxu0
  %v898 = vadd.f32 %v114, %v897
  %899 = vmatmul.bf16.gmra.mxu0 %v269
  %v900 = vpop.f32.mrf.mxu0
  %v901 = vadd.f32 %v114, %v900
  %v902 = vpop.f32.mrf.mxu0
  %v903 = vadd.f32 %v114, %v902
  %904 = vmatmul.bf16.gmra.mxu0 %v270
  %v905 = vpop.f32.mrf.mxu0
  %v906 = vadd.f32 %v114, %v905
  %v907 = vpop.f32.mrf.mxu0
  %v908 = vadd.f32 %v114, %v907
  %909 = vmatmul.bf16.gmra.mxu0 %v271
  %v910 = vpop.f32.mrf.mxu0
  %v911 = vadd.f32 %v114, %v910
  %v912 = vpop.f32.mrf.mxu0
  %v913 = vadd.f32 %v114, %v912
  %914 = vmatmul.bf16.gmra.mxu0 %v272
  %v915 = vpop.f32.mrf.mxu0
  %v916 = vadd.f32 %v114, %v915
  %v917 = vpop.f32.mrf.mxu0
  %v918 = vadd.f32 %v114, %v917
  %919 = vmatmul.bf16.gmra.mxu0 %v273
  %v920 = vpop.f32.mrf.mxu0
  %v921 = vadd.f32 %v114, %v920
  %v922 = vpop.f32.mrf.mxu0
  %v923 = vadd.f32 %v114, %v922
  %924 = vmatmul.bf16.gmra.mxu0 %v274
  %v925 = vpop.f32.mrf.mxu0
  %v926 = vadd.f32 %v114, %v925
  %v927 = vpop.f32.mrf.mxu0
  %v928 = vadd.f32 %v114, %v927
  %929 = vmatmul.bf16.gmra.mxu0 %v275
  %v930 = vpop.f32.mrf.mxu0
  %v931 = vadd.f32 %v114, %v930
  %v932 = vpop.f32.mrf.mxu0
  %v933 = vadd.f32 %v114, %v932
  %934 = vmatmul.bf16.gmra.mxu0 %v276
  %v935 = vpop.f32.mrf.mxu0
  %v936 = vadd.f32 %v114, %v935
  %v937 = vpop.f32.mrf.mxu0
  %v938 = vadd.f32 %v114, %v937
  %939 = vmatmul.bf16.gmra.mxu0 %v277
  %v940 = vpop.f32.mrf.mxu0
  %v941 = vadd.f32 %v114, %v940
  %v942 = vpop.f32.mrf.mxu0
  %v943 = vadd.f32 %v114, %v942
  %944 = vdwg.mxu0
  %v945 = vpack.c.bf16 %v617, %v448
  %v946 = vpack.c.bf16 %v786, %v786
  %v947 = vpack.c.bf16 %v619, %v450
  %v948 = vpack.c.bf16 %v788, %v788
  %v949 = vpack.c.bf16 %v622, %v453
  %v950 = vpack.c.bf16 %v791, %v791
  %v951 = vpack.c.bf16 %v624, %v455
  %v952 = vpack.c.bf16 %v793, %v793
  %v953 = vpack.c.bf16 %v627, %v458
  %v954 = vpack.c.bf16 %v796, %v796
  %v955 = vpack.c.bf16 %v629, %v460
  %v956 = vpack.c.bf16 %v798, %v798
  %v957 = vpack.c.bf16 %v632, %v463
  %v958 = vpack.c.bf16 %v801, %v801
  %v959 = vpack.c.bf16 %v634, %v465
  %v960 = vpack.c.bf16 %v803, %v803
  %v961 = vpack.c.bf16 %v637, %v468
  %v962 = vpack.c.bf16 %v806, %v806
  %v963 = vpack.c.bf16 %v639, %v470
  %v964 = vpack.c.bf16 %v808, %v808
  %v965 = vpack.c.bf16 %v642, %v473
  %v966 = vpack.c.bf16 %v811, %v811
  %v967 = vpack.c.bf16 %v644, %v475
  %v968 = vpack.c.bf16 %v813, %v813
  %v969 = vpack.c.bf16 %v647, %v478
  %v970 = vpack.c.bf16 %v816, %v816
  %v971 = vpack.c.bf16 %v649, %v480
  %v972 = vpack.c.bf16 %v818, %v818
  %v973 = vpack.c.bf16 %v652, %v483
  %v974 = vpack.c.bf16 %v821, %v821
  %v975 = vpack.c.bf16 %v654, %v485
  %v976 = vpack.c.bf16 %v823, %v823
  %v977 = vpack.c.bf16 %v657, %v488
  %v978 = vpack.c.bf16 %v826, %v826
  %v979 = vpack.c.bf16 %v659, %v490
  %v980 = vpack.c.bf16 %v828, %v828
  %v981 = vpack.c.bf16 %v662, %v493
  %v982 = vpack.c.bf16 %v831, %v831
  %v983 = vpack.c.bf16 %v664, %v495
  %v984 = vpack.c.bf16 %v833, %v833
  %v985 = vpack.c.bf16 %v667, %v498
  %v986 = vpack.c.bf16 %v836, %v836
  %v987 = vpack.c.bf16 %v669, %v500
  %v988 = vpack.c.bf16 %v838, %v838
  %v989 = vpack.c.bf16 %v672, %v503
  %v990 = vpack.c.bf16 %v841, %v841
  %v991 = vpack.c.bf16 %v674, %v505
  %v992 = vpack.c.bf16 %v843, %v843
  %v993 = vpack.c.bf16 %v677, %v508
  %v994 = vpack.c.bf16 %v846, %v846
  %v995 = vpack.c.bf16 %v679, %v510
  %v996 = vpack.c.bf16 %v848, %v848
  %v997 = vpack.c.bf16 %v682, %v513
  %v998 = vpack.c.bf16 %v851, %v851
  %v999 = vpack.c.bf16 %v684, %v515
  %v1000 = vpack.c.bf16 %v853, %v853
  %v1001 = vpack.c.bf16 %v687, %v518
  %v1002 = vpack.c.bf16 %v856, %v856
  %v1003 = vpack.c.bf16 %v689, %v520
  %v1004 = vpack.c.bf16 %v858, %v858
  %v1005 = vpack.c.bf16 %v692, %v523
  %v1006 = vpack.c.bf16 %v861, %v861
  %v1007 = vpack.c.bf16 %v694, %v525
  %v1008 = vpack.c.bf16 %v863, %v863
  %v1009 = vpack.c.bf16 %v697, %v528
  %v1010 = vpack.c.bf16 %v866, %v866
  %v1011 = vpack.c.bf16 %v699, %v530
  %v1012 = vpack.c.bf16 %v868, %v868
  %v1013 = vpack.c.bf16 %v702, %v533
  %v1014 = vpack.c.bf16 %v871, %v871
  %v1015 = vpack.c.bf16 %v704, %v535
  %v1016 = vpack.c.bf16 %v873, %v873
  %v1017 = vpack.c.bf16 %v707, %v538
  %v1018 = vpack.c.bf16 %v876, %v876
  %v1019 = vpack.c.bf16 %v709, %v540
  %v1020 = vpack.c.bf16 %v878, %v878
  %v1021 = vpack.c.bf16 %v712, %v543
  %v1022 = vpack.c.bf16 %v881, %v881
  %v1023 = vpack.c.bf16 %v714, %v545
  %v1024 = vpack.c.bf16 %v883, %v883
  %v1025 = vpack.c.bf16 %v717, %v548
  %v1026 = vpack.c.bf16 %v886, %v886
  %v1027 = vpack.c.bf16 %v719, %v550
  %v1028 = vpack.c.bf16 %v888, %v888
  %v1029 = vpack.c.bf16 %v722, %v553
  %v1030 = vpack.c.bf16 %v891, %v891
  %v1031 = vpack.c.bf16 %v724, %v555
  %v1032 = vpack.c.bf16 %v893, %v893
  %v1033 = vpack.c.bf16 %v727, %v558
  %v1034 = vpack.c.bf16 %v896, %v896
  %v1035 = vpack.c.bf16 %v729, %v560
  %v1036 = vpack.c.bf16 %v898, %v898
  %v1037 = vpack.c.bf16 %v732, %v563
  %v1038 = vpack.c.bf16 %v901, %v901
  %v1039 = vpack.c.bf16 %v734, %v565
  %v1040 = vpack.c.bf16 %v903, %v903
  %v1041 = vpack.c.bf16 %v737, %v568
  %v1042 = vpack.c.bf16 %v906, %v906
  %v1043 = vpack.c.bf16 %v739, %v570
  %v1044 = vpack.c.bf16 %v908, %v908
  %v1045 = vpack.c.bf16 %v742, %v573
  %v1046 = vpack.c.bf16 %v911, %v911
  %v1047 = vpack.c.bf16 %v744, %v575
  %v1048 = vpack.c.bf16 %v913, %v913
  %v1049 = vpack.c.bf16 %v747, %v578
  %v1050 = vpack.c.bf16 %v916, %v916
  %v1051 = vpack.c.bf16 %v749, %v580
  %v1052 = vpack.c.bf16 %v918, %v918
  %v1053 = vpack.c.bf16 %v752, %v583
  %v1054 = vpack.c.bf16 %v921, %v921
  %v1055 = vpack.c.bf16 %v754, %v585
  %v1056 = vpack.c.bf16 %v923, %v923
  %v1057 = vpack.c.bf16 %v757, %v588
  %v1058 = vpack.c.bf16 %v926, %v926
  %v1059 = vpack.c.bf16 %v759, %v590
  %v1060 = vpack.c.bf16 %v928, %v928
  %v1061 = vpack.c.bf16 %v762, %v593
  %v1062 = vpack.c.bf16 %v931, %v931
  %v1063 = vpack.c.bf16 %v764, %v595
  %v1064 = vpack.c.bf16 %v933, %v933
  %v1065 = vpack.c.bf16 %v767, %v598
  %v1066 = vpack.c.bf16 %v936, %v936
  %v1067 = vpack.c.bf16 %v769, %v600
  %v1068 = vpack.c.bf16 %v938, %v938
  %v1069 = vpack.c.bf16 %v772, %v603
  %v1070 = vpack.c.bf16 %v941, %v941
  %v1071 = vpack.c.bf16 %v774, %v605
  %v1072 = vpack.c.bf16 %v943, %v943
  %1073 = vst [vmem:[%s3] sm:$0xff] %v945
  %1074 = vst [vmem:[%s3 + $0x8] sm:$0xf] %v946
  %1075 = vst [vmem:[%s3 + $0xc] sm:$0xff] %v947
  %1076 = vst [vmem:[%s3 + $0x14] sm:$0xf] %v948
  %1077 = vst [vmem:[%s3 + $0x18] sm:$0xff] %v949
  %1078 = vst [vmem:[%s3 + $0x20] sm:$0xf] %v950
  %1079 = vst [vmem:[%s3 + $0x24] sm:$0xff] %v951
  %1080 = vst [vmem:[%s3 + $0x2c] sm:$0xf] %v952
  %1081 = vst [vmem:[%s3 + $0x30] sm:$0xff] %v953
  %1082 = vst [vmem:[%s3 + $0x38] sm:$0xf] %v954
  %1083 = vst [vmem:[%s3 + $0x3c] sm:$0xff] %v955
  %1084 = vst [vmem:[%s3 + $0x44] sm:$0xf] %v956
  %1085 = vst [vmem:[%s3 + $0x48] sm:$0xff] %v957
  %1086 = vst [vmem:[%s3 + $0x50] sm:$0xf] %v958
  %1087 = vst [vmem:[%s3 + $0x54] sm:$0xff] %v959
  %1088 = vst [vmem:[%s3 + $0x5c] sm:$0xf] %v960
  %1089 = vst [vmem:[%s3 + $0x60] sm:$0xff] %v961
  %1090 = vst [vmem:[%s3 + $0x68] sm:$0xf] %v962
  %1091 = vst [vmem:[%s3 + $0x6c] sm:$0xff] %v963
  %1092 = vst [vmem:[%s3 + $0x74] sm:$0xf] %v964
  %1093 = vst [vmem:[%s3 + $0x78] sm:$0xff] %v965
  %1094 = vst [vmem:[%s3 + $0x80] sm:$0xf] %v966
  %1095 = vst [vmem:[%s3 + $0x84] sm:$0xff] %v967
  %1096 = vst [vmem:[%s3 + $0x8c] sm:$0xf] %v968
  %1097 = vst [vmem:[%s3 + $0x90] sm:$0xff] %v969
  %1098 = vst [vmem:[%s3 + $0x98] sm:$0xf] %v970
  %1099 = vst [vmem:[%s3 + $0x9c] sm:$0xff] %v971
  %1100 = vst [vmem:[%s3 + $0xa4] sm:$0xf] %v972
  %1101 = vst [vmem:[%s3 + $0xa8] sm:$0xff] %v973
  %1102 = vst [vmem:[%s3 + $0xb0] sm:$0xf] %v974
  %1103 = vst [vmem:[%s3 + $0xb4] sm:$0xff] %v975
  %1104 = vst [vmem:[%s3 + $0xbc] sm:$0xf] %v976
  %1105 = vst [vmem:[%s3 + $0xc0] sm:$0xff] %v977
  %1106 = vst [vmem:[%s3 + $0xc8] sm:$0xf] %v978
  %1107 = vst [vmem:[%s3 + $0xcc] sm:$0xff] %v979
  %1108 = vst [vmem:[%s3 + $0xd4] sm:$0xf] %v980
  %1109 = vst [vmem:[%s3 + $0xd8] sm:$0xff] %v981
  %1110 = vst [vmem:[%s3 + $0xe0] sm:$0xf] %v982
  %1111 = vst [vmem:[%s3 + $0xe4] sm:$0xff] %v983
  %1112 = vst [vmem:[%s3 + $0xec] sm:$0xf] %v984
  %1113 = vst [vmem:[%s3 + $0xf0] sm:$0xff] %v985
  %1114 = vst [vmem:[%s3 + $0xf8] sm:$0xf] %v986
  %1115 = vst [vmem:[%s3 + $0xfc] sm:$0xff] %v987
  %1116 = vst [vmem:[%s3 + $0x104] sm:$0xf] %v988
  %1117 = vst [vmem:[%s3 + $0x108] sm:$0xff] %v989
  %1118 = vst [vmem:[%s3 + $0x110] sm:$0xf] %v990
  %1119 = vst [vmem:[%s3 + $0x114] sm:$0xff] %v991
  %1120 = vst [vmem:[%s3 + $0x11c] sm:$0xf] %v992
  %1121 = vst [vmem:[%s3 + $0x120] sm:$0xff] %v993
  %1122 = vst [vmem:[%s3 + $0x128] sm:$0xf] %v994
  %1123 = vst [vmem:[%s3 + $0x12c] sm:$0xff] %v995
  %1124 = vst [vmem:[%s3 + $0x134] sm:$0xf] %v996
  %1125 = vst [vmem:[%s3 + $0x138] sm:$0xff] %v997
  %1126 = vst [vmem:[%s3 + $0x140] sm:$0xf] %v998
  %1127 = vst [vmem:[%s3 + $0x144] sm:$0xff] %v999
  %1128 = vst [vmem:[%s3 + $0x14c] sm:$0xf] %v1000
  %1129 = vst [vmem:[%s3 + $0x150] sm:$0xff] %v1001
  %1130 = vst [vmem:[%s3 + $0x158] sm:$0xf] %v1002
  %1131 = vst [vmem:[%s3 + $0x15c] sm:$0xff] %v1003
  %1132 = vst [vmem:[%s3 + $0x164] sm:$0xf] %v1004
  %1133 = vst [vmem:[%s3 + $0x168] sm:$0xff] %v1005
  %1134 = vst [vmem:[%s3 + $0x170] sm:$0xf] %v1006
  %1135 = vst [vmem:[%s3 + $0x174] sm:$0xff] %v1007
  %1136 = vst [vmem:[%s3 + $0x17c] sm:$0xf] %v1008
  %1137 = vst [vmem:[%s3 + $0x180] sm:$0xff] %v1009
  %1138 = vst [vmem:[%s3 + $0x188] sm:$0xf] %v1010
  %1139 = vst [vmem:[%s3 + $0x18c] sm:$0xff] %v1011
  %1140 = vst [vmem:[%s3 + $0x194] sm:$0xf] %v1012
  %1141 = vst [vmem:[%s3 + $0x198] sm:$0xff] %v1013
  %1142 = vst [vmem:[%s3 + $0x1a0] sm:$0xf] %v1014
  %1143 = vst [vmem:[%s3 + $0x1a4] sm:$0xff] %v1015
  %1144 = vst [vmem:[%s3 + $0x1ac] sm:$0xf] %v1016
  %1145 = vst [vmem:[%s3 + $0x1b0] sm:$0xff] %v1017
  %1146 = vst [vmem:[%s3 + $0x1b8] sm:$0xf] %v1018
  %1147 = vst [vmem:[%s3 + $0x1bc] sm:$0xff] %v1019
  %1148 = vst [vmem:[%s3 + $0x1c4] sm:$0xf] %v1020
  %1149 = vst [vmem:[%s3 + $0x1c8] sm:$0xff] %v1021
  %1150 = vst [vmem:[%s3 + $0x1d0] sm:$0xf] %v1022
  %1151 = vst [vmem:[%s3 + $0x1d4] sm:$0xff] %v1023
  %1152 = vst [vmem:[%s3 + $0x1dc] sm:$0xf] %v1024
  %1153 = vst [vmem:[%s3 + $0x1e0] sm:$0xff] %v1025
  %1154 = vst [vmem:[%s3 + $0x1e8] sm:$0xf] %v1026
  %1155 = vst [vmem:[%s3 + $0x1ec] sm:$0xff] %v1027
  %1156 = vst [vmem:[%s3 + $0x1f4] sm:$0xf] %v1028
  %1157 = vst [vmem:[%s3 + $0x1f8] sm:$0xff] %v1029
  %1158 = vst [vmem:[%s3 + $0x200] sm:$0xf] %v1030
  %1159 = vst [vmem:[%s3 + $0x204] sm:$0xff] %v1031
  %1160 = vst [vmem:[%s3 + $0x20c] sm:$0xf] %v1032
  %1161 = vst [vmem:[%s3 + $0x210] sm:$0xff] %v1033
  %1162 = vst [vmem:[%s3 + $0x218] sm:$0xf] %v1034
  %1163 = vst [vmem:[%s3 + $0x21c] sm:$0xff] %v1035
  %1164 = vst [vmem:[%s3 + $0x224] sm:$0xf] %v1036
  %1165 = vst [vmem:[%s3 + $0x228] sm:$0xff] %v1037
  %1166 = vst [vmem:[%s3 + $0x230] sm:$0xf] %v1038
  %1167 = vst [vmem:[%s3 + $0x234] sm:$0xff] %v1039
  %1168 = vst [vmem:[%s3 + $0x23c] sm:$0xf] %v1040
  %1169 = vst [vmem:[%s3 + $0x240] sm:$0xff] %v1041
  %1170 = vst [vmem:[%s3 + $0x248] sm:$0xf] %v1042
  %1171 = vst [vmem:[%s3 + $0x24c] sm:$0xff] %v1043
  %1172 = vst [vmem:[%s3 + $0x254] sm:$0xf] %v1044
  %1173 = vst [vmem:[%s3 + $0x258] sm:$0xff] %v1045
  %1174 = vst [vmem:[%s3 + $0x260] sm:$0xf] %v1046
  %1175 = vst [vmem:[%s3 + $0x264] sm:$0xff] %v1047
  %1176 = vst [vmem:[%s3 + $0x26c] sm:$0xf] %v1048
  %1177 = vst [vmem:[%s3 + $0x270] sm:$0xff] %v1049
  %1178 = vst [vmem:[%s3 + $0x278] sm:$0xf] %v1050
  %1179 = vst [vmem:[%s3 + $0x27c] sm:$0xff] %v1051
  %1180 = vst [vmem:[%s3 + $0x284] sm:$0xf] %v1052
  %1181 = vst [vmem:[%s3 + $0x288] sm:$0xff] %v1053
  %1182 = vst [vmem:[%s3 + $0x290] sm:$0xf] %v1054
  %1183 = vst [vmem:[%s3 + $0x294] sm:$0xff] %v1055
  %1184 = vst [vmem:[%s3 + $0x29c] sm:$0xf] %v1056
  %1185 = vst [vmem:[%s3 + $0x2a0] sm:$0xff] %v1057
  %1186 = vst [vmem:[%s3 + $0x2a8] sm:$0xf] %v1058
  %1187 = vst [vmem:[%s3 + $0x2ac] sm:$0xff] %v1059
  %1188 = vst [vmem:[%s3 + $0x2b4] sm:$0xf] %v1060
  %1189 = vst [vmem:[%s3 + $0x2b8] sm:$0xff] %v1061
  %1190 = vst [vmem:[%s3 + $0x2c0] sm:$0xf] %v1062
  %1191 = vst [vmem:[%s3 + $0x2c4] sm:$0xff] %v1063
  %1192 = vst [vmem:[%s3 + $0x2cc] sm:$0xf] %v1064
  %1193 = vst [vmem:[%s3 + $0x2d0] sm:$0xff] %v1065
  %1194 = vst [vmem:[%s3 + $0x2d8] sm:$0xf] %v1066
  %1195 = vst [vmem:[%s3 + $0x2dc] sm:$0xff] %v1067
  %1196 = vst [vmem:[%s3 + $0x2e4] sm:$0xf] %v1068
  %1197 = vst [vmem:[%s3 + $0x2e8] sm:$0xff] %v1069
  %1198 = vst [vmem:[%s3 + $0x2f0] sm:$0xf] %v1070
  %1199 = vst [vmem:[%s3 + $0x2f4] sm:$0xff] %v1071
  %1200 = vst [vmem:[%s3 + $0x2fc] sm:$0xf] %v1072
  // Predicated region
  $region14: #{causal_self_attention.3} parent=0 // pred_check
    _
  $region15: #{causal_self_attention.3} parent=0 // pred_check_branch
    %1202 = sbr.rel (0) target = $region17
  $region16: #{causal_self_attention.3} parent=0 // pred_region
    _
  $region17: #{causal_self_attention.3} parent=0 // pred_fallthru
    _
  // Predicated region
  $region18: #{causal_self_attention.3} parent=0 // pred_check
    _
  $region19: #{causal_self_attention.3} parent=0 // pred_check_branch
    %1204 = sbr.rel (0) target = $region21
  $region20: #{causal_self_attention.3} parent=0 // pred_region
    _
  $region21: #{causal_self_attention.3} parent=0 // pred_fallthru
    _

// kernel: causal_self_attention.4
$region0: #{causal_self_attention.4}
  #allocation0 [shape = 'u32[]', space=smem, size = 0x4, offset = 0x4, fixed_abs, tag = 'smem constant byte address 0x4 - core index']
  #allocation1 [shape = 'u32[72,128]{1,0:T(1,128)}', space=vmem, size = 0x9000, scoped, tag = 'internal scratch']
  #allocation2 [shape = 'f32[2,128,1]{2,1,0:T(8,128)}', space=vmem, size = 0x20000, scoped, tag = 'scratch operand']
  #allocation3 [shape = 'f32[2,128,1]{2,1,0:T(8,128)}', space=vmem, size = 0x20000, scoped, tag = 'scratch operand']
  #allocation4 [shape = 'f32[2,128,64]{2,1,0:T(8,128)}', space=vmem, size = 0x20000, scoped, tag = 'scratch operand']
  #allocation5 [shape = 'bf16[2,128,64]{2,1,0:T(8,128)(2,1)}', space=vmem, size = 0x10000, scoped, tag = 'scratch operand']
  #allocation6 [shape = 'bf16[2,128,64]{2,1,0:T(8,128)(2,1)}', space=vmem, size = 0x10000, scoped, tag = 'scratch operand']
  #allocation7 [shape = 'bf16[2,128,64]{2,1,0:T(8,128)(2,1)}', space=vmem, size = 0x10000, scoped, tag = 'scratch operand']
  #allocation8 [shape = 's32[1]{0}', space=sflag, size = 0x4, scoped, tag = 'scoped memory for causal_self_attention.4']
  #allocation9 [shape = 'u8[512]{0}', space=smem, size = 0x200, scoped, tag = 'prefetched SMEM operand 0']
  #allocation10 [shape = 'u8[512]{0}', space=smem, size = 0x200, scoped, tag = 'prefetched SMEM operand 1']
  %s0 = inlined_call_operand.vmem [shape: s32[3], index: 0, kind: input, shape index: {}]
  %s1 = inlined_call_operand.vmem [shape: s32[3], index: 1, kind: input, shape index: {}]
  %s2 = inlined_call_operand.vmem [shape: bf16[2,256,384], index: 2, kind: input, shape index: {}, may-alias: {2,3,4}]
  %s3 = inlined_call_operand.vmem [shape: bf16[2,256,384], index: 3, kind: input, shape index: {}, may-alias: {2,3,4}]
  %s4 = inlined_call_operand.vmem [shape: bf16[2,256,384], index: 4, kind: input, shape index: {}, may-alias: {2,3,4}]
  %s5 = inlined_call_operand.vmem [shape: bf16[2,256,128], index: 5, kind: output, shape index: {}]
  %s6 = sld [smem:[#allocation0]]
  $region194: #{causal_self_attention.4} parent=0
    _
  %s8 = ssub.s32 1, %s6
  %s9 = scalar_select 0, %s8, %s6
  %s11 = sshll.u32 %s0, 4
  %s12 = int_to_ptr.vmem [resolvable:$true] %s11
  %14 = dma.vmem_to_smem %s12, 16, [#allocation9], [#allocation8]
  %s16 = sshll.u32 %s1, 4
  %s17 = int_to_ptr.vmem [resolvable:$true] %s16
  %19 = dma.vmem_to_smem %s17, 16, [#allocation10], [#allocation8]
  %21 = dma.done [#allocation8], 32
  %22 = sfence
  $region1: #{causal_self_attention.4} parent=0
    #allocation11 [shape = 'u8[65536]{0}', space=vmem, size = 0x10000, scoped, tag = 'input window, operand 2']
    #allocation12 [shape = 'u8[65536]{0}', space=vmem, size = 0x10000, scoped, tag = 'input window, operand 3']
    #allocation13 [shape = 'u8[65536]{0}', space=vmem, size = 0x10000, scoped, tag = 'input window, operand 4']
    loop: start=0, step=1, limit=8
    $region2: #{causal_self_attention.4} parent=1 // loop_pre_header
      _
    $region3: #{causal_self_attention.4} parent=1 // loop_header
      %s24 = sphi 0, %s28
      %p25 = scmp.ge.s32.totalorder %s24, 8
      %s31 = sphi 0, %s43
      %s32 = sphi 0, %s39
      %s33 = sphi 0, %s31
      %s34 = sphi 0, %s32
      %s35 = sphi 0, %s33
      %s36 = sphi 0, %s34
      %s50 = sphi 0, %s52
      %s53 = sphi 0, %s50
      %s54 = sphi 0, %s53
      %s70 = sphi 0, %s54
      %s80 = sphi 0, %s82
      %s83 = sphi 0, %s80
      %s84 = sphi 0, %s83
      %s100 = sphi 0, %s84
      %s110 = sphi 0, %s112
      %s113 = sphi 0, %s110
      %s114 = sphi 0, %s113
      %s130 = sphi 0, %s114
      %s140 = sphi 0, %s142
      %s143 = sphi 0, %s140
      %s144 = sphi 0, %s143
      %s160 = sphi 0, %s144
    $region4: #{causal_self_attention.4} parent=1 // loop_header_branch
      %27 = sbr.rel (%p25) target = $region8
    $region5: #{causal_self_attention.4} parent=1 // loop_body
      %s29 = ssub.s32 %s24, 1
      %s30 = ssub.s32 %s24, 2
      %s37 = sadd.s32 1, %s32
      %p38 = scmp.ge.s32.totalorder %s37, 3
      %s39 = scalar_select %p38, 0, %s37
      %s40 = sadd.s32 1, %s31
      %s41 = scalar_select %p38, %s40, %s31
      %p42 = scmp.ge.s32.totalorder %s41, 2
      %s43 = scalar_select %p42, 0, %s41
      %s44 = sld [smem:[#allocation9 + %s32]]
      %s45 = sld [smem:[#allocation9 + %s39]]
      %s46 = ssub.s32 %s31, %s43
      %s47 = ssub.s32 %s44, %s45
      %s48 = sor.u32 %s46, %s47
      %p49 = scmp.eq.s32.totalorder %s48, 0
      %s51 = sadd.s32 %s50, 1
      %s52 = scalar_select %p49, %s50, %s51
      %p55 = pneg %p49
      %p56 = scmp.eq.s32.totalorder %s24, 5
      %p57 = por %p55, %p56
      %p58 = scmp.ne.s32.totalorder %s50, %s53
      %p59 = scmp.eq.s32.totalorder %s24, 0
      %p60 = por %p58, %p59
      %p61 = scmp.ne.s32.totalorder %s50, %s53
      %p62 = scmp.eq.s32.totalorder %s29, 5
      %p63 = por %p61, %p62
      %p64 = scmp.ne.s32.totalorder %s53, %s54
      %p65 = scmp.eq.s32.totalorder %s29, 0
      %p66 = por %p64, %p65
      %p67 = scmp.ne.s32.totalorder %s53, %s54
      %p68 = scmp.eq.s32.totalorder %s30, 5
      %p69 = por %p67, %p68
      %p71 = scmp.ne.s32.totalorder %s54, %s70
      %p72 = scmp.eq.s32.totalorder %s30, 0
      %p73 = por %p71, %p72
      %s74 = sld [smem:[#allocation10 + %s32]]
      %s75 = sld [smem:[#allocation10 + %s39]]
      %s76 = ssub.s32 %s31, %s43
      %s77 = ssub.s32 %s74, %s75
      %s78 = sor.u32 %s76, %s77
      %p79 = scmp.eq.s32.totalorder %s78, 0
      %s81 = sadd.s32 %s80, 1
      %s82 = scalar_select %p79, %s80, %s81
      %p85 = pneg %p79
      %p86 = scmp.eq.s32.totalorder %s24, 5
      %p87 = por %p85, %p86
      %p88 = scmp.ne.s32.totalorder %s80, %s83
      %p89 = scmp.eq.s32.totalorder %s24, 0
      %p90 = por %p88, %p89
      %p91 = scmp.ne.s32.totalorder %s80, %s83
      %p92 = scmp.eq.s32.totalorder %s29, 5
      %p93 = por %p91, %p92
      %p94 = scmp.ne.s32.totalorder %s83, %s84
      %p95 = scmp.eq.s32.totalorder %s29, 0
      %p96 = por %p94, %p95
      %p97 = scmp.ne.s32.totalorder %s83, %s84
      %p98 = scmp.eq.s32.totalorder %s30, 5
      %p99 = por %p97, %p98
      %p101 = scmp.ne.s32.totalorder %s84, %s100
      %p102 = scmp.eq.s32.totalorder %s30, 0
      %p103 = por %p101, %p102
      %s104 = sld [smem:[#allocation10 + %s32]]
      %s105 = sld [smem:[#allocation10 + %s39]]
      %s106 = ssub.s32 %s31, %s43
      %s107 = ssub.s32 %s104, %s105
      %s108 = sor.u32 %s106, %s107
      %p109 = scmp.eq.s32.totalorder %s108, 0
      %s111 = sadd.s32 %s110, 1
      %s112 = scalar_select %p109, %s110, %s111
      %p115 = pneg %p109
      %p116 = scmp.eq.s32.totalorder %s24, 5
      %p117 = por %p115, %p116
      %p118 = scmp.ne.s32.totalorder %s110, %s113
      %p119 = scmp.eq.s32.totalorder %s24, 0
      %p120 = por %p118, %p119
      %p121 = scmp.ne.s32.totalorder %s110, %s113
      %p122 = scmp.eq.s32.totalorder %s29, 5
      %p123 = por %p121, %p122
      %p124 = scmp.ne.s32.totalorder %s113, %s114
      %p125 = scmp.eq.s32.totalorder %s29, 0
      %p126 = por %p124, %p125
      %p127 = scmp.ne.s32.totalorder %s113, %s114
      %p128 = scmp.eq.s32.totalorder %s30, 5
      %p129 = por %p127, %p128
      %p131 = scmp.ne.s32.totalorder %s114, %s130
      %p132 = scmp.eq.s32.totalorder %s30, 0
      %p133 = por %p131, %p132
      %s134 = sld [smem:[#allocation9 + %s32]]
      %s135 = sld [smem:[#allocation9 + %s39]]
      %s136 = ssub.s32 %s31, %s43
      %s137 = ssub.s32 %s134, %s135
      %s138 = sor.u32 %s136, %s137
      %p139 = scmp.eq.s32.totalorder %s138, 0
      %s141 = sadd.s32 %s140, 1
      %s142 = scalar_select %p139, %s140, %s141
      %p145 = pneg %p139
      %p146 = scmp.eq.s32.totalorder %s24, 5
      %p147 = por %p145, %p146
      %p148 = scmp.ne.s32.totalorder %s140, %s143
      %p149 = scmp.eq.s32.totalorder %s24, 0
      %p150 = por %p148, %p149
      %p151 = scmp.ne.s32.totalorder %s140, %s143
      %p152 = scmp.eq.s32.totalorder %s29, 5
      %p153 = por %p151, %p152
      %p154 = scmp.ne.s32.totalorder %s143, %s144
      %p155 = scmp.eq.s32.totalorder %s29, 0
      %p156 = por %p154, %p155
      %p157 = scmp.ne.s32.totalorder %s143, %s144
      %p158 = scmp.eq.s32.totalorder %s30, 5
      %p159 = por %p157, %p158
      %p161 = scmp.ne.s32.totalorder %s144, %s160
      %p162 = scmp.eq.s32.totalorder %s30, 0
      %p163 = por %p161, %p162
      %p164 = scmp.le.s32.totalorder 1, %s24
      %p165 = scmp.lt.s32.totalorder %s24, 7
      %p166 = pnand %p164, %p165
      %p167 = pneg %p166
      // Predicated region
      $region9: #{causal_self_attention.4} parent=5 // pred_check
        _
      $region10: #{causal_self_attention.4} parent=5 // pred_check_branch
        %169 = sbr.rel (%p166) target = $region12
      $region11: #{causal_self_attention.4} parent=5 // pred_region
        %s170 = ssub.s32 %s24, 1
      $region12: #{causal_self_attention.4} parent=5 // pred_fallthru
        _
      %p171 = scmp.lt.s32.totalorder %s24, 6
      // Predicated region
      $region13: #{causal_self_attention.4} parent=5 // pred_check
        %p172 = pneg %p171
      $region14: #{causal_self_attention.4} parent=5 // pred_check_branch
        %174 = sbr.rel (%p172) target = $region16
      $region15: #{causal_self_attention.4} parent=5 // pred_region
        // Predicated region
        $region17: #{causal_self_attention.4} parent=15 // pred_check
          %p175 = pneg %p60
        $region18: #{causal_self_attention.4} parent=15 // pred_check_branch
          %177 = sbr.rel (%p175) target = $region20
        $region19: #{causal_self_attention.4} parent=15 // pred_region
          %s178 = sand.u32 %s50, 1
          %s179 = sand.u32 %s50, 1
          %s180 = smul.addr %s179, 64
          %s181 = scalar_lea.vmem [#allocation11], %s180
          %s182 = sld [smem:[#allocation9 + %s32]]
          %s183 = smul.u32 16, %s182
          %s184 = smul.addr %s183, 3
          %s185 = smul.addr %s31, 96
          %s186 = sadd.s32 %s184, %s185
          %s187 = smul.addr %s186, 4
          %s188 = scalar_lea.vmem %s2, %s187
          // Predicated region
          $region21: #{causal_self_attention.4} parent=19 // pred_check
            _
          $region22: #{causal_self_attention.4} parent=19 // pred_check_branch
            %190 = sbr.rel (0) target = $region24
          $region23: #{causal_self_attention.4} parent=19 // pred_region
            // Predicated region
            $region25: #{causal_self_attention.4} parent=23 // pred_check
              _
            $region26: #{causal_self_attention.4} parent=23 // pred_check_branch
              %192 = sbr.rel target = $region28
            $region27: #{causal_self_attention.4} parent=23 // pred_region
              // Predicated region
              $region40: #{causal_self_attention.4} parent=27 // pred_check
                _
              $region41: #{causal_self_attention.4} parent=27 // pred_check_branch
                %238 = sbr.rel (0) target = $region43
              $region42: #{causal_self_attention.4} parent=27 // pred_region
                loop: start=0, step=1, limit=1
                $region44: #{causal_self_attention.4} parent=42 // loop_pre_header
                  _
                $region45: #{causal_self_attention.4} parent=42 // loop_header
                  %s240 = sphi 0, %s244
                  %p241 = scmp.ge.s32.totalorder %s240, 1
                  %s245 = sphi %s188, %s188
                  %s246 = sphi %s181, %s181
                $region46: #{causal_self_attention.4} parent=42 // loop_header_branch
                  %243 = sbr.rel (%p241) target = $region50
                $region47: #{causal_self_attention.4} parent=42 // loop_body
                  _
                $region48: #{causal_self_attention.4} parent=42 // loop_footer
                  %s244 = sadd.s32 1, %s240
                $region49: #{causal_self_attention.4} parent=42 // loop_footer_branch
                  %239 = sbr.rel target = $region45
                $region50: #{causal_self_attention.4} parent=42 // loop_exit
                  _
                %s248 = ssub.s32 16, 1
                loop: start=0, step=1, limit=1
                $region51: #{causal_self_attention.4} parent=42 // loop_pre_header
                  _
                $region52: #{causal_self_attention.4} parent=42 // loop_header
                  %s250 = sphi 0, %s254
                  %p251 = scmp.ge.s32.totalorder %s250, 1
                  %s255 = sphi %s188, %s188
                  %s256 = sphi %s181, %s181
                $region53: #{causal_self_attention.4} parent=42 // loop_header_branch
                  %253 = sbr.rel (%p251) target = $region57
                $region54: #{causal_self_attention.4} parent=42 // loop_body
                  %v257 = vld [vmem:[%s255] sm:%s248]
                  %258 = vst [vmem:[%s256] sm:%s248] %v257
                  %v259 = vld [vmem:[%s255 + $0xc] sm:%s248]
                  %260 = vst [vmem:[%s256 + $0x4] sm:%s248] %v259
                  %v261 = vld [vmem:[%s255 + $0x18] sm:%s248]
                  %262 = vst [vmem:[%s256 + $0x8] sm:%s248] %v261
                  %v263 = vld [vmem:[%s255 + $0x24] sm:%s248]
                  %264 = vst [vmem:[%s256 + $0xc] sm:%s248] %v263
                  %v265 = vld [vmem:[%s255 + $0x30] sm:%s248]
                  %266 = vst [vmem:[%s256 + $0x10] sm:%s248] %v265
                  %v267 = vld [vmem:[%s255 + $0x3c] sm:%s248]
                  %268 = vst [vmem:[%s256 + $0x14] sm:%s248] %v267
                  %v269 = vld [vmem:[%s255 + $0x48] sm:%s248]
                  %270 = vst [vmem:[%s256 + $0x18] sm:%s248] %v269
                  %v271 = vld [vmem:[%s255 + $0x54] sm:%s248]
                  %272 = vst [vmem:[%s256 + $0x1c] sm:%s248] %v271
                  %v273 = vld [vmem:[%s255 + $0x60] sm:%s248]
                  %274 = vst [vmem:[%s256 + $0x20] sm:%s248] %v273
                  %v275 = vld [vmem:[%s255 + $0x6c] sm:%s248]
                  %276 = vst [vmem:[%s256 + $0x24] sm:%s248] %v275
                  %v277 = vld [vmem:[%s255 + $0x78] sm:%s248]
                  %278 = vst [vmem:[%s256 + $0x28] sm:%s248] %v277
                  %v279 = vld [vmem:[%s255 + $0x84] sm:%s248]
                  %280 = vst [vmem:[%s256 + $0x2c] sm:%s248] %v279
                  %v281 = vld [vmem:[%s255 + $0x90] sm:%s248]
                  %282 = vst [vmem:[%s256 + $0x30] sm:%s248] %v281
                  %v283 = vld [vmem:[%s255 + $0x9c] sm:%s248]
                  %284 = vst [vmem:[%s256 + $0x34] sm:%s248] %v283
                  %v285 = vld [vmem:[%s255 + $0xa8] sm:%s248]
                  %286 = vst [vmem:[%s256 + $0x38] sm:%s248] %v285
                  %v287 = vld [vmem:[%s255 + $0xb4] sm:%s248]
                  %288 = vst [vmem:[%s256 + $0x3c] sm:%s248] %v287
                $region55: #{causal_self_attention.4} parent=42 // loop_footer
                  %s254 = sadd.s32 1, %s250
                $region56: #{causal_self_attention.4} parent=42 // loop_footer_branch
                  %249 = sbr.rel target = $region52
                $region57: #{causal_self_attention.4} parent=42 // loop_exit
                  _
              $region43: #{causal_self_attention.4} parent=27 // pred_fallthru
                _
            $region28: #{causal_self_attention.4} parent=23 // pred_fallthru
              _
            // Predicated region
            $region29: #{causal_self_attention.4} parent=23 // pred_check
              _
            $region30: #{causal_self_attention.4} parent=23 // pred_check_branch
              %194 = sbr.rel (0) target = $region32
            $region31: #{causal_self_attention.4} parent=23 // pred_region
              %s196 = ssub.s32 16, 1
              loop: start=0, step=1, limit=1
              $region33: #{causal_self_attention.4} parent=31 // loop_pre_header
                _
              $region34: #{causal_self_attention.4} parent=31 // loop_header
                %s198 = sphi 0, %s202
                %p199 = scmp.ge.s32.totalorder %s198, 1
                %s203 = sphi %s188, %s188
                %s204 = sphi %s181, %s181
              $region35: #{causal_self_attention.4} parent=31 // loop_header_branch
                %201 = sbr.rel (%p199) target = $region39
              $region36: #{causal_self_attention.4} parent=31 // loop_body
                %v205 = vld [vmem:[%s203] sm:%s196]
                %206 = vst [vmem:[%s204] sm:%s196] %v205
                %v207 = vld [vmem:[%s203 + $0xc] sm:%s196]
                %208 = vst [vmem:[%s204 + $0x4] sm:%s196] %v207
                %v209 = vld [vmem:[%s203 + $0x18] sm:%s196]
                %210 = vst [vmem:[%s204 + $0x8] sm:%s196] %v209
                %v211 = vld [vmem:[%s203 + $0x24] sm:%s196]
                %212 = vst [vmem:[%s204 + $0xc] sm:%s196] %v211
                %v213 = vld [vmem:[%s203 + $0x30] sm:%s196]
                %214 = vst [vmem:[%s204 + $0x10] sm:%s196] %v213
                %v215 = vld [vmem:[%s203 + $0x3c] sm:%s196]
                %216 = vst [vmem:[%s204 + $0x14] sm:%s196] %v215
                %v217 = vld [vmem:[%s203 + $0x48] sm:%s196]
                %218 = vst [vmem:[%s204 + $0x18] sm:%s196] %v217
                %v219 = vld [vmem:[%s203 + $0x54] sm:%s196]
                %220 = vst [vmem:[%s204 + $0x1c] sm:%s196] %v219
                %v221 = vld [vmem:[%s203 + $0x60] sm:%s196]
                %222 = vst [vmem:[%s204 + $0x20] sm:%s196] %v221
                %v223 = vld [vmem:[%s203 + $0x6c] sm:%s196]
                %224 = vst [vmem:[%s204 + $0x24] sm:%s196] %v223
                %v225 = vld [vmem:[%s203 + $0x78] sm:%s196]
                %226 = vst [vmem:[%s204 + $0x28] sm:%s196] %v225
                %v227 = vld [vmem:[%s203 + $0x84] sm:%s196]
                %228 = vst [vmem:[%s204 + $0x2c] sm:%s196] %v227
                %v229 = vld [vmem:[%s203 + $0x90] sm:%s196]
                %230 = vst [vmem:[%s204 + $0x30] sm:%s196] %v229
                %v231 = vld [vmem:[%s203 + $0x9c] sm:%s196]
                %232 = vst [vmem:[%s204 + $0x34] sm:%s196] %v231
                %v233 = vld [vmem:[%s203 + $0xa8] sm:%s196]
                %234 = vst [vmem:[%s204 + $0x38] sm:%s196] %v233
                %v235 = vld [vmem:[%s203 + $0xb4] sm:%s196]
                %236 = vst [vmem:[%s204 + $0x3c] sm:%s196] %v235
              $region37: #{causal_self_attention.4} parent=31 // loop_footer
                %s202 = sadd.s32 1, %s198
              $region38: #{causal_self_attention.4} parent=31 // loop_footer_branch
                %197 = sbr.rel target = $region34
              $region39: #{causal_self_attention.4} parent=31 // loop_exit
                _
            $region32: #{causal_self_attention.4} parent=23 // pred_fallthru
              _
          $region24: #{causal_self_attention.4} parent=19 // pred_fallthru
            _
          %289 = vnop
        $region20: #{causal_self_attention.4} parent=15 // pred_fallthru
          _
        // Predicated region
        $region58: #{causal_self_attention.4} parent=15 // pred_check
          %p290 = pneg %p90
        $region59: #{causal_self_attention.4} parent=15 // pred_check_branch
          %292 = sbr.rel (%p290) target = $region61
        $region60: #{causal_self_attention.4} parent=15 // pred_region
          %s293 = sand.u32 %s80, 1
          %s294 = sand.u32 %s80, 1
          %s295 = smul.addr %s294, 64
          %s296 = scalar_lea.vmem [#allocation12], %s295
          %s297 = sld [smem:[#allocation10 + %s32]]
          %s298 = smul.u32 16, %s297
          %s299 = smul.addr %s298, 3
          %s300 = sadd.s32 1, %s299
          %s301 = smul.addr %s31, 96
          %s302 = sadd.s32 %s300, %s301
          %s303 = smul.addr %s302, 4
          %s304 = scalar_lea.vmem %s3, %s303
          // Predicated region
          $region62: #{causal_self_attention.4} parent=60 // pred_check
            _
          $region63: #{causal_self_attention.4} parent=60 // pred_check_branch
            %306 = sbr.rel (0) target = $region65
          $region64: #{causal_self_attention.4} parent=60 // pred_region
            // Predicated region
            $region66: #{causal_self_attention.4} parent=64 // pred_check
              _
            $region67: #{causal_self_attention.4} parent=64 // pred_check_branch
              %308 = sbr.rel target = $region69
            $region68: #{causal_self_attention.4} parent=64 // pred_region
              // Predicated region
              $region81: #{causal_self_attention.4} parent=68 // pred_check
                _
              $region82: #{causal_self_attention.4} parent=68 // pred_check_branch
                %354 = sbr.rel (0) target = $region84
              $region83: #{causal_self_attention.4} parent=68 // pred_region
                loop: start=0, step=1, limit=1
                $region85: #{causal_self_attention.4} parent=83 // loop_pre_header
                  _
                $region86: #{causal_self_attention.4} parent=83 // loop_header
                  %s356 = sphi 0, %s360
                  %p357 = scmp.ge.s32.totalorder %s356, 1
                  %s361 = sphi %s304, %s304
                  %s362 = sphi %s296, %s296
                $region87: #{causal_self_attention.4} parent=83 // loop_header_branch
                  %359 = sbr.rel (%p357) target = $region91
                $region88: #{causal_self_attention.4} parent=83 // loop_body
                  _
                $region89: #{causal_self_attention.4} parent=83 // loop_footer
                  %s360 = sadd.s32 1, %s356
                $region90: #{causal_self_attention.4} parent=83 // loop_footer_branch
                  %355 = sbr.rel target = $region86
                $region91: #{causal_self_attention.4} parent=83 // loop_exit
                  _
                %s364 = ssub.s32 16, 1
                loop: start=0, step=1, limit=1
                $region92: #{causal_self_attention.4} parent=83 // loop_pre_header
                  _
                $region93: #{causal_self_attention.4} parent=83 // loop_header
                  %s366 = sphi 0, %s370
                  %p367 = scmp.ge.s32.totalorder %s366, 1
                  %s371 = sphi %s304, %s304
                  %s372 = sphi %s296, %s296
                $region94: #{causal_self_attention.4} parent=83 // loop_header_branch
                  %369 = sbr.rel (%p367) target = $region98
                $region95: #{causal_self_attention.4} parent=83 // loop_body
                  %v373 = vld [vmem:[%s371] sm:%s364]
                  %374 = vst [vmem:[%s372] sm:%s364] %v373
                  %v375 = vld [vmem:[%s371 + $0xc] sm:%s364]
                  %376 = vst [vmem:[%s372 + $0x4] sm:%s364] %v375
                  %v377 = vld [vmem:[%s371 + $0x18] sm:%s364]
                  %378 = vst [vmem:[%s372 + $0x8] sm:%s364] %v377
                  %v379 = vld [vmem:[%s371 + $0x24] sm:%s364]
                  %380 = vst [vmem:[%s372 + $0xc] sm:%s364] %v379
                  %v381 = vld [vmem:[%s371 + $0x30] sm:%s364]
                  %382 = vst [vmem:[%s372 + $0x10] sm:%s364] %v381
                  %v383 = vld [vmem:[%s371 + $0x3c] sm:%s364]
                  %384 = vst [vmem:[%s372 + $0x14] sm:%s364] %v383
                  %v385 = vld [vmem:[%s371 + $0x48] sm:%s364]
                  %386 = vst [vmem:[%s372 + $0x18] sm:%s364] %v385
                  %v387 = vld [vmem:[%s371 + $0x54] sm:%s364]
                  %388 = vst [vmem:[%s372 + $0x1c] sm:%s364] %v387
                  %v389 = vld [vmem:[%s371 + $0x60] sm:%s364]
                  %390 = vst [vmem:[%s372 + $0x20] sm:%s364] %v389
                  %v391 = vld [vmem:[%s371 + $0x6c] sm:%s364]
                  %392 = vst [vmem:[%s372 + $0x24] sm:%s364] %v391
                  %v393 = vld [vmem:[%s371 + $0x78] sm:%s364]
                  %394 = vst [vmem:[%s372 + $0x28] sm:%s364] %v393
                  %v395 = vld [vmem:[%s371 + $0x84] sm:%s364]
                  %396 = vst [vmem:[%s372 + $0x2c] sm:%s364] %v395
                  %v397 = vld [vmem:[%s371 + $0x90] sm:%s364]
                  %398 = vst [vmem:[%s372 + $0x30] sm:%s364] %v397
                  %v399 = vld [vmem:[%s371 + $0x9c] sm:%s364]
                  %400 = vst [vmem:[%s372 + $0x34] sm:%s364] %v399
                  %v401 = vld [vmem:[%s371 + $0xa8] sm:%s364]
                  %402 = vst [vmem:[%s372 + $0x38] sm:%s364] %v401
                  %v403 = vld [vmem:[%s371 + $0xb4] sm:%s364]
                  %404 = vst [vmem:[%s372 + $0x3c] sm:%s364] %v403
                $region96: #{causal_self_attention.4} parent=83 // loop_footer
                  %s370 = sadd.s32 1, %s366
                $region97: #{causal_self_attention.4} parent=83 // loop_footer_branch
                  %365 = sbr.rel target = $region93
                $region98: #{causal_self_attention.4} parent=83 // loop_exit
                  _
              $region84: #{causal_self_attention.4} parent=68 // pred_fallthru
                _
            $region69: #{causal_self_attention.4} parent=64 // pred_fallthru
              _
            // Predicated region
            $region70: #{causal_self_attention.4} parent=64 // pred_check
              _
            $region71: #{causal_self_attention.4} parent=64 // pred_check_branch
              %310 = sbr.rel (0) target = $region73
            $region72: #{causal_self_attention.4} parent=64 // pred_region
              %s312 = ssub.s32 16, 1
              loop: start=0, step=1, limit=1
              $region74: #{causal_self_attention.4} parent=72 // loop_pre_header
                _
              $region75: #{causal_self_attention.4} parent=72 // loop_header
                %s314 = sphi 0, %s318
                %p315 = scmp.ge.s32.totalorder %s314, 1
                %s319 = sphi %s304, %s304
                %s320 = sphi %s296, %s296
              $region76: #{causal_self_attention.4} parent=72 // loop_header_branch
                %317 = sbr.rel (%p315) target = $region80
              $region77: #{causal_self_attention.4} parent=72 // loop_body
                %v321 = vld [vmem:[%s319] sm:%s312]
                %322 = vst [vmem:[%s320] sm:%s312] %v321
                %v323 = vld [vmem:[%s319 + $0xc] sm:%s312]
                %324 = vst [vmem:[%s320 + $0x4] sm:%s312] %v323
                %v325 = vld [vmem:[%s319 + $0x18] sm:%s312]
                %326 = vst [vmem:[%s320 + $0x8] sm:%s312] %v325
                %v327 = vld [vmem:[%s319 + $0x24] sm:%s312]
                %328 = vst [vmem:[%s320 + $0xc] sm:%s312] %v327
                %v329 = vld [vmem:[%s319 + $0x30] sm:%s312]
                %330 = vst [vmem:[%s320 + $0x10] sm:%s312] %v329
                %v331 = vld [vmem:[%s319 + $0x3c] sm:%s312]
                %332 = vst [vmem:[%s320 + $0x14] sm:%s312] %v331
                %v333 = vld [vmem:[%s319 + $0x48] sm:%s312]
                %334 = vst [vmem:[%s320 + $0x18] sm:%s312] %v333
                %v335 = vld [vmem:[%s319 + $0x54] sm:%s312]
                %336 = vst [vmem:[%s320 + $0x1c] sm:%s312] %v335
                %v337 = vld [vmem:[%s319 + $0x60] sm:%s312]
                %338 = vst [vmem:[%s320 + $0x20] sm:%s312] %v337
                %v339 = vld [vmem:[%s319 + $0x6c] sm:%s312]
                %340 = vst [vmem:[%s320 + $0x24] sm:%s312] %v339
                %v341 = vld [vmem:[%s319 + $0x78] sm:%s312]
                %342 = vst [vmem:[%s320 + $0x28] sm:%s312] %v341
                %v343 = vld [vmem:[%s319 + $0x84] sm:%s312]
                %344 = vst [vmem:[%s320 + $0x2c] sm:%s312] %v343
                %v345 = vld [vmem:[%s319 + $0x90] sm:%s312]
                %346 = vst [vmem:[%s320 + $0x30] sm:%s312] %v345
                %v347 = vld [vmem:[%s319 + $0x9c] sm:%s312]
                %348 = vst [vmem:[%s320 + $0x34] sm:%s312] %v347
                %v349 = vld [vmem:[%s319 + $0xa8] sm:%s312]
                %350 = vst [vmem:[%s320 + $0x38] sm:%s312] %v349
                %v351 = vld [vmem:[%s319 + $0xb4] sm:%s312]
                %352 = vst [vmem:[%s320 + $0x3c] sm:%s312] %v351
              $region78: #{causal_self_attention.4} parent=72 // loop_footer
                %s318 = sadd.s32 1, %s314
              $region79: #{causal_self_attention.4} parent=72 // loop_footer_branch
                %313 = sbr.rel target = $region75
              $region80: #{causal_self_attention.4} parent=72 // loop_exit
                _
            $region73: #{causal_self_attention.4} parent=64 // pred_fallthru
              _
          $region65: #{causal_self_attention.4} parent=60 // pred_fallthru
            _
          %405 = vnop
        $region61: #{causal_self_attention.4} parent=15 // pred_fallthru
          _
        // Predicated region
        $region99: #{causal_self_attention.4} parent=15 // pred_check
          %p406 = pneg %p120
        $region100: #{causal_self_attention.4} parent=15 // pred_check_branch
          %408 = sbr.rel (%p406) target = $region102
        $region101: #{causal_self_attention.4} parent=15 // pred_region
          %s409 = sand.u32 %s110, 1
          %s410 = sand.u32 %s110, 1
          %s411 = smul.addr %s410, 64
          %s412 = scalar_lea.vmem [#allocation13], %s411
          %s413 = sld [smem:[#allocation10 + %s32]]
          %s414 = smul.u32 16, %s413
          %s415 = smul.addr %s414, 3
          %s416 = sadd.s32 2, %s415
          %s417 = smul.addr %s31, 96
          %s418 = sadd.s32 %s416, %s417
          %s419 = smul.addr %s418, 4
          %s420 = scalar_lea.vmem %s4, %s419
          // Predicated region
          $region103: #{causal_self_attention.4} parent=101 // pred_check
            _
          $region104: #{causal_self_attention.4} parent=101 // pred_check_branch
            %422 = sbr.rel (0) target = $region106
          $region105: #{causal_self_attention.4} parent=101 // pred_region
            // Predicated region
            $region107: #{causal_self_attention.4} parent=105 // pred_check
              _
            $region108: #{causal_self_attention.4} parent=105 // pred_check_branch
              %424 = sbr.rel target = $region110
            $region109: #{causal_self_attention.4} parent=105 // pred_region
              // Predicated region
              $region122: #{causal_self_attention.4} parent=109 // pred_check
                _
              $region123: #{causal_self_attention.4} parent=109 // pred_check_branch
                %470 = sbr.rel (0) target = $region125
              $region124: #{causal_self_attention.4} parent=109 // pred_region
                loop: start=0, step=1, limit=1
                $region126: #{causal_self_attention.4} parent=124 // loop_pre_header
                  _
                $region127: #{causal_self_attention.4} parent=124 // loop_header
                  %s472 = sphi 0, %s476
                  %p473 = scmp.ge.s32.totalorder %s472, 1
                  %s477 = sphi %s420, %s420
                  %s478 = sphi %s412, %s412
                $region128: #{causal_self_attention.4} parent=124 // loop_header_branch
                  %475 = sbr.rel (%p473) target = $region132
                $region129: #{causal_self_attention.4} parent=124 // loop_body
                  _
                $region130: #{causal_self_attention.4} parent=124 // loop_footer
                  %s476 = sadd.s32 1, %s472
                $region131: #{causal_self_attention.4} parent=124 // loop_footer_branch
                  %471 = sbr.rel target = $region127
                $region132: #{causal_self_attention.4} parent=124 // loop_exit
                  _
                %s480 = ssub.s32 16, 1
                loop: start=0, step=1, limit=1
                $region133: #{causal_self_attention.4} parent=124 // loop_pre_header
                  _
                $region134: #{causal_self_attention.4} parent=124 // loop_header
                  %s482 = sphi 0, %s486
                  %p483 = scmp.ge.s32.totalorder %s482, 1
                  %s487 = sphi %s420, %s420
                  %s488 = sphi %s412, %s412
                $region135: #{causal_self_attention.4} parent=124 // loop_header_branch
                  %485 = sbr.rel (%p483) target = $region139
                $region136: #{causal_self_attention.4} parent=124 // loop_body
                  %v489 = vld [vmem:[%s487] sm:%s480]
                  %490 = vst [vmem:[%s488] sm:%s480] %v489
                  %v491 = vld [vmem:[%s487 + $0xc] sm:%s480]
                  %492 = vst [vmem:[%s488 + $0x4] sm:%s480] %v491
                  %v493 = vld [vmem:[%s487 + $0x18] sm:%s480]
                  %494 = vst [vmem:[%s488 + $0x8] sm:%s480] %v493
                  %v495 = vld [vmem:[%s487 + $0x24] sm:%s480]
                  %496 = vst [vmem:[%s488 + $0xc] sm:%s480] %v495
                  %v497 = vld [vmem:[%s487 + $0x30] sm:%s480]
                  %498 = vst [vmem:[%s488 + $0x10] sm:%s480] %v497
                  %v499 = vld [vmem:[%s487 + $0x3c] sm:%s480]
                  %500 = vst [vmem:[%s488 + $0x14] sm:%s480] %v499
                  %v501 = vld [vmem:[%s487 + $0x48] sm:%s480]
                  %502 = vst [vmem:[%s488 + $0x18] sm:%s480] %v501
                  %v503 = vld [vmem:[%s487 + $0x54] sm:%s480]
                  %504 = vst [vmem:[%s488 + $0x1c] sm:%s480] %v503
                  %v505 = vld [vmem:[%s487 + $0x60] sm:%s480]
                  %506 = vst [vmem:[%s488 + $0x20] sm:%s480] %v505
                  %v507 = vld [vmem:[%s487 + $0x6c] sm:%s480]
                  %508 = vst [vmem:[%s488 + $0x24] sm:%s480] %v507
                  %v509 = vld [vmem:[%s487 + $0x78] sm:%s480]
                  %510 = vst [vmem:[%s488 + $0x28] sm:%s480] %v509
                  %v511 = vld [vmem:[%s487 + $0x84] sm:%s480]
                  %512 = vst [vmem:[%s488 + $0x2c] sm:%s480] %v511
                  %v513 = vld [vmem:[%s487 + $0x90] sm:%s480]
                  %514 = vst [vmem:[%s488 + $0x30] sm:%s480] %v513
                  %v515 = vld [vmem:[%s487 + $0x9c] sm:%s480]
                  %516 = vst [vmem:[%s488 + $0x34] sm:%s480] %v515
                  %v517 = vld [vmem:[%s487 + $0xa8] sm:%s480]
                  %518 = vst [vmem:[%s488 + $0x38] sm:%s480] %v517
                  %v519 = vld [vmem:[%s487 + $0xb4] sm:%s480]
                  %520 = vst [vmem:[%s488 + $0x3c] sm:%s480] %v519
                $region137: #{causal_self_attention.4} parent=124 // loop_footer
                  %s486 = sadd.s32 1, %s482
                $region138: #{causal_self_attention.4} parent=124 // loop_footer_branch
                  %481 = sbr.rel target = $region134
                $region139: #{causal_self_attention.4} parent=124 // loop_exit
                  _
              $region125: #{causal_self_attention.4} parent=109 // pred_fallthru
                _
            $region110: #{causal_self_attention.4} parent=105 // pred_fallthru
              _
            // Predicated region
            $region111: #{causal_self_attention.4} parent=105 // pred_check
              _
            $region112: #{causal_self_attention.4} parent=105 // pred_check_branch
              %426 = sbr.rel (0) target = $region114
            $region113: #{causal_self_attention.4} parent=105 // pred_region
              %s428 = ssub.s32 16, 1
              loop: start=0, step=1, limit=1
              $region115: #{causal_self_attention.4} parent=113 // loop_pre_header
                _
              $region116: #{causal_self_attention.4} parent=113 // loop_header
                %s430 = sphi 0, %s434
                %p431 = scmp.ge.s32.totalorder %s430, 1
                %s435 = sphi %s420, %s420
                %s436 = sphi %s412, %s412
              $region117: #{causal_self_attention.4} parent=113 // loop_header_branch
                %433 = sbr.rel (%p431) target = $region121
              $region118: #{causal_self_attention.4} parent=113 // loop_body
                %v437 = vld [vmem:[%s435] sm:%s428]
                %438 = vst [vmem:[%s436] sm:%s428] %v437
                %v439 = vld [vmem:[%s435 + $0xc] sm:%s428]
                %440 = vst [vmem:[%s436 + $0x4] sm:%s428] %v439
                %v441 = vld [vmem:[%s435 + $0x18] sm:%s428]
                %442 = vst [vmem:[%s436 + $0x8] sm:%s428] %v441
                %v443 = vld [vmem:[%s435 + $0x24] sm:%s428]
                %444 = vst [vmem:[%s436 + $0xc] sm:%s428] %v443
                %v445 = vld [vmem:[%s435 + $0x30] sm:%s428]
                %446 = vst [vmem:[%s436 + $0x10] sm:%s428] %v445
                %v447 = vld [vmem:[%s435 + $0x3c] sm:%s428]
                %448 = vst [vmem:[%s436 + $0x14] sm:%s428] %v447
                %v449 = vld [vmem:[%s435 + $0x48] sm:%s428]
                %450 = vst [vmem:[%s436 + $0x18] sm:%s428] %v449
                %v451 = vld [vmem:[%s435 + $0x54] sm:%s428]
                %452 = vst [vmem:[%s436 + $0x1c] sm:%s428] %v451
                %v453 = vld [vmem:[%s435 + $0x60] sm:%s428]
                %454 = vst [vmem:[%s436 + $0x20] sm:%s428] %v453
                %v455 = vld [vmem:[%s435 + $0x6c] sm:%s428]
                %456 = vst [vmem:[%s436 + $0x24] sm:%s428] %v455
                %v457 = vld [vmem:[%s435 + $0x78] sm:%s428]
                %458 = vst [vmem:[%s436 + $0x28] sm:%s428] %v457
                %v459 = vld [vmem:[%s435 + $0x84] sm:%s428]
                %460 = vst [vmem:[%s436 + $0x2c] sm:%s428] %v459
                %v461 = vld [vmem:[%s435 + $0x90] sm:%s428]
                %462 = vst [vmem:[%s436 + $0x30] sm:%s428] %v461
                %v463 = vld [vmem:[%s435 + $0x9c] sm:%s428]
                %464 = vst [vmem:[%s436 + $0x34] sm:%s428] %v463
                %v465 = vld [vmem:[%s435 + $0xa8] sm:%s428]
                %466 = vst [vmem:[%s436 + $0x38] sm:%s428] %v465
                %v467 = vld [vmem:[%s435 + $0xb4] sm:%s428]
                %468 = vst [vmem:[%s436 + $0x3c] sm:%s428] %v467
              $region119: #{causal_self_attention.4} parent=113 // loop_footer
                %s434 = sadd.s32 1, %s430
              $region120: #{causal_self_attention.4} parent=113 // loop_footer_branch
                %429 = sbr.rel target = $region116
              $region121: #{causal_self_attention.4} parent=113 // loop_exit
                _
            $region114: #{causal_self_attention.4} parent=105 // pred_fallthru
              _
          $region106: #{causal_self_attention.4} parent=101 // pred_fallthru
            _
          %521 = vnop
        $region102: #{causal_self_attention.4} parent=15 // pred_fallthru
          _
      $region16: #{causal_self_attention.4} parent=5 // pred_fallthru
        _
      %p522 = scmp.le.s32.totalorder 1, %s24
      %p523 = scmp.lt.s32.totalorder %s24, 7
      %p524 = pnand %p522, %p523
      %p525 = pneg %p524
      // Predicated region
      $region140: #{causal_self_attention.4} parent=5 // pred_check
        _
      $region141: #{causal_self_attention.4} parent=5 // pred_check_branch
        %527 = sbr.rel (%p524) target = $region143
      $region142: #{causal_self_attention.4} parent=5 // pred_region
        %s528 = ssub.s32 %s24, 1
        %s529 = sand.u32 %s53, 1
        %s530 = sand.u32 %s53, 1
        %s531 = smul.addr %s530, 64
        %s532 = scalar_lea.vmem [#allocation11], %s531
        // Predicated region
        $region144: #{causal_self_attention.4} parent=142 // pred_check
          %p533 = pneg %p66
        $region145: #{causal_self_attention.4} parent=142 // pred_check_branch
          %535 = sbr.rel (%p533) target = $region147
        $region146: #{causal_self_attention.4} parent=142 // pred_region
          _
        $region147: #{causal_self_attention.4} parent=142 // pred_fallthru
          _
        %s536 = sand.u32 %s83, 1
        %s537 = sand.u32 %s83, 1
        %s538 = smul.addr %s537, 64
        %s539 = scalar_lea.vmem [#allocation12], %s538
        // Predicated region
        $region148: #{causal_self_attention.4} parent=142 // pred_check
          %p540 = pneg %p96
        $region149: #{causal_self_attention.4} parent=142 // pred_check_branch
          %542 = sbr.rel (%p540) target = $region151
        $region150: #{causal_self_attention.4} parent=142 // pred_region
          _
        $region151: #{causal_self_attention.4} parent=142 // pred_fallthru
          _
        %s543 = sand.u32 %s113, 1
        %s544 = sand.u32 %s113, 1
        %s545 = smul.addr %s544, 64
        %s546 = scalar_lea.vmem [#allocation13], %s545
        // Predicated region
        $region152: #{causal_self_attention.4} parent=142 // pred_check
          %p547 = pneg %p126
        $region153: #{causal_self_attention.4} parent=142 // pred_check_branch
          %549 = sbr.rel (%p547) target = $region155
        $region154: #{causal_self_attention.4} parent=142 // pred_region
          _
        $region155: #{causal_self_attention.4} parent=142 // pred_fallthru
          _
        %s550 = sand.u32 %s53, 1
        %s551 = sand.u32 %s53, 1
        %s552 = smul.addr %s551, 64
        %s553 = scalar_lea.vmem [#allocation11], %s552
        %p554 = pneg %p66
        %p555 = pneg %p63
        %s556 = sand.u32 %s83, 1
        %s557 = sand.u32 %s83, 1
        %s558 = smul.addr %s557, 64
        %s559 = scalar_lea.vmem [#allocation12], %s558
        %p560 = pneg %p96
        %p561 = pneg %p93
        %s562 = sand.u32 %s113, 1
        %s563 = sand.u32 %s113, 1
        %s564 = smul.addr %s563, 64
        %s565 = scalar_lea.vmem [#allocation13], %s564
        %p566 = pneg %p126
        %p567 = pneg %p123
        %p568 = pneg %p156
        %p569 = pneg %p153
        %s570 = sld [smem:[#allocation9 + %s34]]
        %s571 = smul.u32 16, %s570
        %p572 = scmp.lt.s32.totalorder %s33, 1
        %s573 = scalar_select %p572, %s33, 1
        %p574 = scmp.lt.s32.totalorder %s571, 31
        %s575 = scalar_select %p574, %s571, 31
        %s576 = smul.addr %s573, 32
        %s577 = sadd.s32 %s575, %s576
        %s578 = smul.addr %s577, 4
        %s579 = scalar_lea.vmem %s5, %s578
        %s580 = sld [smem:[#allocation9 + %s34]]
        %s581 = smul.u32 16, %s580
        %s582 = sld [smem:[#allocation10 + %s34]]
        %s583 = smul.u32 16, %s582
        %s584 = sld [smem:[#allocation10 + %s34]]
        %s585 = smul.u32 16, %s584
        %s586 = sld [smem:[#allocation9 + %s34]]
        %s587 = smul.u32 16, %s586
        %p588 = scmp.lt.s32.totalorder %s33, 1
        %s589 = scalar_select %p588, %s33, 1
        %p590 = scmp.lt.s32.totalorder %s587, 31
        %s591 = scalar_select %p590, %s587, 31
        %s592 = smul.addr %s589, 32
        %s593 = sadd.s32 %s591, %s592
        %s594 = smul.addr %s593, 4
        %s595 = scalar_lea.vmem %s5, %s594
        %s596 = sld [smem:[#allocation9 + %s34]]
        %s597 = smul.u32 16, %s596
        %s598 = sld [smem:[#allocation9 + %s34]]
        %s599 = sld [smem:[#allocation10 + %s34]]
        %p600 = scmp.eq.s32.totalorder %s599, 0
        // Predicated region
        $region156: #{causal_self_attention.4} parent=142 // pred_check
          %p601 = pneg %p600
        $region157: #{causal_self_attention.4} parent=142 // pred_check_branch
          %603 = sbr.rel (%p601) target = $region159
        $region158: #{causal_self_attention.4} parent=142 // pred_region
          %vm604 = vcmask 7168
          %605 = vst.msk [vmem:[#allocation2] sm:$0xff] %vm604, -1e+30
          %606 = vst.msk [vmem:[#allocation2 + $0x8] sm:$0xff] %vm604, -1e+30
          %607 = vst.msk [vmem:[#allocation2 + $0x10] sm:$0xff] %vm604, -1e+30
          %608 = vst.msk [vmem:[#allocation2 + $0x18] sm:$0xff] %vm604, -1e+30
          %609 = vst.msk [vmem:[#allocation2 + $0x20] sm:$0xff] %vm604, -1e+30
          %610 = vst.msk [vmem:[#allocation2 + $0x28] sm:$0xff] %vm604, -1e+30
          %611 = vst.msk [vmem:[#allocation2 + $0x30] sm:$0xff] %vm604, -1e+30
          %612 = vst.msk [vmem:[#allocation2 + $0x38] sm:$0xff] %vm604, -1e+30
          %613 = vst.msk [vmem:[#allocation2 + $0x40] sm:$0xff] %vm604, -1e+30
          %614 = vst.msk [vmem:[#allocation2 + $0x48] sm:$0xff] %vm604, -1e+30
          %615 = vst.msk [vmem:[#allocation2 + $0x50] sm:$0xff] %vm604, -1e+30
          %616 = vst.msk [vmem:[#allocation2 + $0x58] sm:$0xff] %vm604, -1e+30
          %617 = vst.msk [vmem:[#allocation2 + $0x60] sm:$0xff] %vm604, -1e+30
          %618 = vst.msk [vmem:[#allocation2 + $0x68] sm:$0xff] %vm604, -1e+30
          %619 = vst.msk [vmem:[#allocation2 + $0x70] sm:$0xff] %vm604, -1e+30
          %620 = vst.msk [vmem:[#allocation2 + $0x78] sm:$0xff] %vm604, -1e+30
          %621 = vst.msk [vmem:[#allocation2 + $0x80] sm:$0xff] %vm604, -1e+30
          %622 = vst.msk [vmem:[#allocation2 + $0x88] sm:$0xff] %vm604, -1e+30
          %623 = vst.msk [vmem:[#allocation2 + $0x90] sm:$0xff] %vm604, -1e+30
          %624 = vst.msk [vmem:[#allocation2 + $0x98] sm:$0xff] %vm604, -1e+30
          %625 = vst.msk [vmem:[#allocation2 + $0xa0] sm:$0xff] %vm604, -1e+30
          %626 = vst.msk [vmem:[#allocation2 + $0xa8] sm:$0xff] %vm604, -1e+30
          %627 = vst.msk [vmem:[#allocation2 + $0xb0] sm:$0xff] %vm604, -1e+30
          %628 = vst.msk [vmem:[#allocation2 + $0xb8] sm:$0xff] %vm604, -1e+30
          %629 = vst.msk [vmem:[#allocation2 + $0xc0] sm:$0xff] %vm604, -1e+30
          %630 = vst.msk [vmem:[#allocation2 + $0xc8] sm:$0xff] %vm604, -1e+30
          %631 = vst.msk [vmem:[#allocation2 + $0xd0] sm:$0xff] %vm604, -1e+30
          %632 = vst.msk [vmem:[#allocation2 + $0xd8] sm:$0xff] %vm604, -1e+30
          %633 = vst.msk [vmem:[#allocation2 + $0xe0] sm:$0xff] %vm604, -1e+30
          %634 = vst.msk [vmem:[#allocation2 + $0xe8] sm:$0xff] %vm604, -1e+30
          %635 = vst.msk [vmem:[#allocation2 + $0xf0] sm:$0xff] %vm604, -1e+30
          %636 = vst.msk [vmem:[#allocation2 + $0xf8] sm:$0xff] %vm604, -1e+30
          %637 = vst.msk [vmem:[#allocation3] sm:$0xff] %vm604, 0.0
          %638 = vst.msk [vmem:[#allocation3 + $0x8] sm:$0xff] %vm604, 0.0
          %639 = vst.msk [vmem:[#allocation3 + $0x10] sm:$0xff] %vm604, 0.0
          %640 = vst.msk [vmem:[#allocation3 + $0x18] sm:$0xff] %vm604, 0.0
          %641 = vst.msk [vmem:[#allocation3 + $0x20] sm:$0xff] %vm604, 0.0
          %642 = vst.msk [vmem:[#allocation3 + $0x28] sm:$0xff] %vm604, 0.0
          %643 = vst.msk [vmem:[#allocation3 + $0x30] sm:$0xff] %vm604, 0.0
          %644 = vst.msk [vmem:[#allocation3 + $0x38] sm:$0xff] %vm604, 0.0
          %645 = vst.msk [vmem:[#allocation3 + $0x40] sm:$0xff] %vm604, 0.0
          %646 = vst.msk [vmem:[#allocation3 + $0x48] sm:$0xff] %vm604, 0.0
          %647 = vst.msk [vmem:[#allocation3 + $0x50] sm:$0xff] %vm604, 0.0
          %648 = vst.msk [vmem:[#allocation3 + $0x58] sm:$0xff] %vm604, 0.0
          %649 = vst.msk [vmem:[#allocation3 + $0x60] sm:$0xff] %vm604, 0.0
          %650 = vst.msk [vmem:[#allocation3 + $0x68] sm:$0xff] %vm604, 0.0
          %651 = vst.msk [vmem:[#allocation3 + $0x70] sm:$0xff] %vm604, 0.0
          %652 = vst.msk [vmem:[#allocation3 + $0x78] sm:$0xff] %vm604, 0.0
          %653 = vst.msk [vmem:[#allocation3 + $0x80] sm:$0xff] %vm604, 0.0
          %654 = vst.msk [vmem:[#allocation3 + $0x88] sm:$0xff] %vm604, 0.0
          %655 = vst.msk [vmem:[#allocation3 + $0x90] sm:$0xff] %vm604, 0.0
          %656 = vst.msk [vmem:[#allocation3 + $0x98] sm:$0xff] %vm604, 0.0
          %657 = vst.msk [vmem:[#allocation3 + $0xa0] sm:$0xff] %vm604, 0.0
          %658 = vst.msk [vmem:[#allocation3 + $0xa8] sm:$0xff] %vm604, 0.0
          %659 = vst.msk [vmem:[#allocation3 + $0xb0] sm:$0xff] %vm604, 0.0
          %660 = vst.msk [vmem:[#allocation3 + $0xb8] sm:$0xff] %vm604, 0.0
          %661 = vst.msk [vmem:[#allocation3 + $0xc0] sm:$0xff] %vm604, 0.0
          %662 = vst.msk [vmem:[#allocation3 + $0xc8] sm:$0xff] %vm604, 0.0
          %663 = vst.msk [vmem:[#allocation3 + $0xd0] sm:$0xff] %vm604, 0.0
          %664 = vst.msk [vmem:[#allocation3 + $0xd8] sm:$0xff] %vm604, 0.0
          %665 = vst.msk [vmem:[#allocation3 + $0xe0] sm:$0xff] %vm604, 0.0
          %666 = vst.msk [vmem:[#allocation3 + $0xe8] sm:$0xff] %vm604, 0.0
          %667 = vst.msk [vmem:[#allocation3 + $0xf0] sm:$0xff] %vm604, 0.0
          %668 = vst.msk [vmem:[#allocation3 + $0xf8] sm:$0xff] %vm604, 0.0
          %vm669 = vcmask 523264
          %670 = vst.msk [vmem:[#allocation4] sm:$0xff] %vm669, 0.0
          %671 = vst.msk [vmem:[#allocation4 + $0x8] sm:$0xff] %vm669, 0.0
          %672 = vst.msk [vmem:[#allocation4 + $0x10] sm:$0xff] %vm669, 0.0
          %673 = vst.msk [vmem:[#allocation4 + $0x18] sm:$0xff] %vm669, 0.0
          %674 = vst.msk [vmem:[#allocation4 + $0x20] sm:$0xff] %vm669, 0.0
          %675 = vst.msk [vmem:[#allocation4 + $0x28] sm:$0xff] %vm669, 0.0
          %676 = vst.msk [vmem:[#allocation4 + $0x30] sm:$0xff] %vm669, 0.0
          %677 = vst.msk [vmem:[#allocation4 + $0x38] sm:$0xff] %vm669, 0.0
          %678 = vst.msk [vmem:[#allocation4 + $0x40] sm:$0xff] %vm669, 0.0
          %679 = vst.msk [vmem:[#allocation4 + $0x48] sm:$0xff] %vm669, 0.0
          %680 = vst.msk [vmem:[#allocation4 + $0x50] sm:$0xff] %vm669, 0.0
          %681 = vst.msk [vmem:[#allocation4 + $0x58] sm:$0xff] %vm669, 0.0
          %682 = vst.msk [vmem:[#allocation4 + $0x60] sm:$0xff] %vm669, 0.0
          %683 = vst.msk [vmem:[#allocation4 + $0x68] sm:$0xff] %vm669, 0.0
          %684 = vst.msk [vmem:[#allocation4 + $0x70] sm:$0xff] %vm669, 0.0
          %685 = vst.msk [vmem:[#allocation4 + $0x78] sm:$0xff] %vm669, 0.0
          %686 = vst.msk [vmem:[#allocation4 + $0x80] sm:$0xff] %vm669, 0.0
          %687 = vst.msk [vmem:[#allocation4 + $0x88] sm:$0xff] %vm669, 0.0
          %688 = vst.msk [vmem:[#allocation4 + $0x90] sm:$0xff] %vm669, 0.0
          %689 = vst.msk [vmem:[#allocation4 + $0x98] sm:$0xff] %vm669, 0.0
          %690 = vst.msk [vmem:[#allocation4 + $0xa0] sm:$0xff] %vm669, 0.0
          %691 = vst.msk [vmem:[#allocation4 + $0xa8] sm:$0xff] %vm669, 0.0
          %692 = vst.msk [vmem:[#allocation4 + $0xb0] sm:$0xff] %vm669, 0.0
          %693 = vst.msk [vmem:[#allocation4 + $0xb8] sm:$0xff] %vm669, 0.0
          %694 = vst.msk [vmem:[#allocation4 + $0xc0] sm:$0xff] %vm669, 0.0
          %695 = vst.msk [vmem:[#allocation4 + $0xc8] sm:$0xff] %vm669, 0.0
          %696 = vst.msk [vmem:[#allocation4 + $0xd0] sm:$0xff] %vm669, 0.0
          %697 = vst.msk [vmem:[#allocation4 + $0xd8] sm:$0xff] %vm669, 0.0
          %698 = vst.msk [vmem:[#allocation4 + $0xe0] sm:$0xff] %vm669, 0.0
          %699 = vst.msk [vmem:[#allocation4 + $0xe8] sm:$0xff] %vm669, 0.0
          %700 = vst.msk [vmem:[#allocation4 + $0xf0] sm:$0xff] %vm669, 0.0
          %701 = vst.msk [vmem:[#allocation4 + $0xf8] sm:$0xff] %vm669, 0.0
          %v702 = vld [vmem:[%s532] sm:$0xf]
          %v703 = vld [vmem:[%s532 + $0x4] sm:$0xf]
          %v704 = vld [vmem:[%s532 + $0x8] sm:$0xf]
          %v705 = vld [vmem:[%s532 + $0xc] sm:$0xf]
          %v706 = vld [vmem:[%s532 + $0x10] sm:$0xf]
          %v707 = vld [vmem:[%s532 + $0x14] sm:$0xf]
          %v708 = vld [vmem:[%s532 + $0x18] sm:$0xf]
          %v709 = vld [vmem:[%s532 + $0x1c] sm:$0xf]
          %v710 = vld [vmem:[%s532 + $0x20] sm:$0xf]
          %v711 = vld [vmem:[%s532 + $0x24] sm:$0xf]
          %v712 = vld [vmem:[%s532 + $0x28] sm:$0xf]
          %v713 = vld [vmem:[%s532 + $0x2c] sm:$0xf]
          %v714 = vld [vmem:[%s532 + $0x30] sm:$0xf]
          %v715 = vld [vmem:[%s532 + $0x34] sm:$0xf]
          %v716 = vld [vmem:[%s532 + $0x38] sm:$0xf]
          %v717 = vld [vmem:[%s532 + $0x3c] sm:$0xf]
          %vm718 = vcmask 519168
          %719 = vst.msk [vmem:[#allocation5] sm:$0xf] %vm718, %v702
          %720 = vst.msk [vmem:[#allocation5 + $0x4] sm:$0xf] %vm718, %v703
          %721 = vst.msk [vmem:[#allocation5 + $0x8] sm:$0xf] %vm718, %v704
          %722 = vst.msk [vmem:[#allocation5 + $0xc] sm:$0xf] %vm718, %v705
          %723 = vst.msk [vmem:[#allocation5 + $0x10] sm:$0xf] %vm718, %v706
          %724 = vst.msk [vmem:[#allocation5 + $0x14] sm:$0xf] %vm718, %v707
          %725 = vst.msk [vmem:[#allocation5 + $0x18] sm:$0xf] %vm718, %v708
          %726 = vst.msk [vmem:[#allocation5 + $0x1c] sm:$0xf] %vm718, %v709
          %727 = vst.msk [vmem:[#allocation5 + $0x20] sm:$0xf] %vm718, %v710
          %728 = vst.msk [vmem:[#allocation5 + $0x24] sm:$0xf] %vm718, %v711
          %729 = vst.msk [vmem:[#allocation5 + $0x28] sm:$0xf] %vm718, %v712
          %730 = vst.msk [vmem:[#allocation5 + $0x2c] sm:$0xf] %vm718, %v713
          %731 = vst.msk [vmem:[#allocation5 + $0x30] sm:$0xf] %vm718, %v714
          %732 = vst.msk [vmem:[#allocation5 + $0x34] sm:$0xf] %vm718, %v715
          %733 = vst.msk [vmem:[#allocation5 + $0x38] sm:$0xf] %vm718, %v716
          %734 = vst.msk [vmem:[#allocation5 + $0x3c] sm:$0xf] %vm718, %v717
          %v735 = vld [vmem:[%s532] sm:$0xf]
          %v736 = vld [vmem:[%s532 + $0x4] sm:$0xf]
          %v737 = vld [vmem:[%s532 + $0x8] sm:$0xf]
          %v738 = vld [vmem:[%s532 + $0xc] sm:$0xf]
          %v739 = vld [vmem:[%s532 + $0x10] sm:$0xf]
          %v740 = vld [vmem:[%s532 + $0x14] sm:$0xf]
          %v741 = vld [vmem:[%s532 + $0x18] sm:$0xf]
          %v742 = vld [vmem:[%s532 + $0x1c] sm:$0xf]
          %v743 = vld [vmem:[%s532 + $0x20] sm:$0xf]
          %v744 = vld [vmem:[%s532 + $0x24] sm:$0xf]
          %v745 = vld [vmem:[%s532 + $0x28] sm:$0xf]
          %v746 = vld [vmem:[%s532 + $0x2c] sm:$0xf]
          %v747 = vld [vmem:[%s532 + $0x30] sm:$0xf]
          %v748 = vld [vmem:[%s532 + $0x34] sm:$0xf]
          %v749 = vld [vmem:[%s532 + $0x38] sm:$0xf]
          %v750 = vld [vmem:[%s532 + $0x3c] sm:$0xf]
          %767 = vrot.lane.b32.xlu0 %v735, 64
          %v768 = vpop.permute.xlu0 %767
          %769 = vrot.lane.b32.xlu0 %v736, 64
          %v770 = vpop.permute.xlu0 %769
          %771 = vrot.lane.b32.xlu0 %v737, 64
          %v772 = vpop.permute.xlu0 %771
          %773 = vrot.lane.b32.xlu0 %v738, 64
          %v774 = vpop.permute.xlu0 %773
          %775 = vrot.lane.b32.xlu0 %v739, 64
          %v776 = vpop.permute.xlu0 %775
          %777 = vrot.lane.b32.xlu0 %v740, 64
          %v778 = vpop.permute.xlu0 %777
          %779 = vrot.lane.b32.xlu0 %v741, 64
          %v780 = vpop.permute.xlu0 %779
          %781 = vrot.lane.b32.xlu0 %v742, 64
          %v782 = vpop.permute.xlu0 %781
          %783 = vrot.lane.b32.xlu0 %v743, 64
          %v784 = vpop.permute.xlu0 %783
          %785 = vrot.lane.b32.xlu0 %v744, 64
          %v786 = vpop.permute.xlu0 %785
          %787 = vrot.lane.b32.xlu0 %v745, 64
          %v788 = vpop.permute.xlu0 %787
          %789 = vrot.lane.b32.xlu0 %v746, 64
          %v790 = vpop.permute.xlu0 %789
          %791 = vrot.lane.b32.xlu0 %v747, 64
          %v792 = vpop.permute.xlu0 %791
          %793 = vrot.lane.b32.xlu0 %v748, 64
          %v794 = vpop.permute.xlu0 %793
          %795 = vrot.lane.b32.xlu0 %v749, 64
          %v796 = vpop.permute.xlu0 %795
          %797 = vrot.lane.b32.xlu0 %v750, 64
          %v798 = vpop.permute.xlu0 %797
          %s815 = scalar_lea.vmem [#allocation5], 64
          %816 = vst.msk [vmem:[%s815] sm:$0xf] %vm718, %v768
          %817 = vst.msk [vmem:[%s815 + $0x4] sm:$0xf] %vm718, %v770
          %818 = vst.msk [vmem:[%s815 + $0x8] sm:$0xf] %vm718, %v772
          %819 = vst.msk [vmem:[%s815 + $0xc] sm:$0xf] %vm718, %v774
          %820 = vst.msk [vmem:[%s815 + $0x10] sm:$0xf] %vm718, %v776
          %821 = vst.msk [vmem:[%s815 + $0x14] sm:$0xf] %vm718, %v778
          %822 = vst.msk [vmem:[%s815 + $0x18] sm:$0xf] %vm718, %v780
          %823 = vst.msk [vmem:[%s815 + $0x1c] sm:$0xf] %vm718, %v782
          %824 = vst.msk [vmem:[%s815 + $0x20] sm:$0xf] %vm718, %v784
          %825 = vst.msk [vmem:[%s815 + $0x24] sm:$0xf] %vm718, %v786
          %826 = vst.msk [vmem:[%s815 + $0x28] sm:$0xf] %vm718, %v788
          %827 = vst.msk [vmem:[%s815 + $0x2c] sm:$0xf] %vm718, %v790
          %828 = vst.msk [vmem:[%s815 + $0x30] sm:$0xf] %vm718, %v792
          %829 = vst.msk [vmem:[%s815 + $0x34] sm:$0xf] %vm718, %v794
          %830 = vst.msk [vmem:[%s815 + $0x38] sm:$0xf] %vm718, %v796
          %831 = vst.msk [vmem:[%s815 + $0x3c] sm:$0xf] %vm718, %v798
        $region159: #{causal_self_attention.4} parent=142 // pred_fallthru
          _
        %v832 = vld [vmem:[%s539] sm:$0xf]
        %v833 = vld [vmem:[%s539 + $0x4] sm:$0xf]
        %v834 = vld [vmem:[%s539 + $0x8] sm:$0xf]
        %v835 = vld [vmem:[%s539 + $0xc] sm:$0xf]
        %v836 = vld [vmem:[%s539 + $0x10] sm:$0xf]
        %v837 = vld [vmem:[%s539 + $0x14] sm:$0xf]
        %v838 = vld [vmem:[%s539 + $0x18] sm:$0xf]
        %v839 = vld [vmem:[%s539 + $0x1c] sm:$0xf]
        %v840 = vld [vmem:[%s539 + $0x20] sm:$0xf]
        %v841 = vld [vmem:[%s539 + $0x24] sm:$0xf]
        %v842 = vld [vmem:[%s539 + $0x28] sm:$0xf]
        %v843 = vld [vmem:[%s539 + $0x2c] sm:$0xf]
        %v844 = vld [vmem:[%s539 + $0x30] sm:$0xf]
        %v845 = vld [vmem:[%s539 + $0x34] sm:$0xf]
        %v846 = vld [vmem:[%s539 + $0x38] sm:$0xf]
        %v847 = vld [vmem:[%s539 + $0x3c] sm:$0xf]
        %vm848 = vcmask 519168
        %849 = vst.msk [vmem:[#allocation6] sm:$0xf] %vm848, %v832
        %850 = vst.msk [vmem:[#allocation6 + $0x4] sm:$0xf] %vm848, %v833
        %851 = vst.msk [vmem:[#allocation6 + $0x8] sm:$0xf] %vm848, %v834
        %852 = vst.msk [vmem:[#allocation6 + $0xc] sm:$0xf] %vm848, %v835
        %853 = vst.msk [vmem:[#allocation6 + $0x10] sm:$0xf] %vm848, %v836
        %854 = vst.msk [vmem:[#allocation6 + $0x14] sm:$0xf] %vm848, %v837
        %855 = vst.msk [vmem:[#allocation6 + $0x18] sm:$0xf] %vm848, %v838
        %856 = vst.msk [vmem:[#allocation6 + $0x1c] sm:$0xf] %vm848, %v839
        %857 = vst.msk [vmem:[#allocation6 + $0x20] sm:$0xf] %vm848, %v840
        %858 = vst.msk [vmem:[#allocation6 + $0x24] sm:$0xf] %vm848, %v841
        %859 = vst.msk [vmem:[#allocation6 + $0x28] sm:$0xf] %vm848, %v842
        %860 = vst.msk [vmem:[#allocation6 + $0x2c] sm:$0xf] %vm848, %v843
        %861 = vst.msk [vmem:[#allocation6 + $0x30] sm:$0xf] %vm848, %v844
        %862 = vst.msk [vmem:[#allocation6 + $0x34] sm:$0xf] %vm848, %v845
        %863 = vst.msk [vmem:[#allocation6 + $0x38] sm:$0xf] %vm848, %v846
        %864 = vst.msk [vmem:[#allocation6 + $0x3c] sm:$0xf] %vm848, %v847
        %v865 = vld [vmem:[%s546] sm:$0xf]
        %v866 = vld [vmem:[%s546 + $0x4] sm:$0xf]
        %v867 = vld [vmem:[%s546 + $0x8] sm:$0xf]
        %v868 = vld [vmem:[%s546 + $0xc] sm:$0xf]
        %v869 = vld [vmem:[%s546 + $0x10] sm:$0xf]
        %v870 = vld [vmem:[%s546 + $0x14] sm:$0xf]
        %v871 = vld [vmem:[%s546 + $0x18] sm:$0xf]
        %v872 = vld [vmem:[%s546 + $0x1c] sm:$0xf]
        %v873 = vld [vmem:[%s546 + $0x20] sm:$0xf]
        %v874 = vld [vmem:[%s546 + $0x24] sm:$0xf]
        %v875 = vld [vmem:[%s546 + $0x28] sm:$0xf]
        %v876 = vld [vmem:[%s546 + $0x2c] sm:$0xf]
        %v877 = vld [vmem:[%s546 + $0x30] sm:$0xf]
        %v878 = vld [vmem:[%s546 + $0x34] sm:$0xf]
        %v879 = vld [vmem:[%s546 + $0x38] sm:$0xf]
        %v880 = vld [vmem:[%s546 + $0x3c] sm:$0xf]
        %881 = vst.msk [vmem:[#allocation7] sm:$0xf] %vm848, %v865
        %882 = vst.msk [vmem:[#allocation7 + $0x4] sm:$0xf] %vm848, %v866
        %883 = vst.msk [vmem:[#allocation7 + $0x8] sm:$0xf] %vm848, %v867
        %884 = vst.msk [vmem:[#allocation7 + $0xc] sm:$0xf] %vm848, %v868
        %885 = vst.msk [vmem:[#allocation7 + $0x10] sm:$0xf] %vm848, %v869
        %886 = vst.msk [vmem:[#allocation7 + $0x14] sm:$0xf] %vm848, %v870
        %887 = vst.msk [vmem:[#allocation7 + $0x18] sm:$0xf] %vm848, %v871
        %888 = vst.msk [vmem:[#allocation7 + $0x1c] sm:$0xf] %vm848, %v872
        %889 = vst.msk [vmem:[#allocation7 + $0x20] sm:$0xf] %vm848, %v873
        %890 = vst.msk [vmem:[#allocation7 + $0x24] sm:$0xf] %vm848, %v874
        %891 = vst.msk [vmem:[#allocation7 + $0x28] sm:$0xf] %vm848, %v875
        %892 = vst.msk [vmem:[#allocation7 + $0x2c] sm:$0xf] %vm848, %v876
        %893 = vst.msk [vmem:[#allocation7 + $0x30] sm:$0xf] %vm848, %v877
        %894 = vst.msk [vmem:[#allocation7 + $0x34] sm:$0xf] %vm848, %v878
        %895 = vst.msk [vmem:[#allocation7 + $0x38] sm:$0xf] %vm848, %v879
        %896 = vst.msk [vmem:[#allocation7 + $0x3c] sm:$0xf] %vm848, %v880
        %v897 = vld [vmem:[%s539] sm:$0xf]
        %v898 = vld [vmem:[%s539 + $0x4] sm:$0xf]
        %v899 = vld [vmem:[%s539 + $0x8] sm:$0xf]
        %v900 = vld [vmem:[%s539 + $0xc] sm:$0xf]
        %v901 = vld [vmem:[%s539 + $0x10] sm:$0xf]
        %v902 = vld [vmem:[%s539 + $0x14] sm:$0xf]
        %v903 = vld [vmem:[%s539 + $0x18] sm:$0xf]
        %v904 = vld [vmem:[%s539 + $0x1c] sm:$0xf]
        %v905 = vld [vmem:[%s539 + $0x20] sm:$0xf]
        %v906 = vld [vmem:[%s539 + $0x24] sm:$0xf]
        %v907 = vld [vmem:[%s539 + $0x28] sm:$0xf]
        %v908 = vld [vmem:[%s539 + $0x2c] sm:$0xf]
        %v909 = vld [vmem:[%s539 + $0x30] sm:$0xf]
        %v910 = vld [vmem:[%s539 + $0x34] sm:$0xf]
        %v911 = vld [vmem:[%s539 + $0x38] sm:$0xf]
        %v912 = vld [vmem:[%s539 + $0x3c] sm:$0xf]
        %929 = vrot.lane.b32.xlu0 %v897, 64
        %v930 = vpop.permute.xlu0 %929
        %931 = vrot.lane.b32.xlu0 %v898, 64
        %v932 = vpop.permute.xlu0 %931
        %933 = vrot.lane.b32.xlu0 %v899, 64
        %v934 = vpop.permute.xlu0 %933
        %935 = vrot.lane.b32.xlu0 %v900, 64
        %v936 = vpop.permute.xlu0 %935
        %937 = vrot.lane.b32.xlu0 %v901, 64
        %v938 = vpop.permute.xlu0 %937
        %939 = vrot.lane.b32.xlu0 %v902, 64
        %v940 = vpop.permute.xlu0 %939
        %941 = vrot.lane.b32.xlu0 %v903, 64
        %v942 = vpop.permute.xlu0 %941
        %943 = vrot.lane.b32.xlu0 %v904, 64
        %v944 = vpop.permute.xlu0 %943
        %945 = vrot.lane.b32.xlu0 %v905, 64
        %v946 = vpop.permute.xlu0 %945
        %947 = vrot.lane.b32.xlu0 %v906, 64
        %v948 = vpop.permute.xlu0 %947
        %949 = vrot.lane.b32.xlu0 %v907, 64
        %v950 = vpop.permute.xlu0 %949
        %951 = vrot.lane.b32.xlu0 %v908, 64
        %v952 = vpop.permute.xlu0 %951
        %953 = vrot.lane.b32.xlu0 %v909, 64
        %v954 = vpop.permute.xlu0 %953
        %955 = vrot.lane.b32.xlu0 %v910, 64
        %v956 = vpop.permute.xlu0 %955
        %957 = vrot.lane.b32.xlu0 %v911, 64
        %v958 = vpop.permute.xlu0 %957
        %959 = vrot.lane.b32.xlu0 %v912, 64
        %v960 = vpop.permute.xlu0 %959
        %s977 = scalar_lea.vmem [#allocation6], 64
        %978 = vst.msk [vmem:[%s977] sm:$0xf] %vm848, %v930
        %979 = vst.msk [vmem:[%s977 + $0x4] sm:$0xf] %vm848, %v932
        %980 = vst.msk [vmem:[%s977 + $0x8] sm:$0xf] %vm848, %v934
        %981 = vst.msk [vmem:[%s977 + $0xc] sm:$0xf] %vm848, %v936
        %982 = vst.msk [vmem:[%s977 + $0x10] sm:$0xf] %vm848, %v938
        %983 = vst.msk [vmem:[%s977 + $0x14] sm:$0xf] %vm848, %v940
        %984 = vst.msk [vmem:[%s977 + $0x18] sm:$0xf] %vm848, %v942
        %985 = vst.msk [vmem:[%s977 + $0x1c] sm:$0xf] %vm848, %v944
        %986 = vst.msk [vmem:[%s977 + $0x20] sm:$0xf] %vm848, %v946
        %987 = vst.msk [vmem:[%s977 + $0x24] sm:$0xf] %vm848, %v948
        %988 = vst.msk [vmem:[%s977 + $0x28] sm:$0xf] %vm848, %v950
        %989 = vst.msk [vmem:[%s977 + $0x2c] sm:$0xf] %vm848, %v952
        %990 = vst.msk [vmem:[%s977 + $0x30] sm:$0xf] %vm848, %v954
        %991 = vst.msk [vmem:[%s977 + $0x34] sm:$0xf] %vm848, %v956
        %992 = vst.msk [vmem:[%s977 + $0x38] sm:$0xf] %vm848, %v958
        %993 = vst.msk [vmem:[%s977 + $0x3c] sm:$0xf] %vm848, %v960
        %v994 = vld [vmem:[%s546] sm:$0xf]
        %v995 = vld [vmem:[%s546 + $0x4] sm:$0xf]
        %v996 = vld [vmem:[%s546 + $0x8] sm:$0xf]
        %v997 = vld [vmem:[%s546 + $0xc] sm:$0xf]
        %v998 = vld [vmem:[%s546 + $0x10] sm:$0xf]
        %v999 = vld [vmem:[%s546 + $0x14] sm:$0xf]
        %v1000 = vld [vmem:[%s546 + $0x18] sm:$0xf]
        %v1001 = vld [vmem:[%s546 + $0x1c] sm:$0xf]
        %v1002 = vld [vmem:[%s546 + $0x20] sm:$0xf]
        %v1003 = vld [vmem:[%s546 + $0x24] sm:$0xf]
        %v1004 = vld [vmem:[%s546 + $0x28] sm:$0xf]
        %v1005 = vld [vmem:[%s546 + $0x2c] sm:$0xf]
        %v1006 = vld [vmem:[%s546 + $0x30] sm:$0xf]
        %v1007 = vld [vmem:[%s546 + $0x34] sm:$0xf]
        %v1008 = vld [vmem:[%s546 + $0x38] sm:$0xf]
        %v1009 = vld [vmem:[%s546 + $0x3c] sm:$0xf]
        %1026 = vrot.lane.b32.xlu0 %v994, 64
        %v1027 = vpop.permute.xlu0 %1026
        %1028 = vrot.lane.b32.xlu0 %v995, 64
        %v1029 = vpop.permute.xlu0 %1028
        %1030 = vrot.lane.b32.xlu0 %v996, 64
        %v1031 = vpop.permute.xlu0 %1030
        %1032 = vrot.lane.b32.xlu0 %v997, 64
        %v1033 = vpop.permute.xlu0 %1032
        %1034 = vrot.lane.b32.xlu0 %v998, 64
        %v1035 = vpop.permute.xlu0 %1034
        %1036 = vrot.lane.b32.xlu0 %v999, 64
        %v1037 = vpop.permute.xlu0 %1036
        %1038 = vrot.lane.b32.xlu0 %v1000, 64
        %v1039 = vpop.permute.xlu0 %1038
        %1040 = vrot.lane.b32.xlu0 %v1001, 64
        %v1041 = vpop.permute.xlu0 %1040
        %1042 = vrot.lane.b32.xlu0 %v1002, 64
        %v1043 = vpop.permute.xlu0 %1042
        %1044 = vrot.lane.b32.xlu0 %v1003, 64
        %v1045 = vpop.permute.xlu0 %1044
        %1046 = vrot.lane.b32.xlu0 %v1004, 64
        %v1047 = vpop.permute.xlu0 %1046
        %1048 = vrot.lane.b32.xlu0 %v1005, 64
        %v1049 = vpop.permute.xlu0 %1048
        %1050 = vrot.lane.b32.xlu0 %v1006, 64
        %v1051 = vpop.permute.xlu0 %1050
        %1052 = vrot.lane.b32.xlu0 %v1007, 64
        %v1053 = vpop.permute.xlu0 %1052
        %1054 = vrot.lane.b32.xlu0 %v1008, 64
        %v1055 = vpop.permute.xlu0 %1054
        %1056 = vrot.lane.b32.xlu0 %v1009, 64
        %v1057 = vpop.permute.xlu0 %1056
        %s1074 = scalar_lea.vmem [#allocation7], 64
        %1075 = vst.msk [vmem:[%s1074] sm:$0xf] %vm848, %v1027
        %1076 = vst.msk [vmem:[%s1074 + $0x4] sm:$0xf] %vm848, %v1029
        %1077 = vst.msk [vmem:[%s1074 + $0x8] sm:$0xf] %vm848, %v1031
        %1078 = vst.msk [vmem:[%s1074 + $0xc] sm:$0xf] %vm848, %v1033
        %1079 = vst.msk [vmem:[%s1074 + $0x10] sm:$0xf] %vm848, %v1035
        %1080 = vst.msk [vmem:[%s1074 + $0x14] sm:$0xf] %vm848, %v1037
        %1081 = vst.msk [vmem:[%s1074 + $0x18] sm:$0xf] %vm848, %v1039
        %1082 = vst.msk [vmem:[%s1074 + $0x1c] sm:$0xf] %vm848, %v1041
        %1083 = vst.msk [vmem:[%s1074 + $0x20] sm:$0xf] %vm848, %v1043
        %1084 = vst.msk [vmem:[%s1074 + $0x24] sm:$0xf] %vm848, %v1045
        %1085 = vst.msk [vmem:[%s1074 + $0x28] sm:$0xf] %vm848, %v1047
        %1086 = vst.msk [vmem:[%s1074 + $0x2c] sm:$0xf] %vm848, %v1049
        %1087 = vst.msk [vmem:[%s1074 + $0x30] sm:$0xf] %vm848, %v1051
        %1088 = vst.msk [vmem:[%s1074 + $0x34] sm:$0xf] %vm848, %v1053
        %1089 = vst.msk [vmem:[%s1074 + $0x38] sm:$0xf] %vm848, %v1055
        %1090 = vst.msk [vmem:[%s1074 + $0x3c] sm:$0xf] %vm848, %v1057
        %p1091 = scmp.lt.s32.totalorder %s599, %s598
        // Predicated region
        $region160: #{causal_self_attention.4} parent=142 // pred_check
          %p1092 = pneg %p1091
        $region161: #{causal_self_attention.4} parent=142 // pred_check_branch
          %1094 = sbr.rel (%p1092) target = $region163
        $region162: #{causal_self_attention.4} parent=142 // pred_region
          loop: start=0, step=1, limit=2
          $region164: #{causal_self_attention.4} parent=162 // loop_pre_header
            _
          $region165: #{causal_self_attention.4} parent=162 // loop_header
            %s1096 = sphi 0, %s1100
            %p1097 = scmp.ge.s32.totalorder %s1096, 2
          $region166: #{causal_self_attention.4} parent=162 // loop_header_branch
            %1099 = sbr.rel (%p1097) target = $region170
          $region167: #{causal_self_attention.4} parent=162 // loop_body
            %s1101 = smul.u32 %s1096, 16
            %s1102 = smul.addr %s1101, 4
            %s1103 = scalar_lea.vmem [#allocation5], %s1102
            %v1104 = vld [vmem:[%s1103] sm:$0xf]
            %v1105 = vld [vmem:[%s1103 + $0x4] sm:$0xf]
            %v1106 = vld [vmem:[%s1103 + $0x8] sm:$0xf]
            %v1107 = vld [vmem:[%s1103 + $0xc] sm:$0xf]
            %v1108 = vld [vmem:[%s1103 + $0x10] sm:$0xf]
            %v1109 = vld [vmem:[%s1103 + $0x14] sm:$0xf]
            %v1110 = vld [vmem:[%s1103 + $0x18] sm:$0xf]
            %v1111 = vld [vmem:[%s1103 + $0x1c] sm:$0xf]
            %v1112 = vld [vmem:[%s1103 + $0x20] sm:$0xf]
            %v1113 = vld [vmem:[%s1103 + $0x24] sm:$0xf]
            %v1114 = vld [vmem:[%s1103 + $0x28] sm:$0xf]
            %v1115 = vld [vmem:[%s1103 + $0x2c] sm:$0xf]
            %v1116 = vld [vmem:[%s1103 + $0x30] sm:$0xf]
            %v1117 = vld [vmem:[%s1103 + $0x34] sm:$0xf]
            %v1118 = vld [vmem:[%s1103 + $0x38] sm:$0xf]
            %v1119 = vld [vmem:[%s1103 + $0x3c] sm:$0xf]
            %s1120 = smul.addr %s1101, 4
            %s1121 = scalar_lea.vmem [#allocation6], %s1120
            %v1122 = vld [vmem:[%s1121] sm:$0xf]
            %v1123 = vld [vmem:[%s1121 + $0x4] sm:$0xf]
            %v1124 = vld [vmem:[%s1121 + $0x8] sm:$0xf]
            %v1125 = vld [vmem:[%s1121 + $0xc] sm:$0xf]
            %v1126 = vld [vmem:[%s1121 + $0x10] sm:$0xf]
            %v1127 = vld [vmem:[%s1121 + $0x14] sm:$0xf]
            %v1128 = vld [vmem:[%s1121 + $0x18] sm:$0xf]
            %v1129 = vld [vmem:[%s1121 + $0x1c] sm:$0xf]
            %v1130 = vld [vmem:[%s1121 + $0x20] sm:$0xf]
            %v1131 = vld [vmem:[%s1121 + $0x24] sm:$0xf]
            %v1132 = vld [vmem:[%s1121 + $0x28] sm:$0xf]
            %v1133 = vld [vmem:[%s1121 + $0x2c] sm:$0xf]
            %v1134 = vld [vmem:[%s1121 + $0x30] sm:$0xf]
            %v1135 = vld [vmem:[%s1121 + $0x34] sm:$0xf]
            %v1136 = vld [vmem:[%s1121 + $0x38] sm:$0xf]
            %v1137 = vld [vmem:[%s1121 + $0x3c] sm:$0xf]
            %s1138 = smul.addr %s1101, 4
            %s1139 = scalar_lea.vmem [#allocation7], %s1138
            %v1140 = vld [vmem:[%s1139] sm:$0xf]
            %v1141 = vld [vmem:[%s1139 + $0x4] sm:$0xf]
            %v1142 = vld [vmem:[%s1139 + $0x8] sm:$0xf]
            %v1143 = vld [vmem:[%s1139 + $0xc] sm:$0xf]
            %v1144 = vld [vmem:[%s1139 + $0x10] sm:$0xf]
            %v1145 = vld [vmem:[%s1139 + $0x14] sm:$0xf]
            %v1146 = vld [vmem:[%s1139 + $0x18] sm:$0xf]
            %v1147 = vld [vmem:[%s1139 + $0x1c] sm:$0xf]
            %v1148 = vld [vmem:[%s1139 + $0x20] sm:$0xf]
            %v1149 = vld [vmem:[%s1139 + $0x24] sm:$0xf]
            %v1150 = vld [vmem:[%s1139 + $0x28] sm:$0xf]
            %v1151 = vld [vmem:[%s1139 + $0x2c] sm:$0xf]
            %v1152 = vld [vmem:[%s1139 + $0x30] sm:$0xf]
            %v1153 = vld [vmem:[%s1139 + $0x34] sm:$0xf]
            %v1154 = vld [vmem:[%s1139 + $0x38] sm:$0xf]
            %v1155 = vld [vmem:[%s1139 + $0x3c] sm:$0xf]
            %v1172 = vunpack.c.l.b16 %v1104
            %v1173 = vunpack.c.l.b16 %v1105
            %v1174 = vunpack.c.l.b16 %v1106
            %v1175 = vunpack.c.l.b16 %v1107
            %v1176 = vunpack.c.l.b16 %v1108
            %v1177 = vunpack.c.l.b16 %v1109
            %v1178 = vunpack.c.l.b16 %v1110
            %v1179 = vunpack.c.l.b16 %v1111
            %v1180 = vunpack.c.l.b16 %v1112
            %v1181 = vunpack.c.l.b16 %v1113
            %v1182 = vunpack.c.l.b16 %v1114
            %v1183 = vunpack.c.l.b16 %v1115
            %v1184 = vunpack.c.l.b16 %v1116
            %v1185 = vunpack.c.l.b16 %v1117
            %v1186 = vunpack.c.l.b16 %v1118
            %v1187 = vunpack.c.l.b16 %v1119
            %v1188 = vpack.c.b16 %v1173, %v1172
            %v1189 = vpack.c.b16 %v1175, %v1174
            %v1190 = vpack.c.b16 %v1177, %v1176
            %v1191 = vpack.c.b16 %v1179, %v1178
            %v1192 = vpack.c.b16 %v1181, %v1180
            %v1193 = vpack.c.b16 %v1183, %v1182
            %v1194 = vpack.c.b16 %v1185, %v1184
            %v1195 = vpack.c.b16 %v1187, %v1186
            %v1212 = vunpack.c.l.b16 %v1122
            %v1213 = vunpack.c.l.b16 %v1123
            %v1214 = vunpack.c.l.b16 %v1124
            %v1215 = vunpack.c.l.b16 %v1125
            %v1216 = vunpack.c.l.b16 %v1126
            %v1217 = vunpack.c.l.b16 %v1127
            %v1218 = vunpack.c.l.b16 %v1128
            %v1219 = vunpack.c.l.b16 %v1129
            %v1220 = vunpack.c.l.b16 %v1130
            %v1221 = vunpack.c.l.b16 %v1131
            %v1222 = vunpack.c.l.b16 %v1132
            %v1223 = vunpack.c.l.b16 %v1133
            %v1224 = vunpack.c.l.b16 %v1134
            %v1225 = vunpack.c.l.b16 %v1135
            %v1226 = vunpack.c.l.b16 %v1136
            %v1227 = vunpack.c.l.b16 %v1137
            %v1228 = vpack.c.b16 %v1213, %v1212
            %v1229 = vpack.c.b16 %v1215, %v1214
            %v1230 = vpack.c.b16 %v1217, %v1216
            %v1231 = vpack.c.b16 %v1219, %v1218
            %v1232 = vpack.c.b16 %v1221, %v1220
            %v1233 = vpack.c.b16 %v1223, %v1222
            %v1234 = vpack.c.b16 %v1225, %v1224
            %v1235 = vpack.c.b16 %v1227, %v1226
            %vm1236 = vcmask 523264
            %v1238 = vsel %vm1236, %v1188, 0
            %v1241 = vsel %vm1236, %v1189, 0
            %v1244 = vsel %vm1236, %v1190, 0
            %v1247 = vsel %vm1236, %v1191, 0
            %v1250 = vsel %vm1236, %v1192, 0
            %v1253 = vsel %vm1236, %v1193, 0
            %v1256 = vsel %vm1236, %v1194, 0
            %v1259 = vsel %vm1236, %v1195, 0
            %v1262 = vsel %vm1236, %v1228, 0
            %v1265 = vsel %vm1236, %v1229, 0
            %v1268 = vsel %vm1236, %v1230, 0
            %v1271 = vsel %vm1236, %v1231, 0
            %v1274 = vsel %vm1236, %v1232, 0
            %v1277 = vsel %vm1236, %v1233, 0
            %v1280 = vsel %vm1236, %v1234, 0
            %v1283 = vsel %vm1236, %v1235, 0
            %1285 = vmatpush.bf16.xpose.msra.mxu0 %v1283
            %1286 = vmatpush.bf16.xpose.msra.mxu0 %v1280
            %1287 = vmatpush.bf16.xpose.msra.mxu0 %v1277
            %1288 = vmatpush.bf16.xpose.msra.mxu0 %v1274
            %1289 = vmatpush.bf16.xpose.msra.mxu0 %v1271
            %1290 = vmatpush.bf16.xpose.msra.mxu0 %v1268
            %1291 = vmatpush.bf16.xpose.msra.mxu0 %v1265
            %1292 = vmatpush.bf16.xpose.msra.mxu0 %v1262
            %1293 = vmatmul.bf16.gmra.mxu0 %v1238
            %v1294 = vpop.f32.mrf.mxu0
            %v1295 = vadd.f32 0.0, %v1294
            %v1296 = vpop.f32.mrf.mxu0
            %v1297 = vadd.f32 0.0, %v1296
            %1298 = vmatmul.bf16.gmra.mxu0 %v1241
            %v1299 = vpop.f32.mrf.mxu0
            %v1300 = vadd.f32 0.0, %v1299
            %v1301 = vpop.f32.mrf.mxu0
            %v1302 = vadd.f32 0.0, %v1301
            %1303 = vmatmul.bf16.gmra.mxu0 %v1244
            %v1304 = vpop.f32.mrf.mxu0
            %v1305 = vadd.f32 0.0, %v1304
            %v1306 = vpop.f32.mrf.mxu0
            %v1307 = vadd.f32 0.0, %v1306
            %1308 = vmatmul.bf16.gmra.mxu0 %v1247
            %v1309 = vpop.f32.mrf.mxu0
            %v1310 = vadd.f32 0.0, %v1309
            %v1311 = vpop.f32.mrf.mxu0
            %v1312 = vadd.f32 0.0, %v1311
            %1313 = vmatmul.bf16.gmra.mxu0 %v1250
            %v1314 = vpop.f32.mrf.mxu0
            %v1315 = vadd.f32 0.0, %v1314
            %v1316 = vpop.f32.mrf.mxu0
            %v1317 = vadd.f32 0.0, %v1316
            %1318 = vmatmul.bf16.gmra.mxu0 %v1253
            %v1319 = vpop.f32.mrf.mxu0
            %v1320 = vadd.f32 0.0, %v1319
            %v1321 = vpop.f32.mrf.mxu0
            %v1322 = vadd.f32 0.0, %v1321
            %1323 = vmatmul.bf16.gmra.mxu0 %v1256
            %v1324 = vpop.f32.mrf.mxu0
            %v1325 = vadd.f32 0.0, %v1324
            %v1326 = vpop.f32.mrf.mxu0
            %v1327 = vadd.f32 0.0, %v1326
            %1328 = vmatmul.bf16.gmra.mxu0 %v1259
            %v1329 = vpop.f32.mrf.mxu0
            %v1330 = vadd.f32 0.0, %v1329
            %v1331 = vpop.f32.mrf.mxu0
            %v1332 = vadd.f32 0.0, %v1331
            %1333 = vdwg.mxu0
            %s1334 = smul.u32 %s1096, 128
            %s1335 = scalar_lea.vmem [#allocation2], %s1334
            %v1336 = vld [vmem:[%s1335] sm:$0xff]
            %v1337 = vld [vmem:[%s1335 + $0x8] sm:$0xff]
            %v1338 = vld [vmem:[%s1335 + $0x10] sm:$0xff]
            %v1339 = vld [vmem:[%s1335 + $0x18] sm:$0xff]
            %v1340 = vld [vmem:[%s1335 + $0x20] sm:$0xff]
            %v1341 = vld [vmem:[%s1335 + $0x28] sm:$0xff]
            %v1342 = vld [vmem:[%s1335 + $0x30] sm:$0xff]
            %v1343 = vld [vmem:[%s1335 + $0x38] sm:$0xff]
            %v1344 = vld [vmem:[%s1335 + $0x40] sm:$0xff]
            %v1345 = vld [vmem:[%s1335 + $0x48] sm:$0xff]
            %v1346 = vld [vmem:[%s1335 + $0x50] sm:$0xff]
            %v1347 = vld [vmem:[%s1335 + $0x58] sm:$0xff]
            %v1348 = vld [vmem:[%s1335 + $0x60] sm:$0xff]
            %v1349 = vld [vmem:[%s1335 + $0x68] sm:$0xff]
            %v1350 = vld [vmem:[%s1335 + $0x70] sm:$0xff]
            %v1351 = vld [vmem:[%s1335 + $0x78] sm:$0xff]
            %1352 = vmax.xlane.f32.xlu0 %v1295
            %v1353 = vpop.xlane.xlu0 %1352
            %1354 = vmax.xlane.f32.xlu0 %v1297
            %v1355 = vpop.xlane.xlu0 %1354
            %1356 = vmax.xlane.f32.xlu0 %v1300
            %v1357 = vpop.xlane.xlu0 %1356
            %1358 = vmax.xlane.f32.xlu0 %v1302
            %v1359 = vpop.xlane.xlu0 %1358
            %1360 = vmax.xlane.f32.xlu0 %v1305
            %v1361 = vpop.xlane.xlu0 %1360
            %1362 = vmax.xlane.f32.xlu0 %v1307
            %v1363 = vpop.xlane.xlu0 %1362
            %1364 = vmax.xlane.f32.xlu0 %v1310
            %v1365 = vpop.xlane.xlu0 %1364
            %1366 = vmax.xlane.f32.xlu0 %v1312
            %v1367 = vpop.xlane.xlu0 %1366
            %1368 = vmax.xlane.f32.xlu0 %v1315
            %v1369 = vpop.xlane.xlu0 %1368
            %1370 = vmax.xlane.f32.xlu0 %v1317
            %v1371 = vpop.xlane.xlu0 %1370
            %1372 = vmax.xlane.f32.xlu0 %v1320
            %v1373 = vpop.xlane.xlu0 %1372
            %1374 = vmax.xlane.f32.xlu0 %v1322
            %v1375 = vpop.xlane.xlu0 %1374
            %1376 = vmax.xlane.f32.xlu0 %v1325
            %v1377 = vpop.xlane.xlu0 %1376
            %1378 = vmax.xlane.f32.xlu0 %v1327
            %v1379 = vpop.xlane.xlu0 %1378
            %1380 = vmax.xlane.f32.xlu0 %v1330
            %v1381 = vpop.xlane.xlu0 %1380
            %1382 = vmax.xlane.f32.xlu0 %v1332
            %v1383 = vpop.xlane.xlu0 %1382
            %v1384 = vmax.f32 %v1336, %v1353
            %v1385 = vmax.f32 %v1337, %v1355
            %v1386 = vmax.f32 %v1338, %v1357
            %v1387 = vmax.f32 %v1339, %v1359
            %v1388 = vmax.f32 %v1340, %v1361
            %v1389 = vmax.f32 %v1341, %v1363
            %v1390 = vmax.f32 %v1342, %v1365
            %v1391 = vmax.f32 %v1343, %v1367
            %v1392 = vmax.f32 %v1344, %v1369
            %v1393 = vmax.f32 %v1345, %v1371
            %v1394 = vmax.f32 %v1346, %v1373
            %v1395 = vmax.f32 %v1347, %v1375
            %v1396 = vmax.f32 %v1348, %v1377
            %v1397 = vmax.f32 %v1349, %v1379
            %v1398 = vmax.f32 %v1350, %v1381
            %v1399 = vmax.f32 %v1351, %v1383
            %v1400 = vsub.f32 %v1336, %v1384
            %v1401 = vsub.f32 %v1337, %v1385
            %v1402 = vsub.f32 %v1338, %v1386
            %v1403 = vsub.f32 %v1339, %v1387
            %v1404 = vsub.f32 %v1340, %v1388
            %v1405 = vsub.f32 %v1341, %v1389
            %v1406 = vsub.f32 %v1342, %v1390
            %v1407 = vsub.f32 %v1343, %v1391
            %v1408 = vsub.f32 %v1344, %v1392
            %v1409 = vsub.f32 %v1345, %v1393
            %v1410 = vsub.f32 %v1346, %v1394
            %v1411 = vsub.f32 %v1347, %v1395
            %v1412 = vsub.f32 %v1348, %v1396
            %v1413 = vsub.f32 %v1349, %v1397
            %v1414 = vsub.f32 %v1350, %v1398
            %v1415 = vsub.f32 %v1351, %v1399
            %v1416 = vmul.f32 %v1400, 1.442695
            %v1417 = vpow.pop %v1416
            %v1418 = vmul.f32 %v1401, 1.442695
            %v1419 = vpow.pop %v1418
            %v1420 = vmul.f32 %v1402, 1.442695
            %v1421 = vpow.pop %v1420
            %v1422 = vmul.f32 %v1403, 1.442695
            %v1423 = vpow.pop %v1422
            %v1424 = vmul.f32 %v1404, 1.442695
            %v1425 = vpow.pop %v1424
            %v1426 = vmul.f32 %v1405, 1.442695
            %v1427 = vpow.pop %v1426
            %v1428 = vmul.f32 %v1406, 1.442695
            %v1429 = vpow.pop %v1428
            %v1430 = vmul.f32 %v1407, 1.442695
            %v1431 = vpow.pop %v1430
            %v1432 = vmul.f32 %v1408, 1.442695
            %v1433 = vpow.pop %v1432
            %v1434 = vmul.f32 %v1409, 1.442695
            %v1435 = vpow.pop %v1434
            %v1436 = vmul.f32 %v1410, 1.442695
            %v1437 = vpow.pop %v1436
            %v1438 = vmul.f32 %v1411, 1.442695
            %v1439 = vpow.pop %v1438
            %v1440 = vmul.f32 %v1412, 1.442695
            %v1441 = vpow.pop %v1440
            %v1442 = vmul.f32 %v1413, 1.442695
            %v1443 = vpow.pop %v1442
            %v1444 = vmul.f32 %v1414, 1.442695
            %v1445 = vpow.pop %v1444
            %v1446 = vmul.f32 %v1415, 1.442695
            %v1447 = vpow.pop %v1446
            %1449 = vset.pattern.permute.xlu0 0
            %1450 = vperm.xlu0 %1449, %v1384
            %v1451 = vpop.permute.xlu0 %1450
            %1454 = vset.pattern.permute.xlu0 0
            %1455 = vperm.xlu0 %1454, %v1385
            %v1456 = vpop.permute.xlu0 %1455
            %1459 = vset.pattern.permute.xlu0 0
            %1460 = vperm.xlu0 %1459, %v1386
            %v1461 = vpop.permute.xlu0 %1460
            %1464 = vset.pattern.permute.xlu0 0
            %1465 = vperm.xlu0 %1464, %v1387
            %v1466 = vpop.permute.xlu0 %1465
            %1469 = vset.pattern.permute.xlu0 0
            %1470 = vperm.xlu0 %1469, %v1388
            %v1471 = vpop.permute.xlu0 %1470
            %1474 = vset.pattern.permute.xlu0 0
            %1475 = vperm.xlu0 %1474, %v1389
            %v1476 = vpop.permute.xlu0 %1475
            %1479 = vset.pattern.permute.xlu0 0
            %1480 = vperm.xlu0 %1479, %v1390
            %v1481 = vpop.permute.xlu0 %1480
            %1484 = vset.pattern.permute.xlu0 0
            %1485 = vperm.xlu0 %1484, %v1391
            %v1486 = vpop.permute.xlu0 %1485
            %1489 = vset.pattern.permute.xlu0 0
            %1490 = vperm.xlu0 %1489, %v1392
            %v1491 = vpop.permute.xlu0 %1490
            %1494 = vset.pattern.permute.xlu0 0
            %1495 = vperm.xlu0 %1494, %v1393
            %v1496 = vpop.permute.xlu0 %1495
            %1499 = vset.pattern.permute.xlu0 0
            %1500 = vperm.xlu0 %1499, %v1394
            %v1501 = vpop.permute.xlu0 %1500
            %1504 = vset.pattern.permute.xlu0 0
            %1505 = vperm.xlu0 %1504, %v1395
            %v1506 = vpop.permute.xlu0 %1505
            %1509 = vset.pattern.permute.xlu0 0
            %1510 = vperm.xlu0 %1509, %v1396
            %v1511 = vpop.permute.xlu0 %1510
            %1514 = vset.pattern.permute.xlu0 0
            %1515 = vperm.xlu0 %1514, %v1397
            %v1516 = vpop.permute.xlu0 %1515
            %1519 = vset.pattern.permute.xlu0 0
            %1520 = vperm.xlu0 %1519, %v1398
            %v1521 = vpop.permute.xlu0 %1520
            %1524 = vset.pattern.permute.xlu0 0
            %1525 = vperm.xlu0 %1524, %v1399
            %v1526 = vpop.permute.xlu0 %1525
            %v1528 = vsub.f32 %v1295, %v1451
            %v1529 = vsub.f32 %v1297, %v1456
            %v1530 = vsub.f32 %v1300, %v1461
            %v1531 = vsub.f32 %v1302, %v1466
            %v1532 = vsub.f32 %v1305, %v1471
            %v1533 = vsub.f32 %v1307, %v1476
            %v1534 = vsub.f32 %v1310, %v1481
            %v1535 = vsub.f32 %v1312, %v1486
            %v1536 = vsub.f32 %v1315, %v1491
            %v1537 = vsub.f32 %v1317, %v1496
            %v1538 = vsub.f32 %v1320, %v1501
            %v1539 = vsub.f32 %v1322, %v1506
            %v1540 = vsub.f32 %v1325, %v1511
            %v1541 = vsub.f32 %v1327, %v1516
            %v1542 = vsub.f32 %v1330, %v1521
            %v1543 = vsub.f32 %v1332, %v1526
            %v1544 = vmul.f32 %v1528, 1.442695
            %v1545 = vpow.pop %v1544
            %v1546 = vmul.f32 %v1529, 1.442695
            %v1547 = vpow.pop %v1546
            %v1548 = vmul.f32 %v1530, 1.442695
            %v1549 = vpow.pop %v1548
            %v1550 = vmul.f32 %v1531, 1.442695
            %v1551 = vpow.pop %v1550
            %v1552 = vmul.f32 %v1532, 1.442695
            %v1553 = vpow.pop %v1552
            %v1554 = vmul.f32 %v1533, 1.442695
            %v1555 = vpow.pop %v1554
            %v1556 = vmul.f32 %v1534, 1.442695
            %v1557 = vpow.pop %v1556
            %v1558 = vmul.f32 %v1535, 1.442695
            %v1559 = vpow.pop %v1558
            %v1560 = vmul.f32 %v1536, 1.442695
            %v1561 = vpow.pop %v1560
            %v1562 = vmul.f32 %v1537, 1.442695
            %v1563 = vpow.pop %v1562
            %v1564 = vmul.f32 %v1538, 1.442695
            %v1565 = vpow.pop %v1564
            %v1566 = vmul.f32 %v1539, 1.442695
            %v1567 = vpow.pop %v1566
            %v1568 = vmul.f32 %v1540, 1.442695
            %v1569 = vpow.pop %v1568
            %v1570 = vmul.f32 %v1541, 1.442695
            %v1571 = vpow.pop %v1570
            %v1572 = vmul.f32 %v1542, 1.442695
            %v1573 = vpow.pop %v1572
            %v1574 = vmul.f32 %v1543, 1.442695
            %v1575 = vpow.pop %v1574
            %s1576 = scalar_lea.vmem [#allocation3], %s1334
            %v1577 = vld [vmem:[%s1576] sm:$0xff]
            %v1578 = vld [vmem:[%s1576 + $0x8] sm:$0xff]
            %v1579 = vld [vmem:[%s1576 + $0x10] sm:$0xff]
            %v1580 = vld [vmem:[%s1576 + $0x18] sm:$0xff]
            %v1581 = vld [vmem:[%s1576 + $0x20] sm:$0xff]
            %v1582 = vld [vmem:[%s1576 + $0x28] sm:$0xff]
            %v1583 = vld [vmem:[%s1576 + $0x30] sm:$0xff]
            %v1584 = vld [vmem:[%s1576 + $0x38] sm:$0xff]
            %v1585 = vld [vmem:[%s1576 + $0x40] sm:$0xff]
            %v1586 = vld [vmem:[%s1576 + $0x48] sm:$0xff]
            %v1587 = vld [vmem:[%s1576 + $0x50] sm:$0xff]
            %v1588 = vld [vmem:[%s1576 + $0x58] sm:$0xff]
            %v1589 = vld [vmem:[%s1576 + $0x60] sm:$0xff]
            %v1590 = vld [vmem:[%s1576 + $0x68] sm:$0xff]
            %v1591 = vld [vmem:[%s1576 + $0x70] sm:$0xff]
            %v1592 = vld [vmem:[%s1576 + $0x78] sm:$0xff]
            %v1593 = vmul.f32 %v1417, %v1577
            %v1594 = vmul.f32 %v1419, %v1578
            %v1595 = vmul.f32 %v1421, %v1579
            %v1596 = vmul.f32 %v1423, %v1580
            %v1597 = vmul.f32 %v1425, %v1581
            %v1598 = vmul.f32 %v1427, %v1582
            %v1599 = vmul.f32 %v1429, %v1583
            %v1600 = vmul.f32 %v1431, %v1584
            %v1601 = vmul.f32 %v1433, %v1585
            %v1602 = vmul.f32 %v1435, %v1586
            %v1603 = vmul.f32 %v1437, %v1587
            %v1604 = vmul.f32 %v1439, %v1588
            %v1605 = vmul.f32 %v1441, %v1589
            %v1606 = vmul.f32 %v1443, %v1590
            %v1607 = vmul.f32 %v1445, %v1591
            %v1608 = vmul.f32 %v1447, %v1592
            %1609 = vadd.xlane.f32.xlu0 %v1545
            %v1610 = vpop.xlane.xlu0 %1609
            %1611 = vadd.xlane.f32.xlu0 %v1547
            %v1612 = vpop.xlane.xlu0 %1611
            %1613 = vadd.xlane.f32.xlu0 %v1549
            %v1614 = vpop.xlane.xlu0 %1613
            %1615 = vadd.xlane.f32.xlu0 %v1551
            %v1616 = vpop.xlane.xlu0 %1615
            %1617 = vadd.xlane.f32.xlu0 %v1553
            %v1618 = vpop.xlane.xlu0 %1617
            %1619 = vadd.xlane.f32.xlu0 %v1555
            %v1620 = vpop.xlane.xlu0 %1619
            %1621 = vadd.xlane.f32.xlu0 %v1557
            %v1622 = vpop.xlane.xlu0 %1621
            %1623 = vadd.xlane.f32.xlu0 %v1559
            %v1624 = vpop.xlane.xlu0 %1623
            %1625 = vadd.xlane.f32.xlu0 %v1561
            %v1626 = vpop.xlane.xlu0 %1625
            %1627 = vadd.xlane.f32.xlu0 %v1563
            %v1628 = vpop.xlane.xlu0 %1627
            %1629 = vadd.xlane.f32.xlu0 %v1565
            %v1630 = vpop.xlane.xlu0 %1629
            %1631 = vadd.xlane.f32.xlu0 %v1567
            %v1632 = vpop.xlane.xlu0 %1631
            %1633 = vadd.xlane.f32.xlu0 %v1569
            %v1634 = vpop.xlane.xlu0 %1633
            %1635 = vadd.xlane.f32.xlu0 %v1571
            %v1636 = vpop.xlane.xlu0 %1635
            %1637 = vadd.xlane.f32.xlu0 %v1573
            %v1638 = vpop.xlane.xlu0 %1637
            %1639 = vadd.xlane.f32.xlu0 %v1575
            %v1640 = vpop.xlane.xlu0 %1639
            %v1641 = vadd.f32 %v1593, %v1610
            %v1642 = vadd.f32 %v1594, %v1612
            %v1643 = vadd.f32 %v1595, %v1614
            %v1644 = vadd.f32 %v1596, %v1616
            %v1645 = vadd.f32 %v1597, %v1618
            %v1646 = vadd.f32 %v1598, %v1620
            %v1647 = vadd.f32 %v1599, %v1622
            %v1648 = vadd.f32 %v1600, %v1624
            %v1649 = vadd.f32 %v1601, %v1626
            %v1650 = vadd.f32 %v1602, %v1628
            %v1651 = vadd.f32 %v1603, %v1630
            %v1652 = vadd.f32 %v1604, %v1632
            %v1653 = vadd.f32 %v1605, %v1634
            %v1654 = vadd.f32 %v1606, %v1636
            %v1655 = vadd.f32 %v1607, %v1638
            %v1656 = vadd.f32 %v1608, %v1640
            %vm1657 = vcmask 7168
            %1658 = vst.msk [vmem:[%s1576] sm:$0xff] %vm1657, %v1641
            %1659 = vst.msk [vmem:[%s1576 + $0x8] sm:$0xff] %vm1657, %v1642
            %1660 = vst.msk [vmem:[%s1576 + $0x10] sm:$0xff] %vm1657, %v1643
            %1661 = vst.msk [vmem:[%s1576 + $0x18] sm:$0xff] %vm1657, %v1644
            %1662 = vst.msk [vmem:[%s1576 + $0x20] sm:$0xff] %vm1657, %v1645
            %1663 = vst.msk [vmem:[%s1576 + $0x28] sm:$0xff] %vm1657, %v1646
            %1664 = vst.msk [vmem:[%s1576 + $0x30] sm:$0xff] %vm1657, %v1647
            %1665 = vst.msk [vmem:[%s1576 + $0x38] sm:$0xff] %vm1657, %v1648
            %1666 = vst.msk [vmem:[%s1576 + $0x40] sm:$0xff] %vm1657, %v1649
            %1667 = vst.msk [vmem:[%s1576 + $0x48] sm:$0xff] %vm1657, %v1650
            %1668 = vst.msk [vmem:[%s1576 + $0x50] sm:$0xff] %vm1657, %v1651
            %1669 = vst.msk [vmem:[%s1576 + $0x58] sm:$0xff] %vm1657, %v1652
            %1670 = vst.msk [vmem:[%s1576 + $0x60] sm:$0xff] %vm1657, %v1653
            %1671 = vst.msk [vmem:[%s1576 + $0x68] sm:$0xff] %vm1657, %v1654
            %1672 = vst.msk [vmem:[%s1576 + $0x70] sm:$0xff] %vm1657, %v1655
            %1673 = vst.msk [vmem:[%s1576 + $0x78] sm:$0xff] %vm1657, %v1656
            %s1674 = scalar_lea.vmem [#allocation4], %s1334
            %v1675 = vld [vmem:[%s1674] sm:$0xff]
            %v1676 = vld [vmem:[%s1674 + $0x8] sm:$0xff]
            %v1677 = vld [vmem:[%s1674 + $0x10] sm:$0xff]
            %v1678 = vld [vmem:[%s1674 + $0x18] sm:$0xff]
            %v1679 = vld [vmem:[%s1674 + $0x20] sm:$0xff]
            %v1680 = vld [vmem:[%s1674 + $0x28] sm:$0xff]
            %v1681 = vld [vmem:[%s1674 + $0x30] sm:$0xff]
            %v1682 = vld [vmem:[%s1674 + $0x38] sm:$0xff]
            %v1683 = vld [vmem:[%s1674 + $0x40] sm:$0xff]
            %v1684 = vld [vmem:[%s1674 + $0x48] sm:$0xff]
            %v1685 = vld [vmem:[%s1674 + $0x50] sm:$0xff]
            %v1686 = vld [vmem:[%s1674 + $0x58] sm:$0xff]
            %v1687 = vld [vmem:[%s1674 + $0x60] sm:$0xff]
            %v1688 = vld [vmem:[%s1674 + $0x68] sm:$0xff]
            %v1689 = vld [vmem:[%s1674 + $0x70] sm:$0xff]
            %v1690 = vld [vmem:[%s1674 + $0x78] sm:$0xff]
            %1692 = vset.pattern.permute.xlu0 0
            %1693 = vperm.xlu0 %1692, %v1417
            %v1694 = vpop.permute.xlu0 %1693
            %1697 = vset.pattern.permute.xlu0 0
            %1698 = vperm.xlu0 %1697, %v1419
            %v1699 = vpop.permute.xlu0 %1698
            %1702 = vset.pattern.permute.xlu0 0
            %1703 = vperm.xlu0 %1702, %v1421
            %v1704 = vpop.permute.xlu0 %1703
            %1707 = vset.pattern.permute.xlu0 0
            %1708 = vperm.xlu0 %1707, %v1423
            %v1709 = vpop.permute.xlu0 %1708
            %1712 = vset.pattern.permute.xlu0 0
            %1713 = vperm.xlu0 %1712, %v1425
            %v1714 = vpop.permute.xlu0 %1713
            %1717 = vset.pattern.permute.xlu0 0
            %1718 = vperm.xlu0 %1717, %v1427
            %v1719 = vpop.permute.xlu0 %1718
            %1722 = vset.pattern.permute.xlu0 0
            %1723 = vperm.xlu0 %1722, %v1429
            %v1724 = vpop.permute.xlu0 %1723
            %1727 = vset.pattern.permute.xlu0 0
            %1728 = vperm.xlu0 %1727, %v1431
            %v1729 = vpop.permute.xlu0 %1728
            %1732 = vset.pattern.permute.xlu0 0
            %1733 = vperm.xlu0 %1732, %v1433
            %v1734 = vpop.permute.xlu0 %1733
            %1737 = vset.pattern.permute.xlu0 0
            %1738 = vperm.xlu0 %1737, %v1435
            %v1739 = vpop.permute.xlu0 %1738
            %1742 = vset.pattern.permute.xlu0 0
            %1743 = vperm.xlu0 %1742, %v1437
            %v1744 = vpop.permute.xlu0 %1743
            %1747 = vset.pattern.permute.xlu0 0
            %1748 = vperm.xlu0 %1747, %v1439
            %v1749 = vpop.permute.xlu0 %1748
            %1752 = vset.pattern.permute.xlu0 0
            %1753 = vperm.xlu0 %1752, %v1441
            %v1754 = vpop.permute.xlu0 %1753
            %1757 = vset.pattern.permute.xlu0 0
            %1758 = vperm.xlu0 %1757, %v1443
            %v1759 = vpop.permute.xlu0 %1758
            %1762 = vset.pattern.permute.xlu0 0
            %1763 = vperm.xlu0 %1762, %v1445
            %v1764 = vpop.permute.xlu0 %1763
            %1767 = vset.pattern.permute.xlu0 0
            %1768 = vperm.xlu0 %1767, %v1447
            %v1769 = vpop.permute.xlu0 %1768
            %v1771 = vmul.f32 %v1694, %v1675
            %v1772 = vmul.f32 %v1699, %v1676
            %v1773 = vmul.f32 %v1704, %v1677
            %v1774 = vmul.f32 %v1709, %v1678
            %v1775 = vmul.f32 %v1714, %v1679
            %v1776 = vmul.f32 %v1719, %v1680
            %v1777 = vmul.f32 %v1724, %v1681
            %v1778 = vmul.f32 %v1729, %v1682
            %v1779 = vmul.f32 %v1734, %v1683
            %v1780 = vmul.f32 %v1739, %v1684
            %v1781 = vmul.f32 %v1744, %v1685
            %v1782 = vmul.f32 %v1749, %v1686
            %v1783 = vmul.f32 %v1754, %v1687
            %v1784 = vmul.f32 %v1759, %v1688
            %v1785 = vmul.f32 %v1764, %v1689
            %v1786 = vmul.f32 %v1769, %v1690
            %v1787 = vpack.c.bf16 %v1547, %v1545
            %v1788 = vpack.c.bf16 %v1551, %v1549
            %v1789 = vpack.c.bf16 %v1555, %v1553
            %v1790 = vpack.c.bf16 %v1559, %v1557
            %v1791 = vpack.c.bf16 %v1563, %v1561
            %v1792 = vpack.c.bf16 %v1567, %v1565
            %v1793 = vpack.c.bf16 %v1571, %v1569
            %v1794 = vpack.c.bf16 %v1575, %v1573
            %v1811 = vunpack.c.l.b16 %v1140
            %v1812 = vunpack.c.l.b16 %v1141
            %v1813 = vunpack.c.l.b16 %v1142
            %v1814 = vunpack.c.l.b16 %v1143
            %v1815 = vunpack.c.l.b16 %v1144
            %v1816 = vunpack.c.l.b16 %v1145
            %v1817 = vunpack.c.l.b16 %v1146
            %v1818 = vunpack.c.l.b16 %v1147
            %v1819 = vunpack.c.l.b16 %v1148
            %v1820 = vunpack.c.l.b16 %v1149
            %v1821 = vunpack.c.l.b16 %v1150
            %v1822 = vunpack.c.l.b16 %v1151
            %v1823 = vunpack.c.l.b16 %v1152
            %v1824 = vunpack.c.l.b16 %v1153
            %v1825 = vunpack.c.l.b16 %v1154
            %v1826 = vunpack.c.l.b16 %v1155
            %v1827 = vpack.c.b16 %v1812, %v1811
            %v1828 = vpack.c.b16 %v1814, %v1813
            %v1829 = vpack.c.b16 %v1816, %v1815
            %v1830 = vpack.c.b16 %v1818, %v1817
            %v1831 = vpack.c.b16 %v1820, %v1819
            %v1832 = vpack.c.b16 %v1822, %v1821
            %v1833 = vpack.c.b16 %v1824, %v1823
            %v1834 = vpack.c.b16 %v1826, %v1825
            %1843 = vmatpush.bf16.msra.mxu0 %v1834
            %1844 = vmatpush.bf16.msra.mxu0 %v1833
            %1845 = vmatpush.bf16.msra.mxu0 %v1832
            %1846 = vmatpush.bf16.msra.mxu0 %v1831
            %1847 = vmatpush.bf16.msra.mxu0 %v1830
            %1848 = vmatpush.bf16.msra.mxu0 %v1829
            %1849 = vmatpush.bf16.msra.mxu0 %v1828
            %1850 = vmatpush.bf16.msra.mxu0 %v1827
            %1851 = vmatmul.bf16.gmra.mxu0 %v1787
            %v1852 = vpop.f32.mrf.mxu0
            %v1853 = vadd.f32 0.0, %v1852
            %v1854 = vpop.f32.mrf.mxu0
            %v1855 = vadd.f32 0.0, %v1854
            %1856 = vmatmul.bf16.gmra.mxu0 %v1788
            %v1857 = vpop.f32.mrf.mxu0
            %v1858 = vadd.f32 0.0, %v1857
            %v1859 = vpop.f32.mrf.mxu0
            %v1860 = vadd.f32 0.0, %v1859
            %1861 = vmatmul.bf16.gmra.mxu0 %v1789
            %v1862 = vpop.f32.mrf.mxu0
            %v1863 = vadd.f32 0.0, %v1862
            %v1864 = vpop.f32.mrf.mxu0
            %v1865 = vadd.f32 0.0, %v1864
            %1866 = vmatmul.bf16.gmra.mxu0 %v1790
            %v1867 = vpop.f32.mrf.mxu0
            %v1868 = vadd.f32 0.0, %v1867
            %v1869 = vpop.f32.mrf.mxu0
            %v1870 = vadd.f32 0.0, %v1869
            %1871 = vmatmul.bf16.gmra.mxu0 %v1791
            %v1872 = vpop.f32.mrf.mxu0
            %v1873 = vadd.f32 0.0, %v1872
            %v1874 = vpop.f32.mrf.mxu0
            %v1875 = vadd.f32 0.0, %v1874
            %1876 = vmatmul.bf16.gmra.mxu0 %v1792
            %v1877 = vpop.f32.mrf.mxu0
            %v1878 = vadd.f32 0.0, %v1877
            %v1879 = vpop.f32.mrf.mxu0
            %v1880 = vadd.f32 0.0, %v1879
            %1881 = vmatmul.bf16.gmra.mxu0 %v1793
            %v1882 = vpop.f32.mrf.mxu0
            %v1883 = vadd.f32 0.0, %v1882
            %v1884 = vpop.f32.mrf.mxu0
            %v1885 = vadd.f32 0.0, %v1884
            %1886 = vmatmul.bf16.gmra.mxu0 %v1794
            %v1887 = vpop.f32.mrf.mxu0
            %v1888 = vadd.f32 0.0, %v1887
            %v1889 = vpop.f32.mrf.mxu0
            %v1890 = vadd.f32 0.0, %v1889
            %1891 = vdwg.mxu0
            %v1892 = vadd.f32 %v1771, %v1853
            %v1893 = vadd.f32 %v1772, %v1855
            %v1894 = vadd.f32 %v1773, %v1858
            %v1895 = vadd.f32 %v1774, %v1860
            %v1896 = vadd.f32 %v1775, %v1863
            %v1897 = vadd.f32 %v1776, %v1865
            %v1898 = vadd.f32 %v1777, %v1868
            %v1899 = vadd.f32 %v1778, %v1870
            %v1900 = vadd.f32 %v1779, %v1873
            %v1901 = vadd.f32 %v1780, %v1875
            %v1902 = vadd.f32 %v1781, %v1878
            %v1903 = vadd.f32 %v1782, %v1880
            %v1904 = vadd.f32 %v1783, %v1883
            %v1905 = vadd.f32 %v1784, %v1885
            %v1906 = vadd.f32 %v1785, %v1888
            %v1907 = vadd.f32 %v1786, %v1890
            %1908 = vst.msk [vmem:[%s1674] sm:$0xff] %vm1236, %v1892
            %1909 = vst.msk [vmem:[%s1674 + $0x8] sm:$0xff] %vm1236, %v1893
            %1910 = vst.msk [vmem:[%s1674 + $0x10] sm:$0xff] %vm1236, %v1894
            %1911 = vst.msk [vmem:[%s1674 + $0x18] sm:$0xff] %vm1236, %v1895
            %1912 = vst.msk [vmem:[%s1674 + $0x20] sm:$0xff] %vm1236, %v1896
            %1913 = vst.msk [vmem:[%s1674 + $0x28] sm:$0xff] %vm1236, %v1897
            %1914 = vst.msk [vmem:[%s1674 + $0x30] sm:$0xff] %vm1236, %v1898
            %1915 = vst.msk [vmem:[%s1674 + $0x38] sm:$0xff] %vm1236, %v1899
            %1916 = vst.msk [vmem:[%s1674 + $0x40] sm:$0xff] %vm1236, %v1900
            %1917 = vst.msk [vmem:[%s1674 + $0x48] sm:$0xff] %vm1236, %v1901
            %1918 = vst.msk [vmem:[%s1674 + $0x50] sm:$0xff] %vm1236, %v1902
            %1919 = vst.msk [vmem:[%s1674 + $0x58] sm:$0xff] %vm1236, %v1903
            %1920 = vst.msk [vmem:[%s1674 + $0x60] sm:$0xff] %vm1236, %v1904
            %1921 = vst.msk [vmem:[%s1674 + $0x68] sm:$0xff] %vm1236, %v1905
            %1922 = vst.msk [vmem:[%s1674 + $0x70] sm:$0xff] %vm1236, %v1906
            %1923 = vst.msk [vmem:[%s1674 + $0x78] sm:$0xff] %vm1236, %v1907
            %1924 = vst.msk [vmem:[%s1335] sm:$0xff] %vm1657, %v1384
            %1925 = vst.msk [vmem:[%s1335 + $0x8] sm:$0xff] %vm1657, %v1385
            %1926 = vst.msk [vmem:[%s1335 + $0x10] sm:$0xff] %vm1657, %v1386
            %1927 = vst.msk [vmem:[%s1335 + $0x18] sm:$0xff] %vm1657, %v1387
            %1928 = vst.msk [vmem:[%s1335 + $0x20] sm:$0xff] %vm1657, %v1388
            %1929 = vst.msk [vmem:[%s1335 + $0x28] sm:$0xff] %vm1657, %v1389
            %1930 = vst.msk [vmem:[%s1335 + $0x30] sm:$0xff] %vm1657, %v1390
            %1931 = vst.msk [vmem:[%s1335 + $0x38] sm:$0xff] %vm1657, %v1391
            %1932 = vst.msk [vmem:[%s1335 + $0x40] sm:$0xff] %vm1657, %v1392
            %1933 = vst.msk [vmem:[%s1335 + $0x48] sm:$0xff] %vm1657, %v1393
            %1934 = vst.msk [vmem:[%s1335 + $0x50] sm:$0xff] %vm1657, %v1394
            %1935 = vst.msk [vmem:[%s1335 + $0x58] sm:$0xff] %vm1657, %v1395
            %1936 = vst.msk [vmem:[%s1335 + $0x60] sm:$0xff] %vm1657, %v1396
            %1937 = vst.msk [vmem:[%s1335 + $0x68] sm:$0xff] %vm1657, %v1397
            %1938 = vst.msk [vmem:[%s1335 + $0x70] sm:$0xff] %vm1657, %v1398
            %1939 = vst.msk [vmem:[%s1335 + $0x78] sm:$0xff] %vm1657, %v1399
          $region168: #{causal_self_attention.4} parent=162 // loop_footer
            %s1100 = sadd.s32 1, %s1096
          $region169: #{causal_self_attention.4} parent=162 // loop_footer_branch
            %1095 = sbr.rel target = $region165
          $region170: #{causal_self_attention.4} parent=162 // loop_exit
            _
        $region163: #{causal_self_attention.4} parent=142 // pred_fallthru
          _
        %p1940 = scmp.eq.s32.totalorder %s599, %s598
        // Predicated region
        $region171: #{causal_self_attention.4} parent=142 // pred_check
          %p1941 = pneg %p1940
        $region172: #{causal_self_attention.4} parent=142 // pred_check_branch
          %1943 = sbr.rel (%p1941) target = $region174
        $region173: #{causal_self_attention.4} parent=142 // pred_region
          %v1944 = vlaneseq
          %v1945 = vshrl.u32 %v1944, 7
          %v1946 = vadd.s32 %v1945, 8
          %v1947 = vadd.s32 %v1945, 16
          %v1948 = vadd.s32 %v1945, 24
          %v1949 = vadd.s32 %v1945, 32
          %v1950 = vadd.s32 %v1945, 40
          %v1951 = vadd.s32 %v1945, 48
          %v1952 = vadd.s32 %v1945, 56
          %v1953 = vadd.s32 %v1945, 64
          %v1954 = vadd.s32 %v1945, 72
          %v1955 = vadd.s32 %v1945, 80
          %v1956 = vadd.s32 %v1945, 88
          %v1957 = vadd.s32 %v1945, 96
          %v1958 = vadd.s32 %v1945, 104
          %v1959 = vadd.s32 %v1945, 112
          %v1960 = vadd.s32 %v1945, 120
          %v1961 = vlaneseq
          %v1962 = vand.u32 %v1961, 127
          %vm1963 = vcmp.le.s32.totalorder %v1962, %v1945
          %vm1964 = vcmp.le.s32.totalorder %v1962, %v1946
          %vm1965 = vcmp.le.s32.totalorder %v1962, %v1947
          %vm1966 = vcmp.le.s32.totalorder %v1962, %v1948
          %vm1967 = vcmp.le.s32.totalorder %v1962, %v1949
          %vm1968 = vcmp.le.s32.totalorder %v1962, %v1950
          %vm1969 = vcmp.le.s32.totalorder %v1962, %v1951
          %vm1970 = vcmp.le.s32.totalorder %v1962, %v1952
          %vm1971 = vcmp.le.s32.totalorder %v1962, %v1953
          %vm1972 = vcmp.le.s32.totalorder %v1962, %v1954
          %vm1973 = vcmp.le.s32.totalorder %v1962, %v1955
          %vm1974 = vcmp.le.s32.totalorder %v1962, %v1956
          %vm1975 = vcmp.le.s32.totalorder %v1962, %v1957
          %vm1976 = vcmp.le.s32.totalorder %v1962, %v1958
          %vm1977 = vcmp.le.s32.totalorder %v1962, %v1959
          %vm1978 = vcmp.le.s32.totalorder %v1962, %v1960
          loop: start=0, step=1, limit=2
          $region175: #{causal_self_attention.4} parent=173 // loop_pre_header
            _
          $region176: #{causal_self_attention.4} parent=173 // loop_header
            %s1980 = sphi 0, %s1984
            %p1981 = scmp.ge.s32.totalorder %s1980, 2
          $region177: #{causal_self_attention.4} parent=173 // loop_header_branch
            %1983 = sbr.rel (%p1981) target = $region181
          $region178: #{causal_self_attention.4} parent=173 // loop_body
            %s1985 = smul.u32 %s1980, 16
            %s1986 = smul.addr %s1985, 4
            %s1987 = scalar_lea.vmem [#allocation5], %s1986
            %v1988 = vld [vmem:[%s1987] sm:$0xf]
            %v1989 = vld [vmem:[%s1987 + $0x4] sm:$0xf]
            %v1990 = vld [vmem:[%s1987 + $0x8] sm:$0xf]
            %v1991 = vld [vmem:[%s1987 + $0xc] sm:$0xf]
            %v1992 = vld [vmem:[%s1987 + $0x10] sm:$0xf]
            %v1993 = vld [vmem:[%s1987 + $0x14] sm:$0xf]
            %v1994 = vld [vmem:[%s1987 + $0x18] sm:$0xf]
            %v1995 = vld [vmem:[%s1987 + $0x1c] sm:$0xf]
            %v1996 = vld [vmem:[%s1987 + $0x20] sm:$0xf]
            %v1997 = vld [vmem:[%s1987 + $0x24] sm:$0xf]
            %v1998 = vld [vmem:[%s1987 + $0x28] sm:$0xf]
            %v1999 = vld [vmem:[%s1987 + $0x2c] sm:$0xf]
            %v2000 = vld [vmem:[%s1987 + $0x30] sm:$0xf]
            %v2001 = vld [vmem:[%s1987 + $0x34] sm:$0xf]
            %v2002 = vld [vmem:[%s1987 + $0x38] sm:$0xf]
            %v2003 = vld [vmem:[%s1987 + $0x3c] sm:$0xf]
            %s2004 = smul.addr %s1985, 4
            %s2005 = scalar_lea.vmem [#allocation6], %s2004
            %v2006 = vld [vmem:[%s2005] sm:$0xf]
            %v2007 = vld [vmem:[%s2005 + $0x4] sm:$0xf]
            %v2008 = vld [vmem:[%s2005 + $0x8] sm:$0xf]
            %v2009 = vld [vmem:[%s2005 + $0xc] sm:$0xf]
            %v2010 = vld [vmem:[%s2005 + $0x10] sm:$0xf]
            %v2011 = vld [vmem:[%s2005 + $0x14] sm:$0xf]
            %v2012 = vld [vmem:[%s2005 + $0x18] sm:$0xf]
            %v2013 = vld [vmem:[%s2005 + $0x1c] sm:$0xf]
            %v2014 = vld [vmem:[%s2005 + $0x20] sm:$0xf]
            %v2015 = vld [vmem:[%s2005 + $0x24] sm:$0xf]
            %v2016 = vld [vmem:[%s2005 + $0x28] sm:$0xf]
            %v2017 = vld [vmem:[%s2005 + $0x2c] sm:$0xf]
            %v2018 = vld [vmem:[%s2005 + $0x30] sm:$0xf]
            %v2019 = vld [vmem:[%s2005 + $0x34] sm:$0xf]
            %v2020 = vld [vmem:[%s2005 + $0x38] sm:$0xf]
            %v2021 = vld [vmem:[%s2005 + $0x3c] sm:$0xf]
            %s2022 = smul.addr %s1985, 4
            %s2023 = scalar_lea.vmem [#allocation7], %s2022
            %v2024 = vld [vmem:[%s2023] sm:$0xf]
            %v2025 = vld [vmem:[%s2023 + $0x4] sm:$0xf]
            %v2026 = vld [vmem:[%s2023 + $0x8] sm:$0xf]
            %v2027 = vld [vmem:[%s2023 + $0xc] sm:$0xf]
            %v2028 = vld [vmem:[%s2023 + $0x10] sm:$0xf]
            %v2029 = vld [vmem:[%s2023 + $0x14] sm:$0xf]
            %v2030 = vld [vmem:[%s2023 + $0x18] sm:$0xf]
            %v2031 = vld [vmem:[%s2023 + $0x1c] sm:$0xf]
            %v2032 = vld [vmem:[%s2023 + $0x20] sm:$0xf]
            %v2033 = vld [vmem:[%s2023 + $0x24] sm:$0xf]
            %v2034 = vld [vmem:[%s2023 + $0x28] sm:$0xf]
            %v2035 = vld [vmem:[%s2023 + $0x2c] sm:$0xf]
            %v2036 = vld [vmem:[%s2023 + $0x30] sm:$0xf]
            %v2037 = vld [vmem:[%s2023 + $0x34] sm:$0xf]
            %v2038 = vld [vmem:[%s2023 + $0x38] sm:$0xf]
            %v2039 = vld [vmem:[%s2023 + $0x3c] sm:$0xf]
            %v2056 = vunpack.c.l.b16 %v1988
            %v2057 = vunpack.c.l.b16 %v1989
            %v2058 = vunpack.c.l.b16 %v1990
            %v2059 = vunpack.c.l.b16 %v1991
            %v2060 = vunpack.c.l.b16 %v1992
            %v2061 = vunpack.c.l.b16 %v1993
            %v2062 = vunpack.c.l.b16 %v1994
            %v2063 = vunpack.c.l.b16 %v1995
            %v2064 = vunpack.c.l.b16 %v1996
            %v2065 = vunpack.c.l.b16 %v1997
            %v2066 = vunpack.c.l.b16 %v1998
            %v2067 = vunpack.c.l.b16 %v1999
            %v2068 = vunpack.c.l.b16 %v2000
            %v2069 = vunpack.c.l.b16 %v2001
            %v2070 = vunpack.c.l.b16 %v2002
            %v2071 = vunpack.c.l.b16 %v2003
            %v2072 = vpack.c.b16 %v2057, %v2056
            %v2073 = vpack.c.b16 %v2059, %v2058
            %v2074 = vpack.c.b16 %v2061, %v2060
            %v2075 = vpack.c.b16 %v2063, %v2062
            %v2076 = vpack.c.b16 %v2065, %v2064
            %v2077 = vpack.c.b16 %v2067, %v2066
            %v2078 = vpack.c.b16 %v2069, %v2068
            %v2079 = vpack.c.b16 %v2071, %v2070
            %v2096 = vunpack.c.l.b16 %v2006
            %v2097 = vunpack.c.l.b16 %v2007
            %v2098 = vunpack.c.l.b16 %v2008
            %v2099 = vunpack.c.l.b16 %v2009
            %v2100 = vunpack.c.l.b16 %v2010
            %v2101 = vunpack.c.l.b16 %v2011
            %v2102 = vunpack.c.l.b16 %v2012
            %v2103 = vunpack.c.l.b16 %v2013
            %v2104 = vunpack.c.l.b16 %v2014
            %v2105 = vunpack.c.l.b16 %v2015
            %v2106 = vunpack.c.l.b16 %v2016
            %v2107 = vunpack.c.l.b16 %v2017
            %v2108 = vunpack.c.l.b16 %v2018
            %v2109 = vunpack.c.l.b16 %v2019
            %v2110 = vunpack.c.l.b16 %v2020
            %v2111 = vunpack.c.l.b16 %v2021
            %v2112 = vpack.c.b16 %v2097, %v2096
            %v2113 = vpack.c.b16 %v2099, %v2098
            %v2114 = vpack.c.b16 %v2101, %v2100
            %v2115 = vpack.c.b16 %v2103, %v2102
            %v2116 = vpack.c.b16 %v2105, %v2104
            %v2117 = vpack.c.b16 %v2107, %v2106
            %v2118 = vpack.c.b16 %v2109, %v2108
            %v2119 = vpack.c.b16 %v2111, %v2110
            %vm2120 = vcmask 523264
            %v2122 = vsel %vm2120, %v2072, 0
            %v2125 = vsel %vm2120, %v2073, 0
            %v2128 = vsel %vm2120, %v2074, 0
            %v2131 = vsel %vm2120, %v2075, 0
            %v2134 = vsel %vm2120, %v2076, 0
            %v2137 = vsel %vm2120, %v2077, 0
            %v2140 = vsel %vm2120, %v2078, 0
            %v2143 = vsel %vm2120, %v2079, 0
            %v2146 = vsel %vm2120, %v2112, 0
            %v2149 = vsel %vm2120, %v2113, 0
            %v2152 = vsel %vm2120, %v2114, 0
            %v2155 = vsel %vm2120, %v2115, 0
            %v2158 = vsel %vm2120, %v2116, 0
            %v2161 = vsel %vm2120, %v2117, 0
            %v2164 = vsel %vm2120, %v2118, 0
            %v2167 = vsel %vm2120, %v2119, 0
            %2169 = vmatpush.bf16.xpose.msra.mxu0 %v2167
            %2170 = vmatpush.bf16.xpose.msra.mxu0 %v2164
            %2171 = vmatpush.bf16.xpose.msra.mxu0 %v2161
            %2172 = vmatpush.bf16.xpose.msra.mxu0 %v2158
            %2173 = vmatpush.bf16.xpose.msra.mxu0 %v2155
            %2174 = vmatpush.bf16.xpose.msra.mxu0 %v2152
            %2175 = vmatpush.bf16.xpose.msra.mxu0 %v2149
            %2176 = vmatpush.bf16.xpose.msra.mxu0 %v2146
            %2177 = vmatmul.bf16.gmra.mxu0 %v2122
            %v2178 = vpop.f32.mrf.mxu0
            %v2179 = vadd.f32 0.0, %v2178
            %v2180 = vpop.f32.mrf.mxu0
            %v2181 = vadd.f32 0.0, %v2180
            %2182 = vmatmul.bf16.gmra.mxu0 %v2125
            %v2183 = vpop.f32.mrf.mxu0
            %v2184 = vadd.f32 0.0, %v2183
            %v2185 = vpop.f32.mrf.mxu0
            %v2186 = vadd.f32 0.0, %v2185
            %2187 = vmatmul.bf16.gmra.mxu0 %v2128
            %v2188 = vpop.f32.mrf.mxu0
            %v2189 = vadd.f32 0.0, %v2188
            %v2190 = vpop.f32.mrf.mxu0
            %v2191 = vadd.f32 0.0, %v2190
            %2192 = vmatmul.bf16.gmra.mxu0 %v2131
            %v2193 = vpop.f32.mrf.mxu0
            %v2194 = vadd.f32 0.0, %v2193
            %v2195 = vpop.f32.mrf.mxu0
            %v2196 = vadd.f32 0.0, %v2195
            %2197 = vmatmul.bf16.gmra.mxu0 %v2134
            %v2198 = vpop.f32.mrf.mxu0
            %v2199 = vadd.f32 0.0, %v2198
            %v2200 = vpop.f32.mrf.mxu0
            %v2201 = vadd.f32 0.0, %v2200
            %2202 = vmatmul.bf16.gmra.mxu0 %v2137
            %v2203 = vpop.f32.mrf.mxu0
            %v2204 = vadd.f32 0.0, %v2203
            %v2205 = vpop.f32.mrf.mxu0
            %v2206 = vadd.f32 0.0, %v2205
            %2207 = vmatmul.bf16.gmra.mxu0 %v2140
            %v2208 = vpop.f32.mrf.mxu0
            %v2209 = vadd.f32 0.0, %v2208
            %v2210 = vpop.f32.mrf.mxu0
            %v2211 = vadd.f32 0.0, %v2210
            %2212 = vmatmul.bf16.gmra.mxu0 %v2143
            %v2213 = vpop.f32.mrf.mxu0
            %v2214 = vadd.f32 0.0, %v2213
            %v2215 = vpop.f32.mrf.mxu0
            %v2216 = vadd.f32 0.0, %v2215
            %2217 = vdwg.mxu0
            %v2218 = vsel %vm1963, %v2179, -1e+30
            %v2219 = vsel %vm1964, %v2181, -1e+30
            %v2220 = vsel %vm1965, %v2184, -1e+30
            %v2221 = vsel %vm1966, %v2186, -1e+30
            %v2222 = vsel %vm1967, %v2189, -1e+30
            %v2223 = vsel %vm1968, %v2191, -1e+30
            %v2224 = vsel %vm1969, %v2194, -1e+30
            %v2225 = vsel %vm1970, %v2196, -1e+30
            %v2226 = vsel %vm1971, %v2199, -1e+30
            %v2227 = vsel %vm1972, %v2201, -1e+30
            %v2228 = vsel %vm1973, %v2204, -1e+30
            %v2229 = vsel %vm1974, %v2206, -1e+30
            %v2230 = vsel %vm1975, %v2209, -1e+30
            %v2231 = vsel %vm1976, %v2211, -1e+30
            %v2232 = vsel %vm1977, %v2214, -1e+30
            %v2233 = vsel %vm1978, %v2216, -1e+30
            %s2234 = smul.u32 %s1980, 128
            %s2235 = scalar_lea.vmem [#allocation2], %s2234
            %v2236 = vld [vmem:[%s2235] sm:$0xff]
            %v2237 = vld [vmem:[%s2235 + $0x8] sm:$0xff]
            %v2238 = vld [vmem:[%s2235 + $0x10] sm:$0xff]
            %v2239 = vld [vmem:[%s2235 + $0x18] sm:$0xff]
            %v2240 = vld [vmem:[%s2235 + $0x20] sm:$0xff]
            %v2241 = vld [vmem:[%s2235 + $0x28] sm:$0xff]
            %v2242 = vld [vmem:[%s2235 + $0x30] sm:$0xff]
            %v2243 = vld [vmem:[%s2235 + $0x38] sm:$0xff]
            %v2244 = vld [vmem:[%s2235 + $0x40] sm:$0xff]
            %v2245 = vld [vmem:[%s2235 + $0x48] sm:$0xff]
            %v2246 = vld [vmem:[%s2235 + $0x50] sm:$0xff]
            %v2247 = vld [vmem:[%s2235 + $0x58] sm:$0xff]
            %v2248 = vld [vmem:[%s2235 + $0x60] sm:$0xff]
            %v2249 = vld [vmem:[%s2235 + $0x68] sm:$0xff]
            %v2250 = vld [vmem:[%s2235 + $0x70] sm:$0xff]
            %v2251 = vld [vmem:[%s2235 + $0x78] sm:$0xff]
            %2252 = vmax.xlane.f32.xlu0 %v2218
            %v2253 = vpop.xlane.xlu0 %2252
            %2254 = vmax.xlane.f32.xlu0 %v2219
            %v2255 = vpop.xlane.xlu0 %2254
            %2256 = vmax.xlane.f32.xlu0 %v2220
            %v2257 = vpop.xlane.xlu0 %2256
            %2258 = vmax.xlane.f32.xlu0 %v2221
            %v2259 = vpop.xlane.xlu0 %2258
            %2260 = vmax.xlane.f32.xlu0 %v2222
            %v2261 = vpop.xlane.xlu0 %2260
            %2262 = vmax.xlane.f32.xlu0 %v2223
            %v2263 = vpop.xlane.xlu0 %2262
            %2264 = vmax.xlane.f32.xlu0 %v2224
            %v2265 = vpop.xlane.xlu0 %2264
            %2266 = vmax.xlane.f32.xlu0 %v2225
            %v2267 = vpop.xlane.xlu0 %2266
            %2268 = vmax.xlane.f32.xlu0 %v2226
            %v2269 = vpop.xlane.xlu0 %2268
            %2270 = vmax.xlane.f32.xlu0 %v2227
            %v2271 = vpop.xlane.xlu0 %2270
            %2272 = vmax.xlane.f32.xlu0 %v2228
            %v2273 = vpop.xlane.xlu0 %2272
            %2274 = vmax.xlane.f32.xlu0 %v2229
            %v2275 = vpop.xlane.xlu0 %2274
            %2276 = vmax.xlane.f32.xlu0 %v2230
            %v2277 = vpop.xlane.xlu0 %2276
            %2278 = vmax.xlane.f32.xlu0 %v2231
            %v2279 = vpop.xlane.xlu0 %2278
            %2280 = vmax.xlane.f32.xlu0 %v2232
            %v2281 = vpop.xlane.xlu0 %2280
            %2282 = vmax.xlane.f32.xlu0 %v2233
            %v2283 = vpop.xlane.xlu0 %2282
            %v2284 = vmax.f32 %v2236, %v2253
            %v2285 = vmax.f32 %v2237, %v2255
            %v2286 = vmax.f32 %v2238, %v2257
            %v2287 = vmax.f32 %v2239, %v2259
            %v2288 = vmax.f32 %v2240, %v2261
            %v2289 = vmax.f32 %v2241, %v2263
            %v2290 = vmax.f32 %v2242, %v2265
            %v2291 = vmax.f32 %v2243, %v2267
            %v2292 = vmax.f32 %v2244, %v2269
            %v2293 = vmax.f32 %v2245, %v2271
            %v2294 = vmax.f32 %v2246, %v2273
            %v2295 = vmax.f32 %v2247, %v2275
            %v2296 = vmax.f32 %v2248, %v2277
            %v2297 = vmax.f32 %v2249, %v2279
            %v2298 = vmax.f32 %v2250, %v2281
            %v2299 = vmax.f32 %v2251, %v2283
            %v2300 = vsub.f32 %v2236, %v2284
            %v2301 = vsub.f32 %v2237, %v2285
            %v2302 = vsub.f32 %v2238, %v2286
            %v2303 = vsub.f32 %v2239, %v2287
            %v2304 = vsub.f32 %v2240, %v2288
            %v2305 = vsub.f32 %v2241, %v2289
            %v2306 = vsub.f32 %v2242, %v2290
            %v2307 = vsub.f32 %v2243, %v2291
            %v2308 = vsub.f32 %v2244, %v2292
            %v2309 = vsub.f32 %v2245, %v2293
            %v2310 = vsub.f32 %v2246, %v2294
            %v2311 = vsub.f32 %v2247, %v2295
            %v2312 = vsub.f32 %v2248, %v2296
            %v2313 = vsub.f32 %v2249, %v2297
            %v2314 = vsub.f32 %v2250, %v2298
            %v2315 = vsub.f32 %v2251, %v2299
            %v2316 = vmul.f32 %v2300, 1.442695
            %v2317 = vpow.pop %v2316
            %v2318 = vmul.f32 %v2301, 1.442695
            %v2319 = vpow.pop %v2318
            %v2320 = vmul.f32 %v2302, 1.442695
            %v2321 = vpow.pop %v2320
            %v2322 = vmul.f32 %v2303, 1.442695
            %v2323 = vpow.pop %v2322
            %v2324 = vmul.f32 %v2304, 1.442695
            %v2325 = vpow.pop %v2324
            %v2326 = vmul.f32 %v2305, 1.442695
            %v2327 = vpow.pop %v2326
            %v2328 = vmul.f32 %v2306, 1.442695
            %v2329 = vpow.pop %v2328
            %v2330 = vmul.f32 %v2307, 1.442695
            %v2331 = vpow.pop %v2330
            %v2332 = vmul.f32 %v2308, 1.442695
            %v2333 = vpow.pop %v2332
            %v2334 = vmul.f32 %v2309, 1.442695
            %v2335 = vpow.pop %v2334
            %v2336 = vmul.f32 %v2310, 1.442695
            %v2337 = vpow.pop %v2336
            %v2338 = vmul.f32 %v2311, 1.442695
            %v2339 = vpow.pop %v2338
            %v2340 = vmul.f32 %v2312, 1.442695
            %v2341 = vpow.pop %v2340
            %v2342 = vmul.f32 %v2313, 1.442695
            %v2343 = vpow.pop %v2342
            %v2344 = vmul.f32 %v2314, 1.442695
            %v2345 = vpow.pop %v2344
            %v2346 = vmul.f32 %v2315, 1.442695
            %v2347 = vpow.pop %v2346
            %2349 = vset.pattern.permute.xlu0 0
            %2350 = vperm.xlu0 %2349, %v2284
            %v2351 = vpop.permute.xlu0 %2350
            %2354 = vset.pattern.permute.xlu0 0
            %2355 = vperm.xlu0 %2354, %v2285
            %v2356 = vpop.permute.xlu0 %2355
            %2359 = vset.pattern.permute.xlu0 0
            %2360 = vperm.xlu0 %2359, %v2286
            %v2361 = vpop.permute.xlu0 %2360
            %2364 = vset.pattern.permute.xlu0 0
            %2365 = vperm.xlu0 %2364, %v2287
            %v2366 = vpop.permute.xlu0 %2365
            %2369 = vset.pattern.permute.xlu0 0
            %2370 = vperm.xlu0 %2369, %v2288
            %v2371 = vpop.permute.xlu0 %2370
            %2374 = vset.pattern.permute.xlu0 0
            %2375 = vperm.xlu0 %2374, %v2289
            %v2376 = vpop.permute.xlu0 %2375
            %2379 = vset.pattern.permute.xlu0 0
            %2380 = vperm.xlu0 %2379, %v2290
            %v2381 = vpop.permute.xlu0 %2380
            %2384 = vset.pattern.permute.xlu0 0
            %2385 = vperm.xlu0 %2384, %v2291
            %v2386 = vpop.permute.xlu0 %2385
            %2389 = vset.pattern.permute.xlu0 0
            %2390 = vperm.xlu0 %2389, %v2292
            %v2391 = vpop.permute.xlu0 %2390
            %2394 = vset.pattern.permute.xlu0 0
            %2395 = vperm.xlu0 %2394, %v2293
            %v2396 = vpop.permute.xlu0 %2395
            %2399 = vset.pattern.permute.xlu0 0
            %2400 = vperm.xlu0 %2399, %v2294
            %v2401 = vpop.permute.xlu0 %2400
            %2404 = vset.pattern.permute.xlu0 0
            %2405 = vperm.xlu0 %2404, %v2295
            %v2406 = vpop.permute.xlu0 %2405
            %2409 = vset.pattern.permute.xlu0 0
            %2410 = vperm.xlu0 %2409, %v2296
            %v2411 = vpop.permute.xlu0 %2410
            %2414 = vset.pattern.permute.xlu0 0
            %2415 = vperm.xlu0 %2414, %v2297
            %v2416 = vpop.permute.xlu0 %2415
            %2419 = vset.pattern.permute.xlu0 0
            %2420 = vperm.xlu0 %2419, %v2298
            %v2421 = vpop.permute.xlu0 %2420
            %2424 = vset.pattern.permute.xlu0 0
            %2425 = vperm.xlu0 %2424, %v2299
            %v2426 = vpop.permute.xlu0 %2425
            %v2428 = vsub.f32 %v2218, %v2351
            %v2429 = vsub.f32 %v2219, %v2356
            %v2430 = vsub.f32 %v2220, %v2361
            %v2431 = vsub.f32 %v2221, %v2366
            %v2432 = vsub.f32 %v2222, %v2371
            %v2433 = vsub.f32 %v2223, %v2376
            %v2434 = vsub.f32 %v2224, %v2381
            %v2435 = vsub.f32 %v2225, %v2386
            %v2436 = vsub.f32 %v2226, %v2391
            %v2437 = vsub.f32 %v2227, %v2396
            %v2438 = vsub.f32 %v2228, %v2401
            %v2439 = vsub.f32 %v2229, %v2406
            %v2440 = vsub.f32 %v2230, %v2411
            %v2441 = vsub.f32 %v2231, %v2416
            %v2442 = vsub.f32 %v2232, %v2421
            %v2443 = vsub.f32 %v2233, %v2426
            %v2444 = vmul.f32 %v2428, 1.442695
            %v2445 = vpow.pop %v2444
            %v2446 = vmul.f32 %v2429, 1.442695
            %v2447 = vpow.pop %v2446
            %v2448 = vmul.f32 %v2430, 1.442695
            %v2449 = vpow.pop %v2448
            %v2450 = vmul.f32 %v2431, 1.442695
            %v2451 = vpow.pop %v2450
            %v2452 = vmul.f32 %v2432, 1.442695
            %v2453 = vpow.pop %v2452
            %v2454 = vmul.f32 %v2433, 1.442695
            %v2455 = vpow.pop %v2454
            %v2456 = vmul.f32 %v2434, 1.442695
            %v2457 = vpow.pop %v2456
            %v2458 = vmul.f32 %v2435, 1.442695
            %v2459 = vpow.pop %v2458
            %v2460 = vmul.f32 %v2436, 1.442695
            %v2461 = vpow.pop %v2460
            %v2462 = vmul.f32 %v2437, 1.442695
            %v2463 = vpow.pop %v2462
            %v2464 = vmul.f32 %v2438, 1.442695
            %v2465 = vpow.pop %v2464
            %v2466 = vmul.f32 %v2439, 1.442695
            %v2467 = vpow.pop %v2466
            %v2468 = vmul.f32 %v2440, 1.442695
            %v2469 = vpow.pop %v2468
            %v2470 = vmul.f32 %v2441, 1.442695
            %v2471 = vpow.pop %v2470
            %v2472 = vmul.f32 %v2442, 1.442695
            %v2473 = vpow.pop %v2472
            %v2474 = vmul.f32 %v2443, 1.442695
            %v2475 = vpow.pop %v2474
            %s2476 = scalar_lea.vmem [#allocation3], %s2234
            %v2477 = vld [vmem:[%s2476] sm:$0xff]
            %v2478 = vld [vmem:[%s2476 + $0x8] sm:$0xff]
            %v2479 = vld [vmem:[%s2476 + $0x10] sm:$0xff]
            %v2480 = vld [vmem:[%s2476 + $0x18] sm:$0xff]
            %v2481 = vld [vmem:[%s2476 + $0x20] sm:$0xff]
            %v2482 = vld [vmem:[%s2476 + $0x28] sm:$0xff]
            %v2483 = vld [vmem:[%s2476 + $0x30] sm:$0xff]
            %v2484 = vld [vmem:[%s2476 + $0x38] sm:$0xff]
            %v2485 = vld [vmem:[%s2476 + $0x40] sm:$0xff]
            %v2486 = vld [vmem:[%s2476 + $0x48] sm:$0xff]
            %v2487 = vld [vmem:[%s2476 + $0x50] sm:$0xff]
            %v2488 = vld [vmem:[%s2476 + $0x58] sm:$0xff]
            %v2489 = vld [vmem:[%s2476 + $0x60] sm:$0xff]
            %v2490 = vld [vmem:[%s2476 + $0x68] sm:$0xff]
            %v2491 = vld [vmem:[%s2476 + $0x70] sm:$0xff]
            %v2492 = vld [vmem:[%s2476 + $0x78] sm:$0xff]
            %v2493 = vmul.f32 %v2317, %v2477
            %v2494 = vmul.f32 %v2319, %v2478
            %v2495 = vmul.f32 %v2321, %v2479
            %v2496 = vmul.f32 %v2323, %v2480
            %v2497 = vmul.f32 %v2325, %v2481
            %v2498 = vmul.f32 %v2327, %v2482
            %v2499 = vmul.f32 %v2329, %v2483
            %v2500 = vmul.f32 %v2331, %v2484
            %v2501 = vmul.f32 %v2333, %v2485
            %v2502 = vmul.f32 %v2335, %v2486
            %v2503 = vmul.f32 %v2337, %v2487
            %v2504 = vmul.f32 %v2339, %v2488
            %v2505 = vmul.f32 %v2341, %v2489
            %v2506 = vmul.f32 %v2343, %v2490
            %v2507 = vmul.f32 %v2345, %v2491
            %v2508 = vmul.f32 %v2347, %v2492
            %2509 = vadd.xlane.f32.xlu0 %v2445
            %v2510 = vpop.xlane.xlu0 %2509
            %2511 = vadd.xlane.f32.xlu0 %v2447
            %v2512 = vpop.xlane.xlu0 %2511
            %2513 = vadd.xlane.f32.xlu0 %v2449
            %v2514 = vpop.xlane.xlu0 %2513
            %2515 = vadd.xlane.f32.xlu0 %v2451
            %v2516 = vpop.xlane.xlu0 %2515
            %2517 = vadd.xlane.f32.xlu0 %v2453
            %v2518 = vpop.xlane.xlu0 %2517
            %2519 = vadd.xlane.f32.xlu0 %v2455
            %v2520 = vpop.xlane.xlu0 %2519
            %2521 = vadd.xlane.f32.xlu0 %v2457
            %v2522 = vpop.xlane.xlu0 %2521
            %2523 = vadd.xlane.f32.xlu0 %v2459
            %v2524 = vpop.xlane.xlu0 %2523
            %2525 = vadd.xlane.f32.xlu0 %v2461
            %v2526 = vpop.xlane.xlu0 %2525
            %2527 = vadd.xlane.f32.xlu0 %v2463
            %v2528 = vpop.xlane.xlu0 %2527
            %2529 = vadd.xlane.f32.xlu0 %v2465
            %v2530 = vpop.xlane.xlu0 %2529
            %2531 = vadd.xlane.f32.xlu0 %v2467
            %v2532 = vpop.xlane.xlu0 %2531
            %2533 = vadd.xlane.f32.xlu0 %v2469
            %v2534 = vpop.xlane.xlu0 %2533
            %2535 = vadd.xlane.f32.xlu0 %v2471
            %v2536 = vpop.xlane.xlu0 %2535
            %2537 = vadd.xlane.f32.xlu0 %v2473
            %v2538 = vpop.xlane.xlu0 %2537
            %2539 = vadd.xlane.f32.xlu0 %v2475
            %v2540 = vpop.xlane.xlu0 %2539
            %v2541 = vadd.f32 %v2493, %v2510
            %v2542 = vadd.f32 %v2494, %v2512
            %v2543 = vadd.f32 %v2495, %v2514
            %v2544 = vadd.f32 %v2496, %v2516
            %v2545 = vadd.f32 %v2497, %v2518
            %v2546 = vadd.f32 %v2498, %v2520
            %v2547 = vadd.f32 %v2499, %v2522
            %v2548 = vadd.f32 %v2500, %v2524
            %v2549 = vadd.f32 %v2501, %v2526
            %v2550 = vadd.f32 %v2502, %v2528
            %v2551 = vadd.f32 %v2503, %v2530
            %v2552 = vadd.f32 %v2504, %v2532
            %v2553 = vadd.f32 %v2505, %v2534
            %v2554 = vadd.f32 %v2506, %v2536
            %v2555 = vadd.f32 %v2507, %v2538
            %v2556 = vadd.f32 %v2508, %v2540
            %vm2557 = vcmask 7168
            %2558 = vst.msk [vmem:[%s2476] sm:$0xff] %vm2557, %v2541
            %2559 = vst.msk [vmem:[%s2476 + $0x8] sm:$0xff] %vm2557, %v2542
            %2560 = vst.msk [vmem:[%s2476 + $0x10] sm:$0xff] %vm2557, %v2543
            %2561 = vst.msk [vmem:[%s2476 + $0x18] sm:$0xff] %vm2557, %v2544
            %2562 = vst.msk [vmem:[%s2476 + $0x20] sm:$0xff] %vm2557, %v2545
            %2563 = vst.msk [vmem:[%s2476 + $0x28] sm:$0xff] %vm2557, %v2546
            %2564 = vst.msk [vmem:[%s2476 + $0x30] sm:$0xff] %vm2557, %v2547
            %2565 = vst.msk [vmem:[%s2476 + $0x38] sm:$0xff] %vm2557, %v2548
            %2566 = vst.msk [vmem:[%s2476 + $0x40] sm:$0xff] %vm2557, %v2549
            %2567 = vst.msk [vmem:[%s2476 + $0x48] sm:$0xff] %vm2557, %v2550
            %2568 = vst.msk [vmem:[%s2476 + $0x50] sm:$0xff] %vm2557, %v2551
            %2569 = vst.msk [vmem:[%s2476 + $0x58] sm:$0xff] %vm2557, %v2552
            %2570 = vst.msk [vmem:[%s2476 + $0x60] sm:$0xff] %vm2557, %v2553
            %2571 = vst.msk [vmem:[%s2476 + $0x68] sm:$0xff] %vm2557, %v2554
            %2572 = vst.msk [vmem:[%s2476 + $0x70] sm:$0xff] %vm2557, %v2555
            %2573 = vst.msk [vmem:[%s2476 + $0x78] sm:$0xff] %vm2557, %v2556
            %s2574 = scalar_lea.vmem [#allocation4], %s2234
            %v2575 = vld [vmem:[%s2574] sm:$0xff]
            %v2576 = vld [vmem:[%s2574 + $0x8] sm:$0xff]
            %v2577 = vld [vmem:[%s2574 + $0x10] sm:$0xff]
            %v2578 = vld [vmem:[%s2574 + $0x18] sm:$0xff]
            %v2579 = vld [vmem:[%s2574 + $0x20] sm:$0xff]
            %v2580 = vld [vmem:[%s2574 + $0x28] sm:$0xff]
            %v2581 = vld [vmem:[%s2574 + $0x30] sm:$0xff]
            %v2582 = vld [vmem:[%s2574 + $0x38] sm:$0xff]
            %v2583 = vld [vmem:[%s2574 + $0x40] sm:$0xff]
            %v2584 = vld [vmem:[%s2574 + $0x48] sm:$0xff]
            %v2585 = vld [vmem:[%s2574 + $0x50] sm:$0xff]
            %v2586 = vld [vmem:[%s2574 + $0x58] sm:$0xff]
            %v2587 = vld [vmem:[%s2574 + $0x60] sm:$0xff]
            %v2588 = vld [vmem:[%s2574 + $0x68] sm:$0xff]
            %v2589 = vld [vmem:[%s2574 + $0x70] sm:$0xff]
            %v2590 = vld [vmem:[%s2574 + $0x78] sm:$0xff]
            %2592 = vset.pattern.permute.xlu0 0
            %2593 = vperm.xlu0 %2592, %v2317
            %v2594 = vpop.permute.xlu0 %2593
            %2597 = vset.pattern.permute.xlu0 0
            %2598 = vperm.xlu0 %2597, %v2319
            %v2599 = vpop.permute.xlu0 %2598
            %2602 = vset.pattern.permute.xlu0 0
            %2603 = vperm.xlu0 %2602, %v2321
            %v2604 = vpop.permute.xlu0 %2603
            %2607 = vset.pattern.permute.xlu0 0
            %2608 = vperm.xlu0 %2607, %v2323
            %v2609 = vpop.permute.xlu0 %2608
            %2612 = vset.pattern.permute.xlu0 0
            %2613 = vperm.xlu0 %2612, %v2325
            %v2614 = vpop.permute.xlu0 %2613
            %2617 = vset.pattern.permute.xlu0 0
            %2618 = vperm.xlu0 %2617, %v2327
            %v2619 = vpop.permute.xlu0 %2618
            %2622 = vset.pattern.permute.xlu0 0
            %2623 = vperm.xlu0 %2622, %v2329
            %v2624 = vpop.permute.xlu0 %2623
            %2627 = vset.pattern.permute.xlu0 0
            %2628 = vperm.xlu0 %2627, %v2331
            %v2629 = vpop.permute.xlu0 %2628
            %2632 = vset.pattern.permute.xlu0 0
            %2633 = vperm.xlu0 %2632, %v2333
            %v2634 = vpop.permute.xlu0 %2633
            %2637 = vset.pattern.permute.xlu0 0
            %2638 = vperm.xlu0 %2637, %v2335
            %v2639 = vpop.permute.xlu0 %2638
            %2642 = vset.pattern.permute.xlu0 0
            %2643 = vperm.xlu0 %2642, %v2337
            %v2644 = vpop.permute.xlu0 %2643
            %2647 = vset.pattern.permute.xlu0 0
            %2648 = vperm.xlu0 %2647, %v2339
            %v2649 = vpop.permute.xlu0 %2648
            %2652 = vset.pattern.permute.xlu0 0
            %2653 = vperm.xlu0 %2652, %v2341
            %v2654 = vpop.permute.xlu0 %2653
            %2657 = vset.pattern.permute.xlu0 0
            %2658 = vperm.xlu0 %2657, %v2343
            %v2659 = vpop.permute.xlu0 %2658
            %2662 = vset.pattern.permute.xlu0 0
            %2663 = vperm.xlu0 %2662, %v2345
            %v2664 = vpop.permute.xlu0 %2663
            %2667 = vset.pattern.permute.xlu0 0
            %2668 = vperm.xlu0 %2667, %v2347
            %v2669 = vpop.permute.xlu0 %2668
            %v2671 = vmul.f32 %v2594, %v2575
            %v2672 = vmul.f32 %v2599, %v2576
            %v2673 = vmul.f32 %v2604, %v2577
            %v2674 = vmul.f32 %v2609, %v2578
            %v2675 = vmul.f32 %v2614, %v2579
            %v2676 = vmul.f32 %v2619, %v2580
            %v2677 = vmul.f32 %v2624, %v2581
            %v2678 = vmul.f32 %v2629, %v2582
            %v2679 = vmul.f32 %v2634, %v2583
            %v2680 = vmul.f32 %v2639, %v2584
            %v2681 = vmul.f32 %v2644, %v2585
            %v2682 = vmul.f32 %v2649, %v2586
            %v2683 = vmul.f32 %v2654, %v2587
            %v2684 = vmul.f32 %v2659, %v2588
            %v2685 = vmul.f32 %v2664, %v2589
            %v2686 = vmul.f32 %v2669, %v2590
            %v2687 = vpack.c.bf16 %v2447, %v2445
            %v2688 = vpack.c.bf16 %v2451, %v2449
            %v2689 = vpack.c.bf16 %v2455, %v2453
            %v2690 = vpack.c.bf16 %v2459, %v2457
            %v2691 = vpack.c.bf16 %v2463, %v2461
            %v2692 = vpack.c.bf16 %v2467, %v2465
            %v2693 = vpack.c.bf16 %v2471, %v2469
            %v2694 = vpack.c.bf16 %v2475, %v2473
            %v2711 = vunpack.c.l.b16 %v2024
            %v2712 = vunpack.c.l.b16 %v2025
            %v2713 = vunpack.c.l.b16 %v2026
            %v2714 = vunpack.c.l.b16 %v2027
            %v2715 = vunpack.c.l.b16 %v2028
            %v2716 = vunpack.c.l.b16 %v2029
            %v2717 = vunpack.c.l.b16 %v2030
            %v2718 = vunpack.c.l.b16 %v2031
            %v2719 = vunpack.c.l.b16 %v2032
            %v2720 = vunpack.c.l.b16 %v2033
            %v2721 = vunpack.c.l.b16 %v2034
            %v2722 = vunpack.c.l.b16 %v2035
            %v2723 = vunpack.c.l.b16 %v2036
            %v2724 = vunpack.c.l.b16 %v2037
            %v2725 = vunpack.c.l.b16 %v2038
            %v2726 = vunpack.c.l.b16 %v2039
            %v2727 = vpack.c.b16 %v2712, %v2711
            %v2728 = vpack.c.b16 %v2714, %v2713
            %v2729 = vpack.c.b16 %v2716, %v2715
            %v2730 = vpack.c.b16 %v2718, %v2717
            %v2731 = vpack.c.b16 %v2720, %v2719
            %v2732 = vpack.c.b16 %v2722, %v2721
            %v2733 = vpack.c.b16 %v2724, %v2723
            %v2734 = vpack.c.b16 %v2726, %v2725
            %2743 = vmatpush.bf16.msra.mxu0 %v2734
            %2744 = vmatpush.bf16.msra.mxu0 %v2733
            %2745 = vmatpush.bf16.msra.mxu0 %v2732
            %2746 = vmatpush.bf16.msra.mxu0 %v2731
            %2747 = vmatpush.bf16.msra.mxu0 %v2730
            %2748 = vmatpush.bf16.msra.mxu0 %v2729
            %2749 = vmatpush.bf16.msra.mxu0 %v2728
            %2750 = vmatpush.bf16.msra.mxu0 %v2727
            %2751 = vmatmul.bf16.gmra.mxu0 %v2687
            %v2752 = vpop.f32.mrf.mxu0
            %v2753 = vadd.f32 0.0, %v2752
            %v2754 = vpop.f32.mrf.mxu0
            %v2755 = vadd.f32 0.0, %v2754
            %2756 = vmatmul.bf16.gmra.mxu0 %v2688
            %v2757 = vpop.f32.mrf.mxu0
            %v2758 = vadd.f32 0.0, %v2757
            %v2759 = vpop.f32.mrf.mxu0
            %v2760 = vadd.f32 0.0, %v2759
            %2761 = vmatmul.bf16.gmra.mxu0 %v2689
            %v2762 = vpop.f32.mrf.mxu0
            %v2763 = vadd.f32 0.0, %v2762
            %v2764 = vpop.f32.mrf.mxu0
            %v2765 = vadd.f32 0.0, %v2764
            %2766 = vmatmul.bf16.gmra.mxu0 %v2690
            %v2767 = vpop.f32.mrf.mxu0
            %v2768 = vadd.f32 0.0, %v2767
            %v2769 = vpop.f32.mrf.mxu0
            %v2770 = vadd.f32 0.0, %v2769
            %2771 = vmatmul.bf16.gmra.mxu0 %v2691
            %v2772 = vpop.f32.mrf.mxu0
            %v2773 = vadd.f32 0.0, %v2772
            %v2774 = vpop.f32.mrf.mxu0
            %v2775 = vadd.f32 0.0, %v2774
            %2776 = vmatmul.bf16.gmra.mxu0 %v2692
            %v2777 = vpop.f32.mrf.mxu0
            %v2778 = vadd.f32 0.0, %v2777
            %v2779 = vpop.f32.mrf.mxu0
            %v2780 = vadd.f32 0.0, %v2779
            %2781 = vmatmul.bf16.gmra.mxu0 %v2693
            %v2782 = vpop.f32.mrf.mxu0
            %v2783 = vadd.f32 0.0, %v2782
            %v2784 = vpop.f32.mrf.mxu0
            %v2785 = vadd.f32 0.0, %v2784
            %2786 = vmatmul.bf16.gmra.mxu0 %v2694
            %v2787 = vpop.f32.mrf.mxu0
            %v2788 = vadd.f32 0.0, %v2787
            %v2789 = vpop.f32.mrf.mxu0
            %v2790 = vadd.f32 0.0, %v2789
            %2791 = vdwg.mxu0
            %v2792 = vadd.f32 %v2671, %v2753
            %v2793 = vadd.f32 %v2672, %v2755
            %v2794 = vadd.f32 %v2673, %v2758
            %v2795 = vadd.f32 %v2674, %v2760
            %v2796 = vadd.f32 %v2675, %v2763
            %v2797 = vadd.f32 %v2676, %v2765
            %v2798 = vadd.f32 %v2677, %v2768
            %v2799 = vadd.f32 %v2678, %v2770
            %v2800 = vadd.f32 %v2679, %v2773
            %v2801 = vadd.f32 %v2680, %v2775
            %v2802 = vadd.f32 %v2681, %v2778
            %v2803 = vadd.f32 %v2682, %v2780
            %v2804 = vadd.f32 %v2683, %v2783
            %v2805 = vadd.f32 %v2684, %v2785
            %v2806 = vadd.f32 %v2685, %v2788
            %v2807 = vadd.f32 %v2686, %v2790
            %2808 = vst.msk [vmem:[%s2574] sm:$0xff] %vm2120, %v2792
            %2809 = vst.msk [vmem:[%s2574 + $0x8] sm:$0xff] %vm2120, %v2793
            %2810 = vst.msk [vmem:[%s2574 + $0x10] sm:$0xff] %vm2120, %v2794
            %2811 = vst.msk [vmem:[%s2574 + $0x18] sm:$0xff] %vm2120, %v2795
            %2812 = vst.msk [vmem:[%s2574 + $0x20] sm:$0xff] %vm2120, %v2796
            %2813 = vst.msk [vmem:[%s2574 + $0x28] sm:$0xff] %vm2120, %v2797
            %2814 = vst.msk [vmem:[%s2574 + $0x30] sm:$0xff] %vm2120, %v2798
            %2815 = vst.msk [vmem:[%s2574 + $0x38] sm:$0xff] %vm2120, %v2799
            %2816 = vst.msk [vmem:[%s2574 + $0x40] sm:$0xff] %vm2120, %v2800
            %2817 = vst.msk [vmem:[%s2574 + $0x48] sm:$0xff] %vm2120, %v2801
            %2818 = vst.msk [vmem:[%s2574 + $0x50] sm:$0xff] %vm2120, %v2802
            %2819 = vst.msk [vmem:[%s2574 + $0x58] sm:$0xff] %vm2120, %v2803
            %2820 = vst.msk [vmem:[%s2574 + $0x60] sm:$0xff] %vm2120, %v2804
            %2821 = vst.msk [vmem:[%s2574 + $0x68] sm:$0xff] %vm2120, %v2805
            %2822 = vst.msk [vmem:[%s2574 + $0x70] sm:$0xff] %vm2120, %v2806
            %2823 = vst.msk [vmem:[%s2574 + $0x78] sm:$0xff] %vm2120, %v2807
            %2824 = vst.msk [vmem:[%s2235] sm:$0xff] %vm2557, %v2284
            %2825 = vst.msk [vmem:[%s2235 + $0x8] sm:$0xff] %vm2557, %v2285
            %2826 = vst.msk [vmem:[%s2235 + $0x10] sm:$0xff] %vm2557, %v2286
            %2827 = vst.msk [vmem:[%s2235 + $0x18] sm:$0xff] %vm2557, %v2287
            %2828 = vst.msk [vmem:[%s2235 + $0x20] sm:$0xff] %vm2557, %v2288
            %2829 = vst.msk [vmem:[%s2235 + $0x28] sm:$0xff] %vm2557, %v2289
            %2830 = vst.msk [vmem:[%s2235 + $0x30] sm:$0xff] %vm2557, %v2290
            %2831 = vst.msk [vmem:[%s2235 + $0x38] sm:$0xff] %vm2557, %v2291
            %2832 = vst.msk [vmem:[%s2235 + $0x40] sm:$0xff] %vm2557, %v2292
            %2833 = vst.msk [vmem:[%s2235 + $0x48] sm:$0xff] %vm2557, %v2293
            %2834 = vst.msk [vmem:[%s2235 + $0x50] sm:$0xff] %vm2557, %v2294
            %2835 = vst.msk [vmem:[%s2235 + $0x58] sm:$0xff] %vm2557, %v2295
            %2836 = vst.msk [vmem:[%s2235 + $0x60] sm:$0xff] %vm2557, %v2296
            %2837 = vst.msk [vmem:[%s2235 + $0x68] sm:$0xff] %vm2557, %v2297
            %2838 = vst.msk [vmem:[%s2235 + $0x70] sm:$0xff] %vm2557, %v2298
            %2839 = vst.msk [vmem:[%s2235 + $0x78] sm:$0xff] %vm2557, %v2299
          $region179: #{causal_self_attention.4} parent=173 // loop_footer
            %s1984 = sadd.s32 1, %s1980
          $region180: #{causal_self_attention.4} parent=173 // loop_footer_branch
            %1979 = sbr.rel target = $region176
          $region181: #{causal_self_attention.4} parent=173 // loop_exit
            _
          %v2840 = vld [vmem:[#allocation3] sm:$0xff]
          %v2841 = vld [vmem:[#allocation3 + $0x8] sm:$0xff]
          %v2842 = vld [vmem:[#allocation3 + $0x10] sm:$0xff]
          %v2843 = vld [vmem:[#allocation3 + $0x18] sm:$0xff]
          %v2844 = vld [vmem:[#allocation3 + $0x20] sm:$0xff]
          %v2845 = vld [vmem:[#allocation3 + $0x28] sm:$0xff]
          %v2846 = vld [vmem:[#allocation3 + $0x30] sm:$0xff]
          %v2847 = vld [vmem:[#allocation3 + $0x38] sm:$0xff]
          %v2848 = vld [vmem:[#allocation3 + $0x40] sm:$0xff]
          %v2849 = vld [vmem:[#allocation3 + $0x48] sm:$0xff]
          %v2850 = vld [vmem:[#allocation3 + $0x50] sm:$0xff]
          %v2851 = vld [vmem:[#allocation3 + $0x58] sm:$0xff]
          %v2852 = vld [vmem:[#allocation3 + $0x60] sm:$0xff]
          %v2853 = vld [vmem:[#allocation3 + $0x68] sm:$0xff]
          %v2854 = vld [vmem:[#allocation3 + $0x70] sm:$0xff]
          %v2855 = vld [vmem:[#allocation3 + $0x78] sm:$0xff]
          %v2856 = vrcp.pop %v2840
          %v2857 = vrcp.pop %v2841
          %v2858 = vrcp.pop %v2842
          %v2859 = vrcp.pop %v2843
          %v2860 = vrcp.pop %v2844
          %v2861 = vrcp.pop %v2845
          %v2862 = vrcp.pop %v2846
          %v2863 = vrcp.pop %v2847
          %v2864 = vrcp.pop %v2848
          %v2865 = vrcp.pop %v2849
          %v2866 = vrcp.pop %v2850
          %v2867 = vrcp.pop %v2851
          %v2868 = vrcp.pop %v2852
          %v2869 = vrcp.pop %v2853
          %v2870 = vrcp.pop %v2854
          %v2871 = vrcp.pop %v2855
          %v2872 = vld [vmem:[#allocation4] sm:$0xff]
          %v2873 = vld [vmem:[#allocation4 + $0x8] sm:$0xff]
          %v2874 = vld [vmem:[#allocation4 + $0x10] sm:$0xff]
          %v2875 = vld [vmem:[#allocation4 + $0x18] sm:$0xff]
          %v2876 = vld [vmem:[#allocation4 + $0x20] sm:$0xff]
          %v2877 = vld [vmem:[#allocation4 + $0x28] sm:$0xff]
          %v2878 = vld [vmem:[#allocation4 + $0x30] sm:$0xff]
          %v2879 = vld [vmem:[#allocation4 + $0x38] sm:$0xff]
          %v2880 = vld [vmem:[#allocation4 + $0x40] sm:$0xff]
          %v2881 = vld [vmem:[#allocation4 + $0x48] sm:$0xff]
          %v2882 = vld [vmem:[#allocation4 + $0x50] sm:$0xff]
          %v2883 = vld [vmem:[#allocation4 + $0x58] sm:$0xff]
          %v2884 = vld [vmem:[#allocation4 + $0x60] sm:$0xff]
          %v2885 = vld [vmem:[#allocation4 + $0x68] sm:$0xff]
          %v2886 = vld [vmem:[#allocation4 + $0x70] sm:$0xff]
          %v2887 = vld [vmem:[#allocation4 + $0x78] sm:$0xff]
          %2889 = vset.pattern.permute.xlu0 0
          %2890 = vperm.xlu0 %2889, %v2856
          %v2891 = vpop.permute.xlu0 %2890
          %2894 = vset.pattern.permute.xlu0 0
          %2895 = vperm.xlu0 %2894, %v2857
          %v2896 = vpop.permute.xlu0 %2895
          %2899 = vset.pattern.permute.xlu0 0
          %2900 = vperm.xlu0 %2899, %v2858
          %v2901 = vpop.permute.xlu0 %2900
          %2904 = vset.pattern.permute.xlu0 0
          %2905 = vperm.xlu0 %2904, %v2859
          %v2906 = vpop.permute.xlu0 %2905
          %2909 = vset.pattern.permute.xlu0 0
          %2910 = vperm.xlu0 %2909, %v2860
          %v2911 = vpop.permute.xlu0 %2910
          %2914 = vset.pattern.permute.xlu0 0
          %2915 = vperm.xlu0 %2914, %v2861
          %v2916 = vpop.permute.xlu0 %2915
          %2919 = vset.pattern.permute.xlu0 0
          %2920 = vperm.xlu0 %2919, %v2862
          %v2921 = vpop.permute.xlu0 %2920
          %2924 = vset.pattern.permute.xlu0 0
          %2925 = vperm.xlu0 %2924, %v2863
          %v2926 = vpop.permute.xlu0 %2925
          %2929 = vset.pattern.permute.xlu0 0
          %2930 = vperm.xlu0 %2929, %v2864
          %v2931 = vpop.permute.xlu0 %2930
          %2934 = vset.pattern.permute.xlu0 0
          %2935 = vperm.xlu0 %2934, %v2865
          %v2936 = vpop.permute.xlu0 %2935
          %2939 = vset.pattern.permute.xlu0 0
          %2940 = vperm.xlu0 %2939, %v2866
          %v2941 = vpop.permute.xlu0 %2940
          %2944 = vset.pattern.permute.xlu0 0
          %2945 = vperm.xlu0 %2944, %v2867
          %v2946 = vpop.permute.xlu0 %2945
          %2949 = vset.pattern.permute.xlu0 0
          %2950 = vperm.xlu0 %2949, %v2868
          %v2951 = vpop.permute.xlu0 %2950
          %2954 = vset.pattern.permute.xlu0 0
          %2955 = vperm.xlu0 %2954, %v2869
          %v2956 = vpop.permute.xlu0 %2955
          %2959 = vset.pattern.permute.xlu0 0
          %2960 = vperm.xlu0 %2959, %v2870
          %v2961 = vpop.permute.xlu0 %2960
          %2964 = vset.pattern.permute.xlu0 0
          %2965 = vperm.xlu0 %2964, %v2871
          %v2966 = vpop.permute.xlu0 %2965
          %v2968 = vmul.f32 %v2872, %v2891
          %v2969 = vmul.f32 %v2873, %v2896
          %v2970 = vmul.f32 %v2874, %v2901
          %v2971 = vmul.f32 %v2875, %v2906
          %v2972 = vmul.f32 %v2876, %v2911
          %v2973 = vmul.f32 %v2877, %v2916
          %v2974 = vmul.f32 %v2878, %v2921
          %v2975 = vmul.f32 %v2879, %v2926
          %v2976 = vmul.f32 %v2880, %v2931
          %v2977 = vmul.f32 %v2881, %v2936
          %v2978 = vmul.f32 %v2882, %v2941
          %v2979 = vmul.f32 %v2883, %v2946
          %v2980 = vmul.f32 %v2884, %v2951
          %v2981 = vmul.f32 %v2885, %v2956
          %v2982 = vmul.f32 %v2886, %v2961
          %v2983 = vmul.f32 %v2887, %v2966
          %v2984 = vpack.c.bf16 %v2968, %v2968
          %v2985 = vpack.c.bf16 %v2969, %v2969
          %v2986 = vpack.c.bf16 %v2970, %v2970
          %v2987 = vpack.c.bf16 %v2971, %v2971
          %v2988 = vpack.c.bf16 %v2972, %v2972
          %v2989 = vpack.c.bf16 %v2973, %v2973
          %v2990 = vpack.c.bf16 %v2974, %v2974
          %v2991 = vpack.c.bf16 %v2975, %v2975
          %v2992 = vpack.c.bf16 %v2976, %v2976
          %v2993 = vpack.c.bf16 %v2977, %v2977
          %v2994 = vpack.c.bf16 %v2978, %v2978
          %v2995 = vpack.c.bf16 %v2979, %v2979
          %v2996 = vpack.c.bf16 %v2980, %v2980
          %v2997 = vpack.c.bf16 %v2981, %v2981
          %v2998 = vpack.c.bf16 %v2982, %v2982
          %v2999 = vpack.c.bf16 %v2983, %v2983
          %s3000 = scalar_lea.vmem [#allocation3], 128
          %v3001 = vld [vmem:[%s3000] sm:$0xff]
          %v3002 = vld [vmem:[%s3000 + $0x8] sm:$0xff]
          %v3003 = vld [vmem:[%s3000 + $0x10] sm:$0xff]
          %v3004 = vld [vmem:[%s3000 + $0x18] sm:$0xff]
          %v3005 = vld [vmem:[%s3000 + $0x20] sm:$0xff]
          %v3006 = vld [vmem:[%s3000 + $0x28] sm:$0xff]
          %v3007 = vld [vmem:[%s3000 + $0x30] sm:$0xff]
          %v3008 = vld [vmem:[%s3000 + $0x38] sm:$0xff]
          %v3009 = vld [vmem:[%s3000 + $0x40] sm:$0xff]
          %v3010 = vld [vmem:[%s3000 + $0x48] sm:$0xff]
          %v3011 = vld [vmem:[%s3000 + $0x50] sm:$0xff]
          %v3012 = vld [vmem:[%s3000 + $0x58] sm:$0xff]
          %v3013 = vld [vmem:[%s3000 + $0x60] sm:$0xff]
          %v3014 = vld [vmem:[%s3000 + $0x68] sm:$0xff]
          %v3015 = vld [vmem:[%s3000 + $0x70] sm:$0xff]
          %v3016 = vld [vmem:[%s3000 + $0x78] sm:$0xff]
          %v3017 = vrcp.pop %v3001
          %v3018 = vrcp.pop %v3002
          %v3019 = vrcp.pop %v3003
          %v3020 = vrcp.pop %v3004
          %v3021 = vrcp.pop %v3005
          %v3022 = vrcp.pop %v3006
          %v3023 = vrcp.pop %v3007
          %v3024 = vrcp.pop %v3008
          %v3025 = vrcp.pop %v3009
          %v3026 = vrcp.pop %v3010
          %v3027 = vrcp.pop %v3011
          %v3028 = vrcp.pop %v3012
          %v3029 = vrcp.pop %v3013
          %v3030 = vrcp.pop %v3014
          %v3031 = vrcp.pop %v3015
          %v3032 = vrcp.pop %v3016
          %s3033 = scalar_lea.vmem [#allocation4], 128
          %v3034 = vld [vmem:[%s3033] sm:$0xff]
          %v3035 = vld [vmem:[%s3033 + $0x8] sm:$0xff]
          %v3036 = vld [vmem:[%s3033 + $0x10] sm:$0xff]
          %v3037 = vld [vmem:[%s3033 + $0x18] sm:$0xff]
          %v3038 = vld [vmem:[%s3033 + $0x20] sm:$0xff]
          %v3039 = vld [vmem:[%s3033 + $0x28] sm:$0xff]
          %v3040 = vld [vmem:[%s3033 + $0x30] sm:$0xff]
          %v3041 = vld [vmem:[%s3033 + $0x38] sm:$0xff]
          %v3042 = vld [vmem:[%s3033 + $0x40] sm:$0xff]
          %v3043 = vld [vmem:[%s3033 + $0x48] sm:$0xff]
          %v3044 = vld [vmem:[%s3033 + $0x50] sm:$0xff]
          %v3045 = vld [vmem:[%s3033 + $0x58] sm:$0xff]
          %v3046 = vld [vmem:[%s3033 + $0x60] sm:$0xff]
          %v3047 = vld [vmem:[%s3033 + $0x68] sm:$0xff]
          %v3048 = vld [vmem:[%s3033 + $0x70] sm:$0xff]
          %v3049 = vld [vmem:[%s3033 + $0x78] sm:$0xff]
          %3051 = vset.pattern.permute.xlu0 0
          %3052 = vperm.xlu0 %3051, %v3017
          %v3053 = vpop.permute.xlu0 %3052
          %3056 = vset.pattern.permute.xlu0 0
          %3057 = vperm.xlu0 %3056, %v3018
          %v3058 = vpop.permute.xlu0 %3057
          %3061 = vset.pattern.permute.xlu0 0
          %3062 = vperm.xlu0 %3061, %v3019
          %v3063 = vpop.permute.xlu0 %3062
          %3066 = vset.pattern.permute.xlu0 0
          %3067 = vperm.xlu0 %3066, %v3020
          %v3068 = vpop.permute.xlu0 %3067
          %3071 = vset.pattern.permute.xlu0 0
          %3072 = vperm.xlu0 %3071, %v3021
          %v3073 = vpop.permute.xlu0 %3072
          %3076 = vset.pattern.permute.xlu0 0
          %3077 = vperm.xlu0 %3076, %v3022
          %v3078 = vpop.permute.xlu0 %3077
          %3081 = vset.pattern.permute.xlu0 0
          %3082 = vperm.xlu0 %3081, %v3023
          %v3083 = vpop.permute.xlu0 %3082
          %3086 = vset.pattern.permute.xlu0 0
          %3087 = vperm.xlu0 %3086, %v3024
          %v3088 = vpop.permute.xlu0 %3087
          %3091 = vset.pattern.permute.xlu0 0
          %3092 = vperm.xlu0 %3091, %v3025
          %v3093 = vpop.permute.xlu0 %3092
          %3096 = vset.pattern.permute.xlu0 0
          %3097 = vperm.xlu0 %3096, %v3026
          %v3098 = vpop.permute.xlu0 %3097
          %3101 = vset.pattern.permute.xlu0 0
          %3102 = vperm.xlu0 %3101, %v3027
          %v3103 = vpop.permute.xlu0 %3102
          %3106 = vset.pattern.permute.xlu0 0
          %3107 = vperm.xlu0 %3106, %v3028
          %v3108 = vpop.permute.xlu0 %3107
          %3111 = vset.pattern.permute.xlu0 0
          %3112 = vperm.xlu0 %3111, %v3029
          %v3113 = vpop.permute.xlu0 %3112
          %3116 = vset.pattern.permute.xlu0 0
          %3117 = vperm.xlu0 %3116, %v3030
          %v3118 = vpop.permute.xlu0 %3117
          %3121 = vset.pattern.permute.xlu0 0
          %3122 = vperm.xlu0 %3121, %v3031
          %v3123 = vpop.permute.xlu0 %3122
          %3126 = vset.pattern.permute.xlu0 0
          %3127 = vperm.xlu0 %3126, %v3032
          %v3128 = vpop.permute.xlu0 %3127
          %v3130 = vmul.f32 %v3034, %v3053
          %v3131 = vmul.f32 %v3035, %v3058
          %v3132 = vmul.f32 %v3036, %v3063
          %v3133 = vmul.f32 %v3037, %v3068
          %v3134 = vmul.f32 %v3038, %v3073
          %v3135 = vmul.f32 %v3039, %v3078
          %v3136 = vmul.f32 %v3040, %v3083
          %v3137 = vmul.f32 %v3041, %v3088
          %v3138 = vmul.f32 %v3042, %v3093
          %v3139 = vmul.f32 %v3043, %v3098
          %v3140 = vmul.f32 %v3044, %v3103
          %v3141 = vmul.f32 %v3045, %v3108
          %v3142 = vmul.f32 %v3046, %v3113
          %v3143 = vmul.f32 %v3047, %v3118
          %v3144 = vmul.f32 %v3048, %v3123
          %v3145 = vmul.f32 %v3049, %v3128
          %v3146 = vpack.c.bf16 %v3130, %v3130
          %v3147 = vpack.c.bf16 %v3131, %v3131
          %v3148 = vpack.c.bf16 %v3132, %v3132
          %v3149 = vpack.c.bf16 %v3133, %v3133
          %v3150 = vpack.c.bf16 %v3134, %v3134
          %v3151 = vpack.c.bf16 %v3135, %v3135
          %v3152 = vpack.c.bf16 %v3136, %v3136
          %v3153 = vpack.c.bf16 %v3137, %v3137
          %v3154 = vpack.c.bf16 %v3138, %v3138
          %v3155 = vpack.c.bf16 %v3139, %v3139
          %v3156 = vpack.c.bf16 %v3140, %v3140
          %v3157 = vpack.c.bf16 %v3141, %v3141
          %v3158 = vpack.c.bf16 %v3142, %v3142
          %v3159 = vpack.c.bf16 %v3143, %v3143
          %v3160 = vpack.c.bf16 %v3144, %v3144
          %v3161 = vpack.c.bf16 %v3145, %v3145
          %v3178 = vunpack.c.l.b16 %v2984
          %v3179 = vunpack.c.l.b16 %v2985
          %v3180 = vunpack.c.l.b16 %v2986
          %v3181 = vunpack.c.l.b16 %v2987
          %v3182 = vunpack.c.l.b16 %v2988
          %v3183 = vunpack.c.l.b16 %v2989
          %v3184 = vunpack.c.l.b16 %v2990
          %v3185 = vunpack.c.l.b16 %v2991
          %v3186 = vunpack.c.l.b16 %v2992
          %v3187 = vunpack.c.l.b16 %v2993
          %v3188 = vunpack.c.l.b16 %v2994
          %v3189 = vunpack.c.l.b16 %v2995
          %v3190 = vunpack.c.l.b16 %v2996
          %v3191 = vunpack.c.l.b16 %v2997
          %v3192 = vunpack.c.l.b16 %v2998
          %v3193 = vunpack.c.l.b16 %v2999
          %v3194 = vpack.c.b16 %v3179, %v3178
          %v3195 = vpack.c.b16 %v3181, %v3180
          %v3196 = vpack.c.b16 %v3183, %v3182
          %v3197 = vpack.c.b16 %v3185, %v3184
          %v3198 = vpack.c.b16 %v3187, %v3186
          %v3199 = vpack.c.b16 %v3189, %v3188
          %v3200 = vpack.c.b16 %v3191, %v3190
          %v3201 = vpack.c.b16 %v3193, %v3192
          %v3218 = vunpack.c.l.b16 %v3146
          %v3219 = vunpack.c.l.b16 %v3147
          %v3220 = vunpack.c.l.b16 %v3148
          %v3221 = vunpack.c.l.b16 %v3149
          %v3222 = vunpack.c.l.b16 %v3150
          %v3223 = vunpack.c.l.b16 %v3151
          %v3224 = vunpack.c.l.b16 %v3152
          %v3225 = vunpack.c.l.b16 %v3153
          %v3226 = vunpack.c.l.b16 %v3154
          %v3227 = vunpack.c.l.b16 %v3155
          %v3228 = vunpack.c.l.b16 %v3156
          %v3229 = vunpack.c.l.b16 %v3157
          %v3230 = vunpack.c.l.b16 %v3158
          %v3231 = vunpack.c.l.b16 %v3159
          %v3232 = vunpack.c.l.b16 %v3160
          %v3233 = vunpack.c.l.b16 %v3161
          %v3234 = vpack.c.b16 %v3219, %v3218
          %v3235 = vpack.c.b16 %v3221, %v3220
          %v3236 = vpack.c.b16 %v3223, %v3222
          %v3237 = vpack.c.b16 %v3225, %v3224
          %v3238 = vpack.c.b16 %v3227, %v3226
          %v3239 = vpack.c.b16 %v3229, %v3228
          %v3240 = vpack.c.b16 %v3231, %v3230
          %v3241 = vpack.c.b16 %v3233, %v3232
          %3242 = vrot.lane.b32.xlu0 %v3234, 64
          %v3243 = vpop.permute.xlu0 %3242
          %3244 = vrot.lane.b32.xlu0 %v3235, 64
          %v3245 = vpop.permute.xlu0 %3244
          %3246 = vrot.lane.b32.xlu0 %v3236, 64
          %v3247 = vpop.permute.xlu0 %3246
          %3248 = vrot.lane.b32.xlu0 %v3237, 64
          %v3249 = vpop.permute.xlu0 %3248
          %3250 = vrot.lane.b32.xlu0 %v3238, 64
          %v3251 = vpop.permute.xlu0 %3250
          %3252 = vrot.lane.b32.xlu0 %v3239, 64
          %v3253 = vpop.permute.xlu0 %3252
          %3254 = vrot.lane.b32.xlu0 %v3240, 64
          %v3255 = vpop.permute.xlu0 %3254
          %3256 = vrot.lane.b32.xlu0 %v3241, 64
          %v3257 = vpop.permute.xlu0 %3256
          %vm3258 = vcmask 523264
          %v3261 = vsel %vm3258, %v3194, %v3243
          %v3264 = vsel %vm3258, %v3195, %v3245
          %v3267 = vsel %vm3258, %v3196, %v3247
          %v3270 = vsel %vm3258, %v3197, %v3249
          %v3273 = vsel %vm3258, %v3198, %v3251
          %v3276 = vsel %vm3258, %v3199, %v3253
          %v3279 = vsel %vm3258, %v3200, %v3255
          %v3282 = vsel %vm3258, %v3201, %v3257
          %v3291 = vunpack.c.l.b16 %v3261
          %v3292 = vunpack.c.h.b16 %v3261
          %v3293 = vunpack.c.l.b16 %v3264
          %v3294 = vunpack.c.h.b16 %v3264
          %v3295 = vunpack.c.l.b16 %v3267
          %v3296 = vunpack.c.h.b16 %v3267
          %v3297 = vunpack.c.l.b16 %v3270
          %v3298 = vunpack.c.h.b16 %v3270
          %v3299 = vunpack.c.l.b16 %v3273
          %v3300 = vunpack.c.h.b16 %v3273
          %v3301 = vunpack.c.l.b16 %v3276
          %v3302 = vunpack.c.h.b16 %v3276
          %v3303 = vunpack.c.l.b16 %v3279
          %v3304 = vunpack.c.h.b16 %v3279
          %v3305 = vunpack.c.l.b16 %v3282
          %v3306 = vunpack.c.h.b16 %v3282
          %v3307 = vpack.c.b16 %v3291, %v3291
          %v3308 = vpack.c.b16 %v3292, %v3292
          %v3309 = vpack.c.b16 %v3293, %v3293
          %v3310 = vpack.c.b16 %v3294, %v3294
          %v3311 = vpack.c.b16 %v3295, %v3295
          %v3312 = vpack.c.b16 %v3296, %v3296
          %v3313 = vpack.c.b16 %v3297, %v3297
          %v3314 = vpack.c.b16 %v3298, %v3298
          %v3315 = vpack.c.b16 %v3299, %v3299
          %v3316 = vpack.c.b16 %v3300, %v3300
          %v3317 = vpack.c.b16 %v3301, %v3301
          %v3318 = vpack.c.b16 %v3302, %v3302
          %v3319 = vpack.c.b16 %v3303, %v3303
          %v3320 = vpack.c.b16 %v3304, %v3304
          %v3321 = vpack.c.b16 %v3305, %v3305
          %v3322 = vpack.c.b16 %v3306, %v3306
          %3339 = vst [vmem:[%s595] sm:$0xf] %v3307
          %3340 = vst [vmem:[%s595 + $0x4] sm:$0xf] %v3308
          %3341 = vst [vmem:[%s595 + $0x8] sm:$0xf] %v3309
          %3342 = vst [vmem:[%s595 + $0xc] sm:$0xf] %v3310
          %3343 = vst [vmem:[%s595 + $0x10] sm:$0xf] %v3311
          %3344 = vst [vmem:[%s595 + $0x14] sm:$0xf] %v3312
          %3345 = vst [vmem:[%s595 + $0x18] sm:$0xf] %v3313
          %3346 = vst [vmem:[%s595 + $0x1c] sm:$0xf] %v3314
          %3347 = vst [vmem:[%s595 + $0x20] sm:$0xf] %v3315
          %3348 = vst [vmem:[%s595 + $0x24] sm:$0xf] %v3316
          %3349 = vst [vmem:[%s595 + $0x28] sm:$0xf] %v3317
          %3350 = vst [vmem:[%s595 + $0x2c] sm:$0xf] %v3318
          %3351 = vst [vmem:[%s595 + $0x30] sm:$0xf] %v3319
          %3352 = vst [vmem:[%s595 + $0x34] sm:$0xf] %v3320
          %3353 = vst [vmem:[%s595 + $0x38] sm:$0xf] %v3321
          %3354 = vst [vmem:[%s595 + $0x3c] sm:$0xf] %v3322
        $region174: #{causal_self_attention.4} parent=142 // pred_fallthru
          _
        %s3355 = sld [smem:[#allocation9 + %s34]]
        %s3356 = smul.u32 16, %s3355
        %p3357 = scmp.lt.s32.totalorder %s33, 1
        %s3358 = scalar_select %p3357, %s33, 1
        %p3359 = scmp.lt.s32.totalorder %s3356, 31
        %s3360 = scalar_select %p3359, %s3356, 31
        %s3361 = smul.addr %s3358, 32
        %s3362 = sadd.s32 %s3360, %s3361
        %s3363 = smul.addr %s3362, 4
        %s3364 = scalar_lea.vmem %s5, %s3363
        // Predicated region
        $region182: #{causal_self_attention.4} parent=142 // pred_check
          %p3365 = pneg %p153
        $region183: #{causal_self_attention.4} parent=142 // pred_check_branch
          %3367 = sbr.rel (%p3365) target = $region185
        $region184: #{causal_self_attention.4} parent=142 // pred_region
          %s3368 = sld [smem:[#allocation9 + %s34]]
          %s3369 = smul.u32 16, %s3368
        $region185: #{causal_self_attention.4} parent=142 // pred_fallthru
          _
      $region143: #{causal_self_attention.4} parent=5 // pred_fallthru
        _
      %p3370 = scmp.le.s32.totalorder 2, %s24
      // Predicated region
      $region186: #{causal_self_attention.4} parent=5 // pred_check
        %p3371 = pneg %p3370
      $region187: #{causal_self_attention.4} parent=5 // pred_check_branch
        %3373 = sbr.rel (%p3371) target = $region189
      $region188: #{causal_self_attention.4} parent=5 // pred_region
        %s3374 = ssub.s32 %s24, 2
        // Predicated region
        $region190: #{causal_self_attention.4} parent=188 // pred_check
          %p3375 = pneg %p159
        $region191: #{causal_self_attention.4} parent=188 // pred_check_branch
          %3377 = sbr.rel (%p3375) target = $region193
        $region192: #{causal_self_attention.4} parent=188 // pred_region
          %s3378 = sld [smem:[#allocation9 + %s36]]
          %s3379 = smul.u32 16, %s3378
          %p3380 = scmp.lt.s32.totalorder %s35, 1
          %s3381 = scalar_select %p3380, %s35, 1
          %p3382 = scmp.lt.s32.totalorder %s3379, 31
          %s3383 = scalar_select %p3382, %s3379, 31
          %s3384 = smul.addr %s3381, 32
          %s3385 = sadd.s32 %s3383, %s3384
          %s3386 = smul.addr %s3385, 4
          %s3387 = scalar_lea.vmem %s5, %s3386
        $region193: #{causal_self_attention.4} parent=188 // pred_fallthru
          _
      $region189: #{causal_self_attention.4} parent=5 // pred_fallthru
        _
    $region6: #{causal_self_attention.4} parent=1 // loop_footer
      %s28 = sadd.s32 1, %s24
    $region7: #{causal_self_attention.4} parent=1 // loop_footer_branch
      %23 = sbr.rel target = $region3
    $region8: #{causal_self_attention.4} parent=1 // loop_exit
      _

</llo_original>
